<compile_context>
chip_gen: v7x
topology: tpu7x:2x2x1
jax: 0.10.0
libtpu: 0.0.40
codegen_flags: <defaults>
</compile_context>

<pallas_src>
import functools
import math

import jax
import jax.numpy as jnp
import numpy as np
from jax import lax
from jax.experimental import pallas as pl
from jax.experimental.pallas import tpu as pltpu

N_HEAD = 2
N_EMBD = 32
CHANNELS = N_HEAD * N_EMBD          # 64
D_CONTEXT = 64                      # small stand-in for 768
GN_GROUPS = 32
GN_EPS = 1e-6
LN_EPS = 1e-5
_SQRT_2_OVER_PI = math.sqrt(2.0 / math.pi)


# ----------------------------- in-kernel helpers -----------------------------

def _gelu_tanh(x):
    # tanh-form GELU: transcendental goes to the EUP slot; |err| vs erf GELU < 1e-3.
    return 0.5 * x * (1.0 + jnp.tanh(_SQRT_2_OVER_PI * (x + 0.044715 * x * x * x)))


def _layernorm(x, g, b):
    mu = jnp.mean(x, axis=-1, keepdims=True)
    var = jnp.mean((x - mu) ** 2, axis=-1, keepdims=True)
    return (x - mu) * lax.rsqrt(var + LN_EPS) * g + b


def _mh_attention(q, k, v, wo_ref, n_head, scale):
    """Multi-head attention with head-stacked softmax and out-proj folding.

    q: (Sq, C) f32, k/v: (Sk, C) f32, wo_ref: (C, C) bf16 Ref.  Returns (Sq, C) f32.
    """
    bf16 = jnp.bfloat16
    sq = q.shape[0]
    dh = q.shape[1] // n_head
    # Per-head scores, then one sublane-stacked softmax over all heads at once.
    scores = [
        lax.dot_general(q[:, h * dh:(h + 1) * dh].astype(bf16),
                        k[:, h * dh:(h + 1) * dh].astype(bf16),
                        (((1,), (1,)), ((), ())),
                        preferred_element_type=jnp.float32)
        for h in range(n_head)
    ]
    s = jnp.concatenate(scores, axis=0) * scale                  # (n_head*Sq, Sk)
    s = s - jnp.max(s, axis=-1, keepdims=True)
    p = jnp.exp(s)
    p = p * pl.reciprocal(jnp.sum(p, axis=-1, keepdims=True), approx=True)
    out = None
    for h in range(n_head):
        ph = p[h * sq:(h + 1) * sq].astype(bf16)
        oh = jnp.dot(ph, v[:, h * dh:(h + 1) * dh].astype(bf16),
                     preferred_element_type=jnp.float32)
        # fold the head-concat into the output projection: sum_h head_h @ Wo[h]
        term = jnp.dot(oh.astype(bf16), wo_ref[h * dh:(h + 1) * dh, :],
                       preferred_element_type=jnp.float32)
        out = term if out is None else out + term
    return out


# --------------------------------- fused kernel --------------------------------

def _fused_block_kernel(
        x_ref, ctx_ref, gnA_ref,
        gng_ref, gnb_ref, cw_ref, cb_ref,
        ln1g_ref, ln1b_ref, wqkv_ref, wo1_ref, bo1_ref,
        ln2g_ref, ln2b_ref, wq2_ref, wkv2_ref, wo2_ref, bo2_ref,
        ln3g_ref, ln3b_ref, wa_ref, ba_ref, wg_ref, bg_ref, w2_ref, b2_ref,
        cow_ref, cob_ref,
        o_ref,
        *, n_head, width):
    f32, bf16 = jnp.float32, jnp.bfloat16
    x_in = x_ref[...]                                   # (S, C) residue_long (token major)
    S, C = x_in.shape
    dh = C // n_head
    scale = 1.0 / math.sqrt(dh)

    # ---- GroupNorm(32, C): two-pass (x - mean)^2, group means via (1,C)@(C,C), f32 ----
    A = gnA_ref[...]
    mean = jnp.dot(jnp.sum(x_in, axis=0, keepdims=True), A,
                   preferred_element_type=f32)
    d = x_in - mean
    var = jnp.dot(jnp.sum(d * d, axis=0, keepdims=True), A,
                  preferred_element_type=f32)
    gn = d * lax.rsqrt(var + GN_EPS) * gng_ref[...] + gnb_ref[...]

    # ---- conv_input 3x3 pad=1: roll+mask shifts, 3 fused K=3C matmuls ----
    tok = lax.broadcasted_iota(jnp.int32, (S, 1), 0)
    col = tok % width
    # column-shifted, column-masked copies (dx = -1, 0, +1), concat along lanes
    c_left = jnp.where(col > 0, pltpu.roll(gn, 1, axis=0), 0.0)          # gn[t-1]
    c_right = jnp.where(col < width - 1, pltpu.roll(gn, S - 1, axis=0), 0.0)  # gn[t+1]
    gcat = jnp.concatenate([c_left, gn, c_right], axis=1)                # (S, 3C)
    acc = None
    for dy in (-1, 0, 1):
        if dy == 0:
            src = gcat
        else:
            rmask = (tok >= width) if dy < 0 else (tok < S - width)
            src = jnp.where(rmask, pltpu.roll(gcat, (-dy * width) % S, axis=0), 0.0)
        term = jnp.dot(src.astype(bf16), cw_ref[dy + 1],
                       preferred_element_type=f32)
        acc = term if acc is None else acc + term
    xt = acc + cb_ref[...]

    # ---- layernorm_1 + self-attention (+ out bias) + residual ----
    xn = _layernorm(xt, ln1g_ref[...], ln1b_ref[...])
    qkv = jnp.dot(xn.astype(bf16), wqkv_ref[...], preferred_element_type=f32)  # (S, 3C)
    attn = _mh_attention(qkv[:, :C], qkv[:, C:2 * C], qkv[:, 2 * C:],
                         wo1_ref, n_head, scale)
    xt = attn + bo1_ref[...] + xt

    # ---- layernorm_2 + cross-attention(context) (+ out bias) + residual ----
    xn = _layernorm(xt, ln2g_ref[...], ln2b_ref[...])
    q2 = jnp.dot(xn.astype(bf16), wq2_ref[...], preferred_element_type=f32)     # (S, C)
    ctx = ctx_ref[0]                                                            # (T, Dctx)
    kv = jnp.dot(ctx.astype(bf16), wkv2_ref[...], preferred_element_type=f32)   # (T, 2C)
    attn = _mh_attention(q2, kv[:, :C], kv[:, C:], wo2_ref, n_head, scale)
    xt = attn + bo2_ref[...] + xt

    # ---- layernorm_3 + GeGLU FFN (split W_a / W_gate) + residual ----
    xn = _layernorm(xt, ln3g_ref[...], ln3b_ref[...])
    xnb = xn.astype(bf16)
    gate = jnp.dot(xnb, wg_ref[...], preferred_element_type=f32) + bg_ref[...]
    a = jnp.dot(xnb, wa_ref[...], preferred_element_type=f32) + ba_ref[...]
    h = a * _gelu_tanh(gate)
    xt = (jnp.dot(h.astype(bf16), w2_ref[...], preferred_element_type=f32)
          + b2_ref[...] + xt)

    # ---- conv_output 1x1 + long residual ----
    o_ref[...] = (jnp.dot(xt.astype(bf16), cow_ref[...], preferred_element_type=f32)
                  + cob_ref[...] + x_in)


# ------------------------------ wrapper / glue ---------------------------------

@jax.jit
def unet_attention_block(x, context, p):
    N, C, H, W = x.shape
    assert C == CHANNELS and C % GN_GROUPS == 0
    S = H * W
    T, Dctx = context.shape[1], context.shape[2]
    bf16 = jnp.bfloat16

    # NCHW -> token-major (N*S, C); per-batch (S, C) blocks via the grid.
    x_tok = jnp.transpose(x, (0, 2, 3, 1)).reshape(N * S, C)

    # GroupNorm membership-averaging matrix: (sum_rows x) @ A == per-channel group mean.
    cpg = C // GN_GROUPS
    gidx = np.arange(C) // cpg
    gn_A = jnp.asarray((gidx[:, None] == gidx[None, :]).astype(np.float32)
                       / float(S * cpg))

    # 3x3 conv weights stacked per ky: rows ordered (kx, Cin) to match lane-concat order.
    cw = (jnp.transpose(p["conv_in_w_raw"], (2, 3, 1, 0))
          .reshape(3, 3 * C, C).astype(bf16))

    # Fused cross-attn K|V projection and split GeGLU weights; all MXU weights in bf16.
    wkv2 = jnp.concatenate([p["attn2_wk"], p["attn2_wv"]], axis=1).astype(bf16)
    wa = p["geglu1_w"][:, :4 * C].astype(bf16)
    wg = p["geglu1_w"][:, 4 * C:].astype(bf16)
    ba = p["geglu1_b"][:, :4 * C]
    bg = p["geglu1_b"][:, 4 * C:]
    wqkv = p["attn1_wqkv"].astype(bf16)
    wo1 = p["attn1_wo"].astype(bf16)
    wq2 = p["attn2_wq"].astype(bf16)
    wo2 = p["attn2_wo"].astype(bf16)
    w2 = p["geglu2_w"].astype(bf16)
    cow = p["conv_out_w"].astype(bf16)

    args = (x_tok, context, gn_A,
            p["gn_g"], p["gn_b"], cw, p["conv_in_b"],
            p["ln1_g"], p["ln1_b"], wqkv, wo1, p["attn1_bo"],
            p["ln2_g"], p["ln2_b"], wq2, wkv2, wo2, p["attn2_bo"],
            p["ln3_g"], p["ln3_b"], wa, ba, wg, bg, w2, p["geglu2_b"],
            cow, p["conv_out_b"])

    def full(a):
        nd = a.ndim
        return pl.BlockSpec(a.shape, lambda n, _nd=nd: (0,) * _nd)

    in_specs = [pl.BlockSpec((S, C), lambda n: (n, 0)),            # x: one batch per step
                pl.BlockSpec((1, T, Dctx), lambda n: (n, 0, 0))]   # context: one batch
    in_specs += [full(a) for a in args[2:]]                        # weights: whole arrays

    kernel = functools.partial(_fused_block_kernel, n_head=N_HEAD, width=W)
    out_tok = pl.pallas_call(
        kernel,
        out_shape=jax.ShapeDtypeStruct((N * S, C), jnp.float32),
        grid=(N,),
        in_specs=in_specs,
        out_specs=pl.BlockSpec((S, C), lambda n: (n, 0)),
        compiler_params=pltpu.CompilerParams(dimension_semantics=("parallel",)),
    )(*args)

    return jnp.transpose(out_tok.reshape(N, H, W, C), (0, 3, 1, 2))


# ------------------------------ parameters ------------------------------------

def init_params(key):
    # Linear weights stored input-major (in, out) == torch Linear.weight.T; y = x @ W.
    C = CHANNELS
    ks = jax.random.split(key, 24)

    def nrm(k, shape, scale=0.05):
        return scale * jax.random.normal(k, shape, jnp.float32)

    conv_in_w_raw = nrm(ks[0], (C, C, 3, 3))       # (Cout, Cin, 3, 3)
    conv_out_w_raw = nrm(ks[1], (C, C, 1, 1))      # (Cout, Cin, 1, 1)
    return dict(
        gn_g=1.0 + nrm(ks[2], (1, C), 0.1), gn_b=nrm(ks[3], (1, C), 0.1),
        conv_in_w_raw=conv_in_w_raw,
        conv_in_b=nrm(ks[4], (1, C), 0.1),
        ln1_g=1.0 + nrm(ks[5], (1, C), 0.1), ln1_b=nrm(ks[6], (1, C), 0.1),
        ln2_g=1.0 + nrm(ks[7], (1, C), 0.1), ln2_b=nrm(ks[8], (1, C), 0.1),
        ln3_g=1.0 + nrm(ks[9], (1, C), 0.1), ln3_b=nrm(ks[10], (1, C), 0.1),
        attn1_wqkv=nrm(ks[11], (C, 3 * C)),
        attn1_wo=nrm(ks[12], (C, C)), attn1_bo=nrm(ks[13], (1, C), 0.1),
        attn2_wq=nrm(ks[14], (C, C)),
        attn2_wk=nrm(ks[15], (D_CONTEXT, C)), attn2_wv=nrm(ks[16], (D_CONTEXT, C)),
        attn2_wo=nrm(ks[17], (C, C)), attn2_bo=nrm(ks[18], (1, C), 0.1),
        geglu1_w=nrm(ks[19], (C, 8 * C)), geglu1_b=nrm(ks[20], (1, 8 * C), 0.1),
        geglu2_w=nrm(ks[21], (4 * C, C)), geglu2_b=nrm(ks[22], (1, C), 0.1),
        conv_out_w=conv_out_w_raw.reshape(C, C).T,
        conv_out_b=nrm(ks[23], (1, C), 0.1),
    )


# ------------------------------ pure-JAX reference ----------------------------

def reference(x, context, p, n_head):
    N, C, H, W = x.shape
    xg = x.reshape(N, GN_GROUPS, C // GN_GROUPS, H, W)
    m = xg.mean(axis=(2, 3, 4), keepdims=True)
    v = ((xg - m) ** 2).mean(axis=(2, 3, 4), keepdims=True)
    h = ((xg - m) / jnp.sqrt(v + GN_EPS)).reshape(N, C, H, W)
    h = h * p["gn_g"].reshape(1, C, 1, 1) + p["gn_b"].reshape(1, C, 1, 1)
    h = lax.conv_general_dilated(h, p["conv_in_w_raw"], (1, 1), ((1, 1), (1, 1)),
                                 dimension_numbers=("NCHW", "OIHW", "NCHW"))
    h = h + p["conv_in_b"].reshape(1, C, 1, 1)

    t = jnp.transpose(h.reshape(N, C, H * W), (0, 2, 1))

    def ln(z, g, b):
        mu = z.mean(-1, keepdims=True)
        va = ((z - mu) ** 2).mean(-1, keepdims=True)
        return (z - mu) / jnp.sqrt(va + LN_EPS) * g + b

    def mha(q, k, v):
        Nq, Sq, Cq = q.shape
        Sk = k.shape[1]
        dh = Cq // n_head
        qh = q.reshape(Nq, Sq, n_head, dh).transpose(0, 2, 1, 3)
        kh = k.reshape(Nq, Sk, n_head, dh).transpose(0, 2, 1, 3)
        vh = v.reshape(Nq, Sk, n_head, dh).transpose(0, 2, 1, 3)
        s = jnp.einsum("nhqd,nhkd->nhqk", qh, kh) / math.sqrt(dh)
        pm = jax.nn.softmax(s, axis=-1)
        o = jnp.einsum("nhqk,nhkd->nhqd", pm, vh)
        return o.transpose(0, 2, 1, 3).reshape(Nq, Sq, Cq)

    res = t
    z = ln(t, p["ln1_g"], p["ln1_b"])
    q, k, v = jnp.split(z @ p["attn1_wqkv"], 3, axis=-1)
    t = mha(q, k, v) @ p["attn1_wo"] + p["attn1_bo"] + res

    res = t
    z = ln(t, p["ln2_g"], p["ln2_b"])
    t = (mha(z @ p["attn2_wq"], context @ p["attn2_wk"], context @ p["attn2_wv"])
         @ p["attn2_wo"] + p["attn2_bo"] + res)

    res = t
    z = ln(t, p["ln3_g"], p["ln3_b"])
    hh = z @ p["geglu1_w"] + p["geglu1_b"]
    a, g = jnp.split(hh, 2, axis=-1)
    t = (a * jax.nn.gelu(g, approximate=False)) @ p["geglu2_w"] + p["geglu2_b"] + res

    out_t = t @ p["conv_out_w"] + p["conv_out_b"]
    return jnp.transpose(out_t, (0, 2, 1)).reshape(N, C, H, W) + x


# ----------------------------------- main --------------------------------------

if __name__ == "__main__":
    key = jax.random.PRNGKey(0)
    kx, kc, kp = jax.random.split(key, 3)
    N, H, W, S_CTX = 2, 8, 8, 16
    x = jax.random.normal(kx, (N, CHANNELS, H, W), jnp.float32)
    context = jax.random.normal(kc, (N, S_CTX, D_CONTEXT), jnp.float32)
    params = init_params(kp)

    out = unet_attention_block(x, context, params)
    out = jax.block_until_ready(out)

    ref = reference(x, context, params, N_HEAD)
    err = float(jnp.max(jnp.abs(out - ref)))
    assert out.shape == x.shape, (out.shape, x.shape)
    # tolerance covers bf16 MXU operands + tanh-GELU + approx softmax reciprocal
    assert err < 3e-2, f"max abs err {err}"
    print("KERNEL_OK")
</pallas_src>

<mosaic_0001>
module attributes {stable_mosaic.version = 11 : i64} {
  func.func @_fused_block_kernel(%arg0: i32, %arg1: memref<64x64xf32, #tpu.memory_space<vmem>>, %arg2: memref<1x16x64xf32, #tpu.memory_space<vmem>>, %arg3: memref<64x64xf32, #tpu.memory_space<vmem>>, %arg4: memref<1x64xf32, #tpu.memory_space<vmem>>, %arg5: memref<1x64xf32, #tpu.memory_space<vmem>>, %arg6: memref<3x192x64xbf16, #tpu.memory_space<vmem>>, %arg7: memref<1x64xf32, #tpu.memory_space<vmem>>, %arg8: memref<1x64xf32, #tpu.memory_space<vmem>>, %arg9: memref<1x64xf32, #tpu.memory_space<vmem>>, %arg10: memref<64x192xbf16, #tpu.memory_space<vmem>>, %arg11: memref<64x64xbf16, #tpu.memory_space<vmem>>, %arg12: memref<1x64xf32, #tpu.memory_space<vmem>>, %arg13: memref<1x64xf32, #tpu.memory_space<vmem>>, %arg14: memref<1x64xf32, #tpu.memory_space<vmem>>, %arg15: memref<64x64xbf16, #tpu.memory_space<vmem>>, %arg16: memref<64x128xbf16, #tpu.memory_space<vmem>>, %arg17: memref<64x64xbf16, #tpu.memory_space<vmem>>, %arg18: memref<1x64xf32, #tpu.memory_space<vmem>>, %arg19: memref<1x64xf32, #tpu.memory_space<vmem>>, %arg20: memref<1x64xf32, #tpu.memory_space<vmem>>, %arg21: memref<64x256xbf16, #tpu.memory_space<vmem>>, %arg22: memref<1x256xf32, #tpu.memory_space<vmem>>, %arg23: memref<64x256xbf16, #tpu.memory_space<vmem>>, %arg24: memref<1x256xf32, #tpu.memory_space<vmem>>, %arg25: memref<256x64xbf16, #tpu.memory_space<vmem>>, %arg26: memref<1x64xf32, #tpu.memory_space<vmem>>, %arg27: memref<64x64xbf16, #tpu.memory_space<vmem>>, %arg28: memref<1x64xf32, #tpu.memory_space<vmem>>, %arg29: memref<64x64xf32, #tpu.memory_space<vmem>>) attributes {dimension_semantics = [#tpu.dimension_semantics<parallel>], iteration_bounds = array<i64: 2>, scalar_prefetch = 0 : i64, scratch_operands = 0 : i64, tpu.core_type = #tpu.core_type<tc>, window_params = [{transform_indices = @transform_0, window_bounds = array<i64: 64, 64>}, {transform_indices = @transform_1, window_bounds = array<i64: 1, 16, 64>}, {pipeline_mode = #tpu.pipeline_mode<synchronous>, transform_indices = @transform_2, window_bounds = array<i64: 64, 64>}, {pipeline_mode = #tpu.pipeline_mode<synchronous>, transform_indices = @transform_3, window_bounds = array<i64: 1, 64>}, {pipeline_mode = #tpu.pipeline_mode<synchronous>, transform_indices = @transform_4, window_bounds = array<i64: 1, 64>}, {pipeline_mode = #tpu.pipeline_mode<synchronous>, transform_indices = @transform_5, window_bounds = array<i64: 3, 192, 64>}, {pipeline_mode = #tpu.pipeline_mode<synchronous>, transform_indices = @transform_6, window_bounds = array<i64: 1, 64>}, {pipeline_mode = #tpu.pipeline_mode<synchronous>, transform_indices = @transform_7, window_bounds = array<i64: 1, 64>}, {pipeline_mode = #tpu.pipeline_mode<synchronous>, transform_indices = @transform_8, window_bounds = array<i64: 1, 64>}, {pipeline_mode = #tpu.pipeline_mode<synchronous>, transform_indices = @transform_9, window_bounds = array<i64: 64, 192>}, {pipeline_mode = #tpu.pipeline_mode<synchronous>, transform_indices = @transform_10, window_bounds = array<i64: 64, 64>}, {pipeline_mode = #tpu.pipeline_mode<synchronous>, transform_indices = @transform_11, window_bounds = array<i64: 1, 64>}, {pipeline_mode = #tpu.pipeline_mode<synchronous>, transform_indices = @transform_12, window_bounds = array<i64: 1, 64>}, {pipeline_mode = #tpu.pipeline_mode<synchronous>, transform_indices = @transform_13, window_bounds = array<i64: 1, 64>}, {pipeline_mode = #tpu.pipeline_mode<synchronous>, transform_indices = @transform_14, window_bounds = array<i64: 64, 64>}, {pipeline_mode = #tpu.pipeline_mode<synchronous>, transform_indices = @transform_15, window_bounds = array<i64: 64, 128>}, {pipeline_mode = #tpu.pipeline_mode<synchronous>, transform_indices = @transform_16, window_bounds = array<i64: 64, 64>}, {pipeline_mode = #tpu.pipeline_mode<synchronous>, transform_indices = @transform_17, window_bounds = array<i64: 1, 64>}, {pipeline_mode = #tpu.pipeline_mode<synchronous>, transform_indices = @transform_18, window_bounds = array<i64: 1, 64>}, {pipeline_mode = #tpu.pipeline_mode<synchronous>, transform_indices = @transform_19, window_bounds = array<i64: 1, 64>}, {pipeline_mode = #tpu.pipeline_mode<synchronous>, transform_indices = @transform_20, window_bounds = array<i64: 64, 256>}, {pipeline_mode = #tpu.pipeline_mode<synchronous>, transform_indices = @transform_21, window_bounds = array<i64: 1, 256>}, {pipeline_mode = #tpu.pipeline_mode<synchronous>, transform_indices = @transform_22, window_bounds = array<i64: 64, 256>}, {pipeline_mode = #tpu.pipeline_mode<synchronous>, transform_indices = @transform_23, window_bounds = array<i64: 1, 256>}, {pipeline_mode = #tpu.pipeline_mode<synchronous>, transform_indices = @transform_24, window_bounds = array<i64: 256, 64>}, {pipeline_mode = #tpu.pipeline_mode<synchronous>, transform_indices = @transform_25, window_bounds = array<i64: 1, 64>}, {pipeline_mode = #tpu.pipeline_mode<synchronous>, transform_indices = @transform_26, window_bounds = array<i64: 64, 64>}, {pipeline_mode = #tpu.pipeline_mode<synchronous>, transform_indices = @transform_27, window_bounds = array<i64: 1, 64>}, {transform_indices = @transform_28, window_bounds = array<i64: 64, 64>}]} {
    %c0 = arith.constant 0 : index
    %c0_0 = arith.constant 0 : index
    %0 = vector.load %arg1[%c0, %c0_0] : memref<64x64xf32, #tpu.memory_space<vmem>>, vector<64x64xf32>
    %c0_1 = arith.constant 0 : index
    %c0_2 = arith.constant 0 : index
    %1 = vector.load %arg3[%c0_1, %c0_2] : memref<64x64xf32, #tpu.memory_space<vmem>>, vector<64x64xf32>
    %cst = arith.constant dense<0.000000e+00> : vector<64xf32>
    %2 = vector.multi_reduction <add>, %0, %cst [0] : vector<64x64xf32> to vector<64xf32>
    %3 = vector.shape_cast %2 : vector<64xf32> to vector<1x64xf32>
    %cst_3 = arith.constant dense<0.000000e+00> : vector<1x64xf32>
    %4 = tpu.matmul %3, %1, %cst_3 {dimension_numbers = #tpu.dot_dimension_numbers<[1], [0], [0], [1], [0, 0, 1, 1], [], []>} : vector<1x64xf32>, vector<64x64xf32>, vector<1x64xf32> -> vector<1x64xf32>
    %5 = vector.broadcast %4 : vector<1x64xf32> to vector<64x64xf32>
    %6 = arith.subf %0, %5 : vector<64x64xf32>
    %7 = arith.mulf %6, %6 : vector<64x64xf32>
    %cst_4 = arith.constant dense<0.000000e+00> : vector<64xf32>
    %8 = vector.multi_reduction <add>, %7, %cst_4 [0] : vector<64x64xf32> to vector<64xf32>
    %9 = vector.shape_cast %8 : vector<64xf32> to vector<1x64xf32>
    %cst_5 = arith.constant dense<0.000000e+00> : vector<1x64xf32>
    %10 = tpu.matmul %9, %1, %cst_5 {dimension_numbers = #tpu.dot_dimension_numbers<[1], [0], [0], [1], [0, 0, 1, 1], [], []>} : vector<1x64xf32>, vector<64x64xf32>, vector<1x64xf32> -> vector<1x64xf32>
    %cst_6 = arith.constant 9.99999997E-7 : f32
    %11 = vector.broadcast %cst_6 : f32 to vector<1x64xf32>
    %12 = arith.addf %10, %11 : vector<1x64xf32>
    %13 = math.rsqrt %12 : vector<1x64xf32>
    %14 = vector.broadcast %13 : vector<1x64xf32> to vector<64x64xf32>
    %15 = arith.mulf %6, %14 : vector<64x64xf32>
    %c0_7 = arith.constant 0 : index
    %c0_8 = arith.constant 0 : index
    %16 = vector.load %arg4[%c0_7, %c0_8] : memref<1x64xf32, #tpu.memory_space<vmem>>, vector<1x64xf32>
    %17 = vector.broadcast %16 : vector<1x64xf32> to vector<64x64xf32>
    %18 = arith.mulf %15, %17 : vector<64x64xf32>
    %c0_9 = arith.constant 0 : index
    %c0_10 = arith.constant 0 : index
    %19 = vector.load %arg5[%c0_9, %c0_10] : memref<1x64xf32, #tpu.memory_space<vmem>>, vector<1x64xf32>
    %20 = vector.broadcast %19 : vector<1x64xf32> to vector<64x64xf32>
    %21 = arith.addf %18, %20 : vector<64x64xf32>
    %22 = tpu.iota {dimensions = array<i32: 0>} : vector<64x1xi32>
    %c8_i32 = arith.constant 8 : i32
    %c0_i32 = arith.constant 0 : i32
    %23 = arith.cmpi eq, %c8_i32, %c0_i32 : i32
    %c1_i32 = arith.constant 1 : i32
    %24 = arith.select %23, %c1_i32, %c8_i32 : i32
    %25 = vector.broadcast %24 : i32 to vector<64x1xi32>
    %26 = arith.remsi %22, %25 : vector<64x1xi32>
    %c0_i32_11 = arith.constant 0 : i32
    %27 = vector.broadcast %c0_i32_11 : i32 to vector<64x1xi32>
    %28 = arith.cmpi ne, %26, %27 : vector<64x1xi32>
    %c0_i32_12 = arith.constant 0 : i32
    %29 = vector.broadcast %c0_i32_12 : i32 to vector<64x1xi32>
    %30 = arith.cmpi slt, %26, %29 : vector<64x1xi32>
    %c0_i32_13 = arith.constant 0 : i32
    %31 = arith.cmpi slt, %24, %c0_i32_13 : i32
    %32 = vector.broadcast %31 : i1 to vector<64x1xi1>
    %33 = vector.broadcast %32 : vector<64x1xi1> to vector<64x1xi1>
    %34 = arith.xori %30, %33 : vector<64x1xi1>
    %35 = arith.andi %34, %28 : vector<64x1xi1>
    %36 = vector.broadcast %24 : i32 to vector<64x1xi32>
    %37 = arith.addi %26, %36 : vector<64x1xi32>
    %38 = arith.select %35, %37, %26 : vector<64x1xi1>, vector<64x1xi32>
    %c0_i32_14 = arith.constant 0 : i32
    %39 = vector.broadcast %c0_i32_14 : i32 to vector<64x1xi32>
    %40 = arith.cmpi sgt, %38, %39 : vector<64x1xi32>
    %c1_i32_15 = arith.constant 1 : i32
    %41 = tpu.dynamic_rotate %21 by %c1_i32_15 dim 0 : vector<64x64xf32>, i32 -> vector<64x64xf32>
    %cst_16 = arith.constant 0.000000e+00 : f32
    %42 = vector.shape_cast %40 : vector<64x1xi1> to vector<64x1xi1>
    %43 = vector.broadcast %42 : vector<64x1xi1> to vector<64x64xi1>
    %44 = vector.broadcast %cst_16 : f32 to vector<64x64xf32>
    %45 = arith.select %43, %41, %44 : vector<64x64xi1>, vector<64x64xf32>
    %c7_i32 = arith.constant 7 : i32
    %46 = vector.broadcast %c7_i32 : i32 to vector<64x1xi32>
    %47 = arith.cmpi slt, %38, %46 : vector<64x1xi32>
    %c63_i32 = arith.constant 63 : i32
    %48 = tpu.dynamic_rotate %21 by %c63_i32 dim 0 : vector<64x64xf32>, i32 -> vector<64x64xf32>
    %cst_17 = arith.constant 0.000000e+00 : f32
    %49 = vector.shape_cast %47 : vector<64x1xi1> to vector<64x1xi1>
    %50 = vector.broadcast %49 : vector<64x1xi1> to vector<64x64xi1>
    %51 = vector.broadcast %cst_17 : f32 to vector<64x64xf32>
    %52 = arith.select %50, %48, %51 : vector<64x64xi1>, vector<64x64xf32>
    %53 = tpu.concatenate %45, %21, %52 in 1 : vector<64x64xf32>, vector<64x64xf32>, vector<64x64xf32> -> vector<64x192xf32>
    %c8_i32_18 = arith.constant 8 : i32
    %54 = vector.broadcast %c8_i32_18 : i32 to vector<64x1xi32>
    %55 = arith.cmpi sge, %22, %54 : vector<64x1xi32>
    %c8_i32_19 = arith.constant 8 : i32
    %56 = tpu.dynamic_rotate %53 by %c8_i32_19 dim 0 : vector<64x192xf32>, i32 -> vector<64x192xf32>
    %cst_20 = arith.constant 0.000000e+00 : f32
    %57 = vector.shape_cast %55 : vector<64x1xi1> to vector<64x1xi1>
    %58 = vector.broadcast %57 : vector<64x1xi1> to vector<64x192xi1>
    %59 = vector.broadcast %cst_20 : f32 to vector<64x192xf32>
    %60 = arith.select %58, %56, %59 : vector<64x192xi1>, vector<64x192xf32>
    %61 = arith.truncf %60 : vector<64x192xf32> to vector<64x192xbf16>
    %c0_21 = arith.constant 0 : index
    %c0_22 = arith.constant 0 : index
    %c0_23 = arith.constant 0 : index
    %62 = vector.load %arg6[%c0_21, %c0_22, %c0_23] : memref<3x192x64xbf16, #tpu.memory_space<vmem>>, vector<1x192x64xbf16>
    %63 = vector.shape_cast %62 : vector<1x192x64xbf16> to vector<192x64xbf16>
    %cst_24 = arith.constant dense<0.000000e+00> : vector<64x64xf32>
    %64 = tpu.matmul %61, %63, %cst_24 {dimension_numbers = #tpu.dot_dimension_numbers<[1], [0], [0], [1], [0, 0, 1, 1], [], []>} : vector<64x192xbf16>, vector<192x64xbf16>, vector<64x64xf32> -> vector<64x64xf32>
    %65 = arith.truncf %53 : vector<64x192xf32> to vector<64x192xbf16>
    %c1 = arith.constant 1 : index
    %c0_25 = arith.constant 0 : index
    %c0_26 = arith.constant 0 : index
    %66 = vector.load %arg6[%c1, %c0_25, %c0_26] : memref<3x192x64xbf16, #tpu.memory_space<vmem>>, vector<1x192x64xbf16>
    %67 = vector.shape_cast %66 : vector<1x192x64xbf16> to vector<192x64xbf16>
    %cst_27 = arith.constant dense<0.000000e+00> : vector<64x64xf32>
    %68 = tpu.matmul %65, %67, %cst_27 {dimension_numbers = #tpu.dot_dimension_numbers<[1], [0], [0], [1], [0, 0, 1, 1], [], []>} : vector<64x192xbf16>, vector<192x64xbf16>, vector<64x64xf32> -> vector<64x64xf32>
    %69 = arith.addf %64, %68 : vector<64x64xf32>
    %c56_i32 = arith.constant 56 : i32
    %70 = vector.broadcast %c56_i32 : i32 to vector<64x1xi32>
    %71 = arith.cmpi slt, %22, %70 : vector<64x1xi32>
    %c56_i32_28 = arith.constant 56 : i32
    %72 = tpu.dynamic_rotate %53 by %c56_i32_28 dim 0 : vector<64x192xf32>, i32 -> vector<64x192xf32>
    %cst_29 = arith.constant 0.000000e+00 : f32
    %73 = vector.shape_cast %71 : vector<64x1xi1> to vector<64x1xi1>
    %74 = vector.broadcast %73 : vector<64x1xi1> to vector<64x192xi1>
    %75 = vector.broadcast %cst_29 : f32 to vector<64x192xf32>
    %76 = arith.select %74, %72, %75 : vector<64x192xi1>, vector<64x192xf32>
    %77 = arith.truncf %76 : vector<64x192xf32> to vector<64x192xbf16>
    %c2 = arith.constant 2 : index
    %c0_30 = arith.constant 0 : index
    %c0_31 = arith.constant 0 : index
    %78 = vector.load %arg6[%c2, %c0_30, %c0_31] : memref<3x192x64xbf16, #tpu.memory_space<vmem>>, vector<1x192x64xbf16>
    %79 = vector.shape_cast %78 : vector<1x192x64xbf16> to vector<192x64xbf16>
    %cst_32 = arith.constant dense<0.000000e+00> : vector<64x64xf32>
    %80 = tpu.matmul %77, %79, %cst_32 {dimension_numbers = #tpu.dot_dimension_numbers<[1], [0], [0], [1], [0, 0, 1, 1], [], []>} : vector<64x192xbf16>, vector<192x64xbf16>, vector<64x64xf32> -> vector<64x64xf32>
    %81 = arith.addf %69, %80 : vector<64x64xf32>
    %c0_33 = arith.constant 0 : index
    %c0_34 = arith.constant 0 : index
    %82 = vector.load %arg7[%c0_33, %c0_34] : memref<1x64xf32, #tpu.memory_space<vmem>>, vector<1x64xf32>
    %83 = vector.broadcast %82 : vector<1x64xf32> to vector<64x64xf32>
    %84 = arith.addf %81, %83 : vector<64x64xf32>
    %c0_35 = arith.constant 0 : index
    %c0_36 = arith.constant 0 : index
    %85 = vector.load %arg8[%c0_35, %c0_36] : memref<1x64xf32, #tpu.memory_space<vmem>>, vector<1x64xf32>
    %c0_37 = arith.constant 0 : index
    %c0_38 = arith.constant 0 : index
    %86 = vector.load %arg9[%c0_37, %c0_38] : memref<1x64xf32, #tpu.memory_space<vmem>>, vector<1x64xf32>
    %cst_39 = arith.constant dense<0.000000e+00> : vector<64xf32>
    %87 = vector.multi_reduction <add>, %84, %cst_39 [1] : vector<64x64xf32> to vector<64xf32>
    %88 = vector.shape_cast %87 : vector<64xf32> to vector<64x1xf32>
    %cst_40 = arith.constant 6.400000e+01 : f32
    %89 = vector.broadcast %cst_40 : f32 to vector<64x1xf32>
    %90 = arith.divf %88, %89 : vector<64x1xf32>
    %91 = vector.broadcast %90 : vector<64x1xf32> to vector<64x64xf32>
    %92 = arith.subf %84, %91 : vector<64x64xf32>
    %93 = arith.mulf %92, %92 : vector<64x64xf32>
    %cst_41 = arith.constant dense<0.000000e+00> : vector<64xf32>
    %94 = vector.multi_reduction <add>, %93, %cst_41 [1] : vector<64x64xf32> to vector<64xf32>
    %95 = vector.shape_cast %94 : vector<64xf32> to vector<64x1xf32>
    %cst_42 = arith.constant 6.400000e+01 : f32
    %96 = vector.broadcast %cst_42 : f32 to vector<64x1xf32>
    %97 = arith.divf %95, %96 : vector<64x1xf32>
    %98 = vector.broadcast %90 : vector<64x1xf32> to vector<64x64xf32>
    %99 = arith.subf %84, %98 : vector<64x64xf32>
    %cst_43 = arith.constant 9.99999974E-6 : f32
    %100 = vector.broadcast %cst_43 : f32 to vector<64x1xf32>
    %101 = arith.addf %97, %100 : vector<64x1xf32>
    %102 = math.rsqrt %101 : vector<64x1xf32>
    %103 = vector.broadcast %102 : vector<64x1xf32> to vector<64x64xf32>
    %104 = arith.mulf %99, %103 : vector<64x64xf32>
    %105 = vector.broadcast %85 : vector<1x64xf32> to vector<64x64xf32>
    %106 = arith.mulf %104, %105 : vector<64x64xf32>
    %107 = vector.broadcast %86 : vector<1x64xf32> to vector<64x64xf32>
    %108 = arith.addf %106, %107 : vector<64x64xf32>
    %109 = arith.truncf %108 : vector<64x64xf32> to vector<64x64xbf16>
    %c0_44 = arith.constant 0 : index
    %c0_45 = arith.constant 0 : index
    %110 = vector.load %arg10[%c0_44, %c0_45] : memref<64x192xbf16, #tpu.memory_space<vmem>>, vector<64x192xbf16>
    %cst_46 = arith.constant dense<0.000000e+00> : vector<64x192xf32>
    %111 = tpu.matmul %109, %110, %cst_46 {dimension_numbers = #tpu.dot_dimension_numbers<[1], [0], [0], [1], [0, 0, 1, 1], [], []>} : vector<64x64xbf16>, vector<64x192xbf16>, vector<64x192xf32> -> vector<64x192xf32>
    %112 = vector.extract_strided_slice %111 {offsets = [0, 0], sizes = [64, 64], strides = [1, 1]} : vector<64x192xf32> to vector<64x64xf32>
    %113 = vector.extract_strided_slice %111 {offsets = [0, 64], sizes = [64, 64], strides = [1, 1]} : vector<64x192xf32> to vector<64x64xf32>
    %114 = vector.extract_strided_slice %111 {offsets = [0, 128], sizes = [64, 64], strides = [1, 1]} : vector<64x192xf32> to vector<64x64xf32>
    %115 = vector.extract_strided_slice %112 {offsets = [0, 0], sizes = [64, 32], strides = [1, 1]} : vector<64x64xf32> to vector<64x32xf32>
    %116 = arith.truncf %115 : vector<64x32xf32> to vector<64x32xbf16>
    %117 = vector.extract_strided_slice %113 {offsets = [0, 0], sizes = [64, 32], strides = [1, 1]} : vector<64x64xf32> to vector<64x32xf32>
    %118 = arith.truncf %117 : vector<64x32xf32> to vector<64x32xbf16>
    %cst_47 = arith.constant dense<0.000000e+00> : vector<64x64xf32>
    %119 = tpu.matmul %116, %118, %cst_47 {dimension_numbers = #tpu.dot_dimension_numbers<[1], [1], [0], [0], [0, 0, 1, 0], [], []>} : vector<64x32xbf16>, vector<64x32xbf16>, vector<64x64xf32> -> vector<64x64xf32>
    %120 = vector.extract_strided_slice %112 {offsets = [0, 32], sizes = [64, 32], strides = [1, 1]} : vector<64x64xf32> to vector<64x32xf32>
    %121 = arith.truncf %120 : vector<64x32xf32> to vector<64x32xbf16>
    %122 = vector.extract_strided_slice %113 {offsets = [0, 32], sizes = [64, 32], strides = [1, 1]} : vector<64x64xf32> to vector<64x32xf32>
    %123 = arith.truncf %122 : vector<64x32xf32> to vector<64x32xbf16>
    %cst_48 = arith.constant dense<0.000000e+00> : vector<64x64xf32>
    %124 = tpu.matmul %121, %123, %cst_48 {dimension_numbers = #tpu.dot_dimension_numbers<[1], [1], [0], [0], [0, 0, 1, 0], [], []>} : vector<64x32xbf16>, vector<64x32xbf16>, vector<64x64xf32> -> vector<64x64xf32>
    %125 = tpu.concatenate %119, %124 in 0 : vector<64x64xf32>, vector<64x64xf32> -> vector<128x64xf32>
    %cst_49 = arith.constant 0.176776692 : f32
    %126 = vector.broadcast %cst_49 : f32 to vector<128x64xf32>
    %127 = arith.mulf %125, %126 : vector<128x64xf32>
    %cst_50 = arith.constant dense<0xFF800000> : vector<128xf32>
    %128 = vector.multi_reduction <maximumf>, %127, %cst_50 [1] : vector<128x64xf32> to vector<128xf32>
    %129 = vector.shape_cast %128 : vector<128xf32> to vector<128x1xf32>
    %130 = vector.broadcast %129 : vector<128x1xf32> to vector<128x64xf32>
    %131 = arith.subf %127, %130 : vector<128x64xf32>
    %132 = math.exp %131 : vector<128x64xf32>
    %cst_51 = arith.constant dense<0.000000e+00> : vector<128xf32>
    %133 = vector.multi_reduction <add>, %132, %cst_51 [1] : vector<128x64xf32> to vector<128xf32>
    %134 = vector.shape_cast %133 : vector<128xf32> to vector<128x1xf32>
    %135 = tpu.reciprocal %134 {approx = true} : vector<128x1xf32> -> vector<128x1xf32>
    %136 = vector.broadcast %135 : vector<128x1xf32> to vector<128x64xf32>
    %137 = arith.mulf %132, %136 : vector<128x64xf32>
    %138 = vector.extract_strided_slice %137 {offsets = [0, 0], sizes = [64, 64], strides = [1, 1]} : vector<128x64xf32> to vector<64x64xf32>
    %139 = arith.truncf %138 : vector<64x64xf32> to vector<64x64xbf16>
    %140 = vector.extract_strided_slice %114 {offsets = [0, 0], sizes = [64, 32], strides = [1, 1]} : vector<64x64xf32> to vector<64x32xf32>
    %141 = arith.truncf %140 : vector<64x32xf32> to vector<64x32xbf16>
    %cst_52 = arith.constant dense<0.000000e+00> : vector<64x32xf32>
    %142 = tpu.matmul %139, %141, %cst_52 {dimension_numbers = #tpu.dot_dimension_numbers<[1], [0], [0], [1], [0, 0, 1, 1], [], []>} : vector<64x64xbf16>, vector<64x32xbf16>, vector<64x32xf32> -> vector<64x32xf32>
    %143 = arith.truncf %142 : vector<64x32xf32> to vector<64x32xbf16>
    %c0_53 = arith.constant 0 : index
    %c0_54 = arith.constant 0 : index
    %144 = vector.load %arg11[%c0_53, %c0_54] : memref<64x64xbf16, #tpu.memory_space<vmem>>, vector<32x64xbf16>
    %cst_55 = arith.constant dense<0.000000e+00> : vector<64x64xf32>
    %145 = tpu.matmul %143, %144, %cst_55 {dimension_numbers = #tpu.dot_dimension_numbers<[1], [0], [0], [1], [0, 0, 1, 1], [], []>} : vector<64x32xbf16>, vector<32x64xbf16>, vector<64x64xf32> -> vector<64x64xf32>
    %146 = vector.extract_strided_slice %137 {offsets = [64, 0], sizes = [64, 64], strides = [1, 1]} : vector<128x64xf32> to vector<64x64xf32>
    %147 = arith.truncf %146 : vector<64x64xf32> to vector<64x64xbf16>
    %148 = vector.extract_strided_slice %114 {offsets = [0, 32], sizes = [64, 32], strides = [1, 1]} : vector<64x64xf32> to vector<64x32xf32>
    %149 = arith.truncf %148 : vector<64x32xf32> to vector<64x32xbf16>
    %cst_56 = arith.constant dense<0.000000e+00> : vector<64x32xf32>
    %150 = tpu.matmul %147, %149, %cst_56 {dimension_numbers = #tpu.dot_dimension_numbers<[1], [0], [0], [1], [0, 0, 1, 1], [], []>} : vector<64x64xbf16>, vector<64x32xbf16>, vector<64x32xf32> -> vector<64x32xf32>
    %151 = arith.truncf %150 : vector<64x32xf32> to vector<64x32xbf16>
    %c32 = arith.constant 32 : index
    %c0_57 = arith.constant 0 : index
    %152 = vector.load %arg11[%c32, %c0_57] : memref<64x64xbf16, #tpu.memory_space<vmem>>, vector<32x64xbf16>
    %cst_58 = arith.constant dense<0.000000e+00> : vector<64x64xf32>
    %153 = tpu.matmul %151, %152, %cst_58 {dimension_numbers = #tpu.dot_dimension_numbers<[1], [0], [0], [1], [0, 0, 1, 1], [], []>} : vector<64x32xbf16>, vector<32x64xbf16>, vector<64x64xf32> -> vector<64x64xf32>
    %154 = arith.addf %145, %153 : vector<64x64xf32>
    %c0_59 = arith.constant 0 : index
    %c0_60 = arith.constant 0 : index
    %155 = vector.load %arg12[%c0_59, %c0_60] : memref<1x64xf32, #tpu.memory_space<vmem>>, vector<1x64xf32>
    %156 = vector.broadcast %155 : vector<1x64xf32> to vector<64x64xf32>
    %157 = arith.addf %154, %156 : vector<64x64xf32>
    %158 = arith.addf %157, %84 : vector<64x64xf32>
    %c0_61 = arith.constant 0 : index
    %c0_62 = arith.constant 0 : index
    %159 = vector.load %arg13[%c0_61, %c0_62] : memref<1x64xf32, #tpu.memory_space<vmem>>, vector<1x64xf32>
    %c0_63 = arith.constant 0 : index
    %c0_64 = arith.constant 0 : index
    %160 = vector.load %arg14[%c0_63, %c0_64] : memref<1x64xf32, #tpu.memory_space<vmem>>, vector<1x64xf32>
    %cst_65 = arith.constant dense<0.000000e+00> : vector<64xf32>
    %161 = vector.multi_reduction <add>, %158, %cst_65 [1] : vector<64x64xf32> to vector<64xf32>
    %162 = vector.shape_cast %161 : vector<64xf32> to vector<64x1xf32>
    %cst_66 = arith.constant 6.400000e+01 : f32
    %163 = vector.broadcast %cst_66 : f32 to vector<64x1xf32>
    %164 = arith.divf %162, %163 : vector<64x1xf32>
    %165 = vector.broadcast %164 : vector<64x1xf32> to vector<64x64xf32>
    %166 = arith.subf %158, %165 : vector<64x64xf32>
    %167 = arith.mulf %166, %166 : vector<64x64xf32>
    %cst_67 = arith.constant dense<0.000000e+00> : vector<64xf32>
    %168 = vector.multi_reduction <add>, %167, %cst_67 [1] : vector<64x64xf32> to vector<64xf32>
    %169 = vector.shape_cast %168 : vector<64xf32> to vector<64x1xf32>
    %cst_68 = arith.constant 6.400000e+01 : f32
    %170 = vector.broadcast %cst_68 : f32 to vector<64x1xf32>
    %171 = arith.divf %169, %170 : vector<64x1xf32>
    %172 = vector.broadcast %164 : vector<64x1xf32> to vector<64x64xf32>
    %173 = arith.subf %158, %172 : vector<64x64xf32>
    %cst_69 = arith.constant 9.99999974E-6 : f32
    %174 = vector.broadcast %cst_69 : f32 to vector<64x1xf32>
    %175 = arith.addf %171, %174 : vector<64x1xf32>
    %176 = math.rsqrt %175 : vector<64x1xf32>
    %177 = vector.broadcast %176 : vector<64x1xf32> to vector<64x64xf32>
    %178 = arith.mulf %173, %177 : vector<64x64xf32>
    %179 = vector.broadcast %159 : vector<1x64xf32> to vector<64x64xf32>
    %180 = arith.mulf %178, %179 : vector<64x64xf32>
    %181 = vector.broadcast %160 : vector<1x64xf32> to vector<64x64xf32>
    %182 = arith.addf %180, %181 : vector<64x64xf32>
    %183 = arith.truncf %182 : vector<64x64xf32> to vector<64x64xbf16>
    %c0_70 = arith.constant 0 : index
    %c0_71 = arith.constant 0 : index
    %184 = vector.load %arg15[%c0_70, %c0_71] : memref<64x64xbf16, #tpu.memory_space<vmem>>, vector<64x64xbf16>
    %cst_72 = arith.constant dense<0.000000e+00> : vector<64x64xf32>
    %185 = tpu.matmul %183, %184, %cst_72 {dimension_numbers = #tpu.dot_dimension_numbers<[1], [0], [0], [1], [0, 0, 1, 1], [], []>} : vector<64x64xbf16>, vector<64x64xbf16>, vector<64x64xf32> -> vector<64x64xf32>
    %c0_73 = arith.constant 0 : index
    %c0_74 = arith.constant 0 : index
    %c0_75 = arith.constant 0 : index
    %186 = vector.load %arg2[%c0_73, %c0_74, %c0_75] : memref<1x16x64xf32, #tpu.memory_space<vmem>>, vector<1x16x64xf32>
    %187 = vector.shape_cast %186 : vector<1x16x64xf32> to vector<16x64xf32>
    %188 = arith.truncf %187 : vector<16x64xf32> to vector<16x64xbf16>
    %c0_76 = arith.constant 0 : index
    %c0_77 = arith.constant 0 : index
    %189 = vector.load %arg16[%c0_76, %c0_77] : memref<64x128xbf16, #tpu.memory_space<vmem>>, vector<64x128xbf16>
    %cst_78 = arith.constant dense<0.000000e+00> : vector<16x128xf32>
    %190 = tpu.matmul %188, %189, %cst_78 {dimension_numbers = #tpu.dot_dimension_numbers<[1], [0], [0], [1], [0, 0, 1, 1], [], []>} : vector<16x64xbf16>, vector<64x128xbf16>, vector<16x128xf32> -> vector<16x128xf32>
    %191 = vector.extract_strided_slice %190 {offsets = [0, 0], sizes = [16, 64], strides = [1, 1]} : vector<16x128xf32> to vector<16x64xf32>
    %192 = vector.extract_strided_slice %190 {offsets = [0, 64], sizes = [16, 64], strides = [1, 1]} : vector<16x128xf32> to vector<16x64xf32>
    %193 = vector.extract_strided_slice %185 {offsets = [0, 0], sizes = [64, 32], strides = [1, 1]} : vector<64x64xf32> to vector<64x32xf32>
    %194 = arith.truncf %193 : vector<64x32xf32> to vector<64x32xbf16>
    %195 = vector.extract_strided_slice %191 {offsets = [0, 0], sizes = [16, 32], strides = [1, 1]} : vector<16x64xf32> to vector<16x32xf32>
    %196 = arith.truncf %195 : vector<16x32xf32> to vector<16x32xbf16>
    %cst_79 = arith.constant dense<0.000000e+00> : vector<64x16xf32>
    %197 = tpu.matmul %194, %196, %cst_79 {dimension_numbers = #tpu.dot_dimension_numbers<[1], [1], [0], [0], [0, 0, 1, 0], [], []>} : vector<64x32xbf16>, vector<16x32xbf16>, vector<64x16xf32> -> vector<64x16xf32>
    %198 = vector.extract_strided_slice %185 {offsets = [0, 32], sizes = [64, 32], strides = [1, 1]} : vector<64x64xf32> to vector<64x32xf32>
    %199 = arith.truncf %198 : vector<64x32xf32> to vector<64x32xbf16>
    %200 = vector.extract_strided_slice %191 {offsets = [0, 32], sizes = [16, 32], strides = [1, 1]} : vector<16x64xf32> to vector<16x32xf32>
    %201 = arith.truncf %200 : vector<16x32xf32> to vector<16x32xbf16>
    %cst_80 = arith.constant dense<0.000000e+00> : vector<64x16xf32>
    %202 = tpu.matmul %199, %201, %cst_80 {dimension_numbers = #tpu.dot_dimension_numbers<[1], [1], [0], [0], [0, 0, 1, 0], [], []>} : vector<64x32xbf16>, vector<16x32xbf16>, vector<64x16xf32> -> vector<64x16xf32>
    %203 = tpu.concatenate %197, %202 in 0 : vector<64x16xf32>, vector<64x16xf32> -> vector<128x16xf32>
    %cst_81 = arith.constant 0.176776692 : f32
    %204 = vector.broadcast %cst_81 : f32 to vector<128x16xf32>
    %205 = arith.mulf %203, %204 : vector<128x16xf32>
    %cst_82 = arith.constant dense<0xFF800000> : vector<128xf32>
    %206 = vector.multi_reduction <maximumf>, %205, %cst_82 [1] : vector<128x16xf32> to vector<128xf32>
    %207 = vector.shape_cast %206 : vector<128xf32> to vector<128x1xf32>
    %208 = vector.broadcast %207 : vector<128x1xf32> to vector<128x16xf32>
    %209 = arith.subf %205, %208 : vector<128x16xf32>
    %210 = math.exp %209 : vector<128x16xf32>
    %cst_83 = arith.constant dense<0.000000e+00> : vector<128xf32>
    %211 = vector.multi_reduction <add>, %210, %cst_83 [1] : vector<128x16xf32> to vector<128xf32>
    %212 = vector.shape_cast %211 : vector<128xf32> to vector<128x1xf32>
    %213 = tpu.reciprocal %212 {approx = true} : vector<128x1xf32> -> vector<128x1xf32>
    %214 = vector.broadcast %213 : vector<128x1xf32> to vector<128x16xf32>
    %215 = arith.mulf %210, %214 : vector<128x16xf32>
    %216 = vector.extract_strided_slice %215 {offsets = [0, 0], sizes = [64, 16], strides = [1, 1]} : vector<128x16xf32> to vector<64x16xf32>
    %217 = arith.truncf %216 : vector<64x16xf32> to vector<64x16xbf16>
    %218 = vector.extract_strided_slice %192 {offsets = [0, 0], sizes = [16, 32], strides = [1, 1]} : vector<16x64xf32> to vector<16x32xf32>
    %219 = arith.truncf %218 : vector<16x32xf32> to vector<16x32xbf16>
    %cst_84 = arith.constant dense<0.000000e+00> : vector<64x32xf32>
    %220 = tpu.matmul %217, %219, %cst_84 {dimension_numbers = #tpu.dot_dimension_numbers<[1], [0], [0], [1], [0, 0, 1, 1], [], []>} : vector<64x16xbf16>, vector<16x32xbf16>, vector<64x32xf32> -> vector<64x32xf32>
    %221 = arith.truncf %220 : vector<64x32xf32> to vector<64x32xbf16>
    %c0_85 = arith.constant 0 : index
    %c0_86 = arith.constant 0 : index
    %222 = vector.load %arg17[%c0_85, %c0_86] : memref<64x64xbf16, #tpu.memory_space<vmem>>, vector<32x64xbf16>
    %cst_87 = arith.constant dense<0.000000e+00> : vector<64x64xf32>
    %223 = tpu.matmul %221, %222, %cst_87 {dimension_numbers = #tpu.dot_dimension_numbers<[1], [0], [0], [1], [0, 0, 1, 1], [], []>} : vector<64x32xbf16>, vector<32x64xbf16>, vector<64x64xf32> -> vector<64x64xf32>
    %224 = vector.extract_strided_slice %215 {offsets = [64, 0], sizes = [64, 16], strides = [1, 1]} : vector<128x16xf32> to vector<64x16xf32>
    %225 = arith.truncf %224 : vector<64x16xf32> to vector<64x16xbf16>
    %226 = vector.extract_strided_slice %192 {offsets = [0, 32], sizes = [16, 32], strides = [1, 1]} : vector<16x64xf32> to vector<16x32xf32>
    %227 = arith.truncf %226 : vector<16x32xf32> to vector<16x32xbf16>
    %cst_88 = arith.constant dense<0.000000e+00> : vector<64x32xf32>
    %228 = tpu.matmul %225, %227, %cst_88 {dimension_numbers = #tpu.dot_dimension_numbers<[1], [0], [0], [1], [0, 0, 1, 1], [], []>} : vector<64x16xbf16>, vector<16x32xbf16>, vector<64x32xf32> -> vector<64x32xf32>
    %229 = arith.truncf %228 : vector<64x32xf32> to vector<64x32xbf16>
    %c32_89 = arith.constant 32 : index
    %c0_90 = arith.constant 0 : index
    %230 = vector.load %arg17[%c32_89, %c0_90] : memref<64x64xbf16, #tpu.memory_space<vmem>>, vector<32x64xbf16>
    %cst_91 = arith.constant dense<0.000000e+00> : vector<64x64xf32>
    %231 = tpu.matmul %229, %230, %cst_91 {dimension_numbers = #tpu.dot_dimension_numbers<[1], [0], [0], [1], [0, 0, 1, 1], [], []>} : vector<64x32xbf16>, vector<32x64xbf16>, vector<64x64xf32> -> vector<64x64xf32>
    %232 = arith.addf %223, %231 : vector<64x64xf32>
    %c0_92 = arith.constant 0 : index
    %c0_93 = arith.constant 0 : index
    %233 = vector.load %arg18[%c0_92, %c0_93] : memref<1x64xf32, #tpu.memory_space<vmem>>, vector<1x64xf32>
    %234 = vector.broadcast %233 : vector<1x64xf32> to vector<64x64xf32>
    %235 = arith.addf %232, %234 : vector<64x64xf32>
    %236 = arith.addf %235, %158 : vector<64x64xf32>
    %c0_94 = arith.constant 0 : index
    %c0_95 = arith.constant 0 : index
    %237 = vector.load %arg19[%c0_94, %c0_95] : memref<1x64xf32, #tpu.memory_space<vmem>>, vector<1x64xf32>
    %c0_96 = arith.constant 0 : index
    %c0_97 = arith.constant 0 : index
    %238 = vector.load %arg20[%c0_96, %c0_97] : memref<1x64xf32, #tpu.memory_space<vmem>>, vector<1x64xf32>
    %cst_98 = arith.constant dense<0.000000e+00> : vector<64xf32>
    %239 = vector.multi_reduction <add>, %236, %cst_98 [1] : vector<64x64xf32> to vector<64xf32>
    %240 = vector.shape_cast %239 : vector<64xf32> to vector<64x1xf32>
    %cst_99 = arith.constant 6.400000e+01 : f32
    %241 = vector.broadcast %cst_99 : f32 to vector<64x1xf32>
    %242 = arith.divf %240, %241 : vector<64x1xf32>
    %243 = vector.broadcast %242 : vector<64x1xf32> to vector<64x64xf32>
    %244 = arith.subf %236, %243 : vector<64x64xf32>
    %245 = arith.mulf %244, %244 : vector<64x64xf32>
    %cst_100 = arith.constant dense<0.000000e+00> : vector<64xf32>
    %246 = vector.multi_reduction <add>, %245, %cst_100 [1] : vector<64x64xf32> to vector<64xf32>
    %247 = vector.shape_cast %246 : vector<64xf32> to vector<64x1xf32>
    %cst_101 = arith.constant 6.400000e+01 : f32
    %248 = vector.broadcast %cst_101 : f32 to vector<64x1xf32>
    %249 = arith.divf %247, %248 : vector<64x1xf32>
    %250 = vector.broadcast %242 : vector<64x1xf32> to vector<64x64xf32>
    %251 = arith.subf %236, %250 : vector<64x64xf32>
    %cst_102 = arith.constant 9.99999974E-6 : f32
    %252 = vector.broadcast %cst_102 : f32 to vector<64x1xf32>
    %253 = arith.addf %249, %252 : vector<64x1xf32>
    %254 = math.rsqrt %253 : vector<64x1xf32>
    %255 = vector.broadcast %254 : vector<64x1xf32> to vector<64x64xf32>
    %256 = arith.mulf %251, %255 : vector<64x64xf32>
    %257 = vector.broadcast %237 : vector<1x64xf32> to vector<64x64xf32>
    %258 = arith.mulf %256, %257 : vector<64x64xf32>
    %259 = vector.broadcast %238 : vector<1x64xf32> to vector<64x64xf32>
    %260 = arith.addf %258, %259 : vector<64x64xf32>
    %261 = arith.truncf %260 : vector<64x64xf32> to vector<64x64xbf16>
    %c0_103 = arith.constant 0 : index
    %c0_104 = arith.constant 0 : index
    %262 = vector.load %arg23[%c0_103, %c0_104] : memref<64x256xbf16, #tpu.memory_space<vmem>>, vector<64x256xbf16>
    %cst_105 = arith.constant dense<0.000000e+00> : vector<64x256xf32>
    %263 = tpu.matmul %261, %262, %cst_105 {dimension_numbers = #tpu.dot_dimension_numbers<[1], [0], [0], [1], [0, 0, 1, 1], [], []>} : vector<64x64xbf16>, vector<64x256xbf16>, vector<64x256xf32> -> vector<64x256xf32>
    %c0_106 = arith.constant 0 : index
    %c0_107 = arith.constant 0 : index
    %264 = vector.load %arg24[%c0_106, %c0_107] : memref<1x256xf32, #tpu.memory_space<vmem>>, vector<1x256xf32>
    %265 = vector.broadcast %264 : vector<1x256xf32> to vector<64x256xf32>
    %266 = arith.addf %263, %265 : vector<64x256xf32>
    %c0_108 = arith.constant 0 : index
    %c0_109 = arith.constant 0 : index
    %267 = vector.load %arg21[%c0_108, %c0_109] : memref<64x256xbf16, #tpu.memory_space<vmem>>, vector<64x256xbf16>
    %cst_110 = arith.constant dense<0.000000e+00> : vector<64x256xf32>
    %268 = tpu.matmul %261, %267, %cst_110 {dimension_numbers = #tpu.dot_dimension_numbers<[1], [0], [0], [1], [0, 0, 1, 1], [], []>} : vector<64x64xbf16>, vector<64x256xbf16>, vector<64x256xf32> -> vector<64x256xf32>
    %c0_111 = arith.constant 0 : index
    %c0_112 = arith.constant 0 : index
    %269 = vector.load %arg22[%c0_111, %c0_112] : memref<1x256xf32, #tpu.memory_space<vmem>>, vector<1x256xf32>
    %270 = vector.broadcast %269 : vector<1x256xf32> to vector<64x256xf32>
    %271 = arith.addf %268, %270 : vector<64x256xf32>
    %cst_113 = arith.constant 5.000000e-01 : f32
    %272 = vector.broadcast %cst_113 : f32 to vector<64x256xf32>
    %273 = arith.mulf %272, %266 : vector<64x256xf32>
    %cst_114 = arith.constant 4.471500e-02 : f32
    %274 = vector.broadcast %cst_114 : f32 to vector<64x256xf32>
    %275 = arith.mulf %274, %266 : vector<64x256xf32>
    %276 = arith.mulf %275, %266 : vector<64x256xf32>
    %277 = arith.mulf %276, %266 : vector<64x256xf32>
    %278 = arith.addf %266, %277 : vector<64x256xf32>
    %cst_115 = arith.constant 0.797884583 : f32
    %279 = vector.broadcast %cst_115 : f32 to vector<64x256xf32>
    %280 = arith.mulf %279, %278 : vector<64x256xf32>
    %281 = math.tanh %280 : vector<64x256xf32>
    %cst_116 = arith.constant 1.000000e+00 : f32
    %282 = vector.broadcast %cst_116 : f32 to vector<64x256xf32>
    %283 = arith.addf %282, %281 : vector<64x256xf32>
    %284 = arith.mulf %273, %283 : vector<64x256xf32>
    %285 = arith.mulf %271, %284 : vector<64x256xf32>
    %286 = arith.truncf %285 : vector<64x256xf32> to vector<64x256xbf16>
    %c0_117 = arith.constant 0 : index
    %c0_118 = arith.constant 0 : index
    %287 = vector.load %arg25[%c0_117, %c0_118] : memref<256x64xbf16, #tpu.memory_space<vmem>>, vector<256x64xbf16>
    %cst_119 = arith.constant dense<0.000000e+00> : vector<64x64xf32>
    %288 = tpu.matmul %286, %287, %cst_119 {dimension_numbers = #tpu.dot_dimension_numbers<[1], [0], [0], [1], [0, 0, 1, 1], [], []>} : vector<64x256xbf16>, vector<256x64xbf16>, vector<64x64xf32> -> vector<64x64xf32>
    %c0_120 = arith.constant 0 : index
    %c0_121 = arith.constant 0 : index
    %289 = vector.load %arg26[%c0_120, %c0_121] : memref<1x64xf32, #tpu.memory_space<vmem>>, vector<1x64xf32>
    %290 = vector.broadcast %289 : vector<1x64xf32> to vector<64x64xf32>
    %291 = arith.addf %288, %290 : vector<64x64xf32>
    %292 = arith.addf %291, %236 : vector<64x64xf32>
    %293 = arith.truncf %292 : vector<64x64xf32> to vector<64x64xbf16>
    %c0_122 = arith.constant 0 : index
    %c0_123 = arith.constant 0 : index
    %294 = vector.load %arg27[%c0_122, %c0_123] : memref<64x64xbf16, #tpu.memory_space<vmem>>, vector<64x64xbf16>
    %cst_124 = arith.constant dense<0.000000e+00> : vector<64x64xf32>
    %295 = tpu.matmul %293, %294, %cst_124 {dimension_numbers = #tpu.dot_dimension_numbers<[1], [0], [0], [1], [0, 0, 1, 1], [], []>} : vector<64x64xbf16>, vector<64x64xbf16>, vector<64x64xf32> -> vector<64x64xf32>
    %c0_125 = arith.constant 0 : index
    %c0_126 = arith.constant 0 : index
    %296 = vector.load %arg28[%c0_125, %c0_126] : memref<1x64xf32, #tpu.memory_space<vmem>>, vector<1x64xf32>
    %297 = vector.broadcast %296 : vector<1x64xf32> to vector<64x64xf32>
    %298 = arith.addf %295, %297 : vector<64x64xf32>
    %299 = arith.addf %298, %0 : vector<64x64xf32>
    %c0_127 = arith.constant 0 : index
    %c0_128 = arith.constant 0 : index
    %300 = vector.load %arg29[%c0_127, %c0_128] : memref<64x64xf32, #tpu.memory_space<vmem>>, vector<64x64xf32>
    tpu.vector_store %arg29[%c0_127, %c0_128], %299 {strides = array<i32>} : memref<64x64xf32, #tpu.memory_space<vmem>>, vector<64x64xf32>,
    return
  }
  func.func @transform_0(%arg0: i32) -> (i32, i32) {
    %c0_i32 = arith.constant 0 : i32
    %c0_i32_0 = arith.constant 0 : i32
    return %arg0, %c0_i32 : i32, i32
  }
  func.func @transform_1(%arg0: i32) -> (i32, i32, i32) {
    %c0_i32 = arith.constant 0 : i32
    %c0_i32_0 = arith.constant 0 : i32
    %c0_i32_1 = arith.constant 0 : i32
    return %arg0, %c0_i32, %c0_i32_0 : i32, i32, i32
  }
  func.func @transform_2(%arg0: i32) -> (i32, i32) {
    %c0_i32 = arith.constant 0 : i32
    %c0_i32_0 = arith.constant 0 : i32
    %c0_i32_1 = arith.constant 0 : i32
    return %c0_i32, %c0_i32_0 : i32, i32
  }
  func.func @transform_3(%arg0: i32) -> (i32, i32) {
    %c0_i32 = arith.constant 0 : i32
    %c0_i32_0 = arith.constant 0 : i32
    %c0_i32_1 = arith.constant 0 : i32
    return %c0_i32, %c0_i32_0 : i32, i32
  }
  func.func @transform_4(%arg0: i32) -> (i32, i32) {
    %c0_i32 = arith.constant 0 : i32
    %c0_i32_0 = arith.constant 0 : i32
    %c0_i32_1 = arith.constant 0 : i32
    return %c0_i32, %c0_i32_0 : i32, i32
  }
  func.func @transform_5(%arg0: i32) -> (i32, i32, i32) {
    %c0_i32 = arith.constant 0 : i32
    %c0_i32_0 = arith.constant 0 : i32
    %c0_i32_1 = arith.constant 0 : i32
    %c0_i32_2 = arith.constant 0 : i32
    return %c0_i32, %c0_i32_0, %c0_i32_1 : i32, i32, i32
  }
  func.func @transform_6(%arg0: i32) -> (i32, i32) {
    %c0_i32 = arith.constant 0 : i32
    %c0_i32_0 = arith.constant 0 : i32
    %c0_i32_1 = arith.constant 0 : i32
    return %c0_i32, %c0_i32_0 : i32, i32
  }
  func.func @transform_7(%arg0: i32) -> (i32, i32) {
    %c0_i32 = arith.constant 0 : i32
    %c0_i32_0 = arith.constant 0 : i32
    %c0_i32_1 = arith.constant 0 : i32
    return %c0_i32, %c0_i32_0 : i32, i32
  }
  func.func @transform_8(%arg0: i32) -> (i32, i32) {
    %c0_i32 = arith.constant 0 : i32
    %c0_i32_0 = arith.constant 0 : i32
    %c0_i32_1 = arith.constant 0 : i32
    return %c0_i32, %c0_i32_0 : i32, i32
  }
  func.func @transform_9(%arg0: i32) -> (i32, i32) {
    %c0_i32 = arith.constant 0 : i32
    %c0_i32_0 = arith.constant 0 : i32
    %c0_i32_1 = arith.constant 0 : i32
    return %c0_i32, %c0_i32_0 : i32, i32
  }
  func.func @transform_10(%arg0: i32) -> (i32, i32) {
    %c0_i32 = arith.constant 0 : i32
    %c0_i32_0 = arith.constant 0 : i32
    %c0_i32_1 = arith.constant 0 : i32
    return %c0_i32, %c0_i32_0 : i32, i32
  }
  func.func @transform_11(%arg0: i32) -> (i32, i32) {
    %c0_i32 = arith.constant 0 : i32
    %c0_i32_0 = arith.constant 0 : i32
    %c0_i32_1 = arith.constant 0 : i32
    return %c0_i32, %c0_i32_0 : i32, i32
  }
  func.func @transform_12(%arg0: i32) -> (i32, i32) {
    %c0_i32 = arith.constant 0 : i32
    %c0_i32_0 = arith.constant 0 : i32
    %c0_i32_1 = arith.constant 0 : i32
    return %c0_i32, %c0_i32_0 : i32, i32
  }
  func.func @transform_13(%arg0: i32) -> (i32, i32) {
    %c0_i32 = arith.constant 0 : i32
    %c0_i32_0 = arith.constant 0 : i32
    %c0_i32_1 = arith.constant 0 : i32
    return %c0_i32, %c0_i32_0 : i32, i32
  }
  func.func @transform_14(%arg0: i32) -> (i32, i32) {
    %c0_i32 = arith.constant 0 : i32
    %c0_i32_0 = arith.constant 0 : i32
    %c0_i32_1 = arith.constant 0 : i32
    return %c0_i32, %c0_i32_0 : i32, i32
  }
  func.func @transform_15(%arg0: i32) -> (i32, i32) {
    %c0_i32 = arith.constant 0 : i32
    %c0_i32_0 = arith.constant 0 : i32
    %c0_i32_1 = arith.constant 0 : i32
    return %c0_i32, %c0_i32_0 : i32, i32
  }
  func.func @transform_16(%arg0: i32) -> (i32, i32) {
    %c0_i32 = arith.constant 0 : i32
    %c0_i32_0 = arith.constant 0 : i32
    %c0_i32_1 = arith.constant 0 : i32
    return %c0_i32, %c0_i32_0 : i32, i32
  }
  func.func @transform_17(%arg0: i32) -> (i32, i32) {
    %c0_i32 = arith.constant 0 : i32
    %c0_i32_0 = arith.constant 0 : i32
    %c0_i32_1 = arith.constant 0 : i32
    return %c0_i32, %c0_i32_0 : i32, i32
  }
  func.func @transform_18(%arg0: i32) -> (i32, i32) {
    %c0_i32 = arith.constant 0 : i32
    %c0_i32_0 = arith.constant 0 : i32
    %c0_i32_1 = arith.constant 0 : i32
    return %c0_i32, %c0_i32_0 : i32, i32
  }
  func.func @transform_19(%arg0: i32) -> (i32, i32) {
    %c0_i32 = arith.constant 0 : i32
    %c0_i32_0 = arith.constant 0 : i32
    %c0_i32_1 = arith.constant 0 : i32
    return %c0_i32, %c0_i32_0 : i32, i32
  }
  func.func @transform_20(%arg0: i32) -> (i32, i32) {
    %c0_i32 = arith.constant 0 : i32
    %c0_i32_0 = arith.constant 0 : i32
    %c0_i32_1 = arith.constant 0 : i32
    return %c0_i32, %c0_i32_0 : i32, i32
  }
  func.func @transform_21(%arg0: i32) -> (i32, i32) {
    %c0_i32 = arith.constant 0 : i32
    %c0_i32_0 = arith.constant 0 : i32
    %c0_i32_1 = arith.constant 0 : i32
    return %c0_i32, %c0_i32_0 : i32, i32
  }
  func.func @transform_22(%arg0: i32) -> (i32, i32) {
    %c0_i32 = arith.constant 0 : i32
    %c0_i32_0 = arith.constant 0 : i32
    %c0_i32_1 = arith.constant 0 : i32
    return %c0_i32, %c0_i32_0 : i32, i32
  }
  func.func @transform_23(%arg0: i32) -> (i32, i32) {
    %c0_i32 = arith.constant 0 : i32
    %c0_i32_0 = arith.constant 0 : i32
    %c0_i32_1 = arith.constant 0 : i32
    return %c0_i32, %c0_i32_0 : i32, i32
  }
  func.func @transform_24(%arg0: i32) -> (i32, i32) {
    %c0_i32 = arith.constant 0 : i32
    %c0_i32_0 = arith.constant 0 : i32
    %c0_i32_1 = arith.constant 0 : i32
    return %c0_i32, %c0_i32_0 : i32, i32
  }
  func.func @transform_25(%arg0: i32) -> (i32, i32) {
    %c0_i32 = arith.constant 0 : i32
    %c0_i32_0 = arith.constant 0 : i32
    %c0_i32_1 = arith.constant 0 : i32
    return %c0_i32, %c0_i32_0 : i32, i32
  }
  func.func @transform_26(%arg0: i32) -> (i32, i32) {
    %c0_i32 = arith.constant 0 : i32
    %c0_i32_0 = arith.constant 0 : i32
    %c0_i32_1 = arith.constant 0 : i32
    return %c0_i32, %c0_i32_0 : i32, i32
  }
  func.func @transform_27(%arg0: i32) -> (i32, i32) {
    %c0_i32 = arith.constant 0 : i32
    %c0_i32_0 = arith.constant 0 : i32
    %c0_i32_1 = arith.constant 0 : i32
    return %c0_i32, %c0_i32_0 : i32, i32
  }
  func.func @transform_28(%arg0: i32) -> (i32, i32) {
    %c0_i32 = arith.constant 0 : i32
    %c0_i32_0 = arith.constant 0 : i32
    return %arg0, %c0_i32 : i32, i32
  }
}

</mosaic_0001>

<llo_original>
// kernel: unet_attention_block.1
$region0: #{unet_attention_block.1}
  #allocation0 [shape = 'u32[]', space=smem, size = 0x4, offset = 0x4, fixed_abs, tag = 'smem constant byte address 0x4 - core index']
  #allocation1 [shape = 'u32[144,128]{1,0:T(1,128)}', space=vmem, size = 0x12000, scoped, tag = 'internal scratch']
  %s0 = inlined_call_operand.vmem [shape: f32[128,64], index: 0, kind: input, shape index: {}]
  %s1 = inlined_call_operand.vmem [shape: f32[2,16,64], index: 1, kind: input, shape index: {}]
  %s2 = inlined_call_operand.vmem [shape: f32[64,64], index: 2, kind: input, shape index: {}]
  %s3 = inlined_call_operand.vmem [shape: f32[1,64], index: 3, kind: input, shape index: {}]
  %s4 = inlined_call_operand.vmem [shape: f32[1,64], index: 4, kind: input, shape index: {}]
  %s5 = inlined_call_operand.vmem [shape: bf16[3,192,64], index: 5, kind: input, shape index: {}]
  %s6 = inlined_call_operand.vmem [shape: f32[1,64], index: 6, kind: input, shape index: {}]
  %s7 = inlined_call_operand.vmem [shape: f32[1,64], index: 7, kind: input, shape index: {}]
  %s8 = inlined_call_operand.vmem [shape: f32[1,64], index: 8, kind: input, shape index: {}]
  %s9 = inlined_call_operand.vmem [shape: bf16[64,192], index: 9, kind: input, shape index: {}]
  %s10 = inlined_call_operand.vmem [shape: bf16[64,64], index: 10, kind: input, shape index: {}]
  %s11 = inlined_call_operand.vmem [shape: f32[1,64], index: 11, kind: input, shape index: {}]
  %s12 = inlined_call_operand.vmem [shape: f32[1,64], index: 12, kind: input, shape index: {}]
  %s13 = inlined_call_operand.vmem [shape: f32[1,64], index: 13, kind: input, shape index: {}]
  %s14 = inlined_call_operand.vmem [shape: bf16[64,64], index: 14, kind: input, shape index: {}]
  %s15 = inlined_call_operand.vmem [shape: bf16[64,128], index: 15, kind: input, shape index: {}]
  %s16 = inlined_call_operand.vmem [shape: bf16[64,64], index: 16, kind: input, shape index: {}]
  %s17 = inlined_call_operand.vmem [shape: f32[1,64], index: 17, kind: input, shape index: {}]
  %s18 = inlined_call_operand.vmem [shape: f32[1,64], index: 18, kind: input, shape index: {}]
  %s19 = inlined_call_operand.vmem [shape: f32[1,64], index: 19, kind: input, shape index: {}]
  %s20 = inlined_call_operand.vmem [shape: bf16[64,256], index: 20, kind: input, shape index: {}]
  %s21 = inlined_call_operand.vmem [shape: f32[1,256], index: 21, kind: input, shape index: {}]
  %s22 = inlined_call_operand.vmem [shape: bf16[64,256], index: 22, kind: input, shape index: {}]
  %s23 = inlined_call_operand.vmem [shape: f32[1,256], index: 23, kind: input, shape index: {}]
  %s24 = inlined_call_operand.vmem [shape: bf16[256,64], index: 24, kind: input, shape index: {}]
  %s25 = inlined_call_operand.vmem [shape: f32[1,64], index: 25, kind: input, shape index: {}]
  %s26 = inlined_call_operand.vmem [shape: bf16[64,64], index: 26, kind: input, shape index: {}]
  %s27 = inlined_call_operand.vmem [shape: f32[1,64], index: 27, kind: input, shape index: {}]
  %s28 = inlined_call_operand.hbm [shape: f32[128,64], index: 28, kind: output, shape index: {}]
  %s29 = sld [smem:[#allocation0]]
  $region145: #{unet_attention_block.1} parent=0
    _
  %s31 = ssub.s32 1, %s29
  %s32 = scalar_select 0, %s31, %s29
  $region1: #{unet_attention_block.1} parent=0
    #allocation2 [shape = 'u8[65536]{0}', space=vmem, size = 0x10000, scoped, tag = 'output window, operand 0']
    #allocation3 [shape = 's32[2]{0}', space=sflag, size = 0x8, scoped, tag = 'scoped memory for unet_attention_block.1']
    %33 = vsyncpa [#allocation3], 0
    %s34 = scalar_lea.sflag [#allocation3], 1
    %35 = vsyncpa %s34, 0
    loop: start=0, step=1, limit=4
    $region2: #{unet_attention_block.1} parent=1 // loop_pre_header
      _
    $region3: #{unet_attention_block.1} parent=1 // loop_header
      %s37 = sphi 0, %s41
      %p38 = scmp.ge.s32.totalorder %s37, 4
      %s47 = sphi 0, %s49
      %s50 = sphi 0, %s47
      %s51 = sphi 0, %s50
      %s67 = sphi 0, %s51
      %s73 = sphi 0, %s75
      %s76 = sphi 0, %s73
      %s77 = sphi 0, %s76
      %s93 = sphi 0, %s77
      %s97 = sphi 0, %s97
      %s99 = sphi 0, %s97
      %s100 = sphi 0, %s99
      %s114 = sphi 0, %s100
      %s118 = sphi 0, %s118
      %s120 = sphi 0, %s118
      %s121 = sphi 0, %s120
      %s135 = sphi 0, %s121
      %s139 = sphi 0, %s139
      %s141 = sphi 0, %s139
      %s142 = sphi 0, %s141
      %s156 = sphi 0, %s142
      %s160 = sphi 0, %s160
      %s162 = sphi 0, %s160
      %s163 = sphi 0, %s162
      %s177 = sphi 0, %s163
      %s181 = sphi 0, %s181
      %s183 = sphi 0, %s181
      %s184 = sphi 0, %s183
      %s198 = sphi 0, %s184
      %s202 = sphi 0, %s202
      %s204 = sphi 0, %s202
      %s205 = sphi 0, %s204
      %s219 = sphi 0, %s205
      %s223 = sphi 0, %s223
      %s225 = sphi 0, %s223
      %s226 = sphi 0, %s225
      %s240 = sphi 0, %s226
      %s244 = sphi 0, %s244
      %s246 = sphi 0, %s244
      %s247 = sphi 0, %s246
      %s261 = sphi 0, %s247
      %s265 = sphi 0, %s265
      %s267 = sphi 0, %s265
      %s268 = sphi 0, %s267
      %s282 = sphi 0, %s268
      %s286 = sphi 0, %s286
      %s288 = sphi 0, %s286
      %s289 = sphi 0, %s288
      %s303 = sphi 0, %s289
      %s307 = sphi 0, %s307
      %s309 = sphi 0, %s307
      %s310 = sphi 0, %s309
      %s324 = sphi 0, %s310
      %s328 = sphi 0, %s328
      %s330 = sphi 0, %s328
      %s331 = sphi 0, %s330
      %s345 = sphi 0, %s331
      %s349 = sphi 0, %s349
      %s351 = sphi 0, %s349
      %s352 = sphi 0, %s351
      %s366 = sphi 0, %s352
      %s370 = sphi 0, %s370
      %s372 = sphi 0, %s370
      %s373 = sphi 0, %s372
      %s387 = sphi 0, %s373
      %s391 = sphi 0, %s391
      %s393 = sphi 0, %s391
      %s394 = sphi 0, %s393
      %s408 = sphi 0, %s394
      %s412 = sphi 0, %s412
      %s414 = sphi 0, %s412
      %s415 = sphi 0, %s414
      %s429 = sphi 0, %s415
      %s433 = sphi 0, %s433
      %s435 = sphi 0, %s433
      %s436 = sphi 0, %s435
      %s450 = sphi 0, %s436
      %s454 = sphi 0, %s454
      %s456 = sphi 0, %s454
      %s457 = sphi 0, %s456
      %s471 = sphi 0, %s457
      %s475 = sphi 0, %s475
      %s477 = sphi 0, %s475
      %s478 = sphi 0, %s477
      %s492 = sphi 0, %s478
      %s496 = sphi 0, %s496
      %s498 = sphi 0, %s496
      %s499 = sphi 0, %s498
      %s513 = sphi 0, %s499
      %s517 = sphi 0, %s517
      %s519 = sphi 0, %s517
      %s520 = sphi 0, %s519
      %s534 = sphi 0, %s520
      %s538 = sphi 0, %s538
      %s540 = sphi 0, %s538
      %s541 = sphi 0, %s540
      %s555 = sphi 0, %s541
      %s559 = sphi 0, %s559
      %s561 = sphi 0, %s559
      %s562 = sphi 0, %s561
      %s576 = sphi 0, %s562
      %s580 = sphi 0, %s580
      %s582 = sphi 0, %s580
      %s583 = sphi 0, %s582
      %s597 = sphi 0, %s583
      %s601 = sphi 0, %s601
      %s603 = sphi 0, %s601
      %s604 = sphi 0, %s603
      %s618 = sphi 0, %s604
      %s622 = sphi 0, %s622
      %s624 = sphi 0, %s622
      %s625 = sphi 0, %s624
      %s639 = sphi 0, %s625
      %s645 = sphi 0, %s647
      %s648 = sphi 0, %s645
      %s649 = sphi 0, %s648
      %s665 = sphi 0, %s649
    $region4: #{unet_attention_block.1} parent=1 // loop_header_branch
      %40 = sbr.rel (%p38) target = $region8
    $region5: #{unet_attention_block.1} parent=1 // loop_body
      %s42 = ssub.s32 %s37, 1
      %s43 = ssub.s32 %s37, 2
      %s44 = sadd.s32 %s37, 1
      %s45 = ssub.s32 %s37, %s44
      %p46 = scmp.eq.s32.totalorder %s45, 0
      %s48 = sadd.s32 %s47, 1
      %s49 = scalar_select %p46, %s47, %s48
      %p52 = pneg %p46
      %p53 = scmp.eq.s32.totalorder %s37, 1
      %p54 = por %p52, %p53
      %p55 = scmp.ne.s32.totalorder %s47, %s50
      %p56 = scmp.eq.s32.totalorder %s37, 0
      %p57 = por %p55, %p56
      %p58 = scmp.ne.s32.totalorder %s47, %s50
      %p59 = scmp.eq.s32.totalorder %s42, 1
      %p60 = por %p58, %p59
      %p61 = scmp.ne.s32.totalorder %s50, %s51
      %p62 = scmp.eq.s32.totalorder %s42, 0
      %p63 = por %p61, %p62
      %p64 = scmp.ne.s32.totalorder %s50, %s51
      %p65 = scmp.eq.s32.totalorder %s43, 1
      %p66 = por %p64, %p65
      %p68 = scmp.ne.s32.totalorder %s51, %s67
      %p69 = scmp.eq.s32.totalorder %s43, 0
      %p70 = por %p68, %p69
      %s71 = ssub.s32 %s37, %s44
      %p72 = scmp.eq.s32.totalorder %s71, 0
      %s74 = sadd.s32 %s73, 1
      %s75 = scalar_select %p72, %s73, %s74
      %p78 = pneg %p72
      %p79 = scmp.eq.s32.totalorder %s37, 1
      %p80 = por %p78, %p79
      %p81 = scmp.ne.s32.totalorder %s73, %s76
      %p82 = scmp.eq.s32.totalorder %s37, 0
      %p83 = por %p81, %p82
      %p84 = scmp.ne.s32.totalorder %s73, %s76
      %p85 = scmp.eq.s32.totalorder %s42, 1
      %p86 = por %p84, %p85
      %p87 = scmp.ne.s32.totalorder %s76, %s77
      %p88 = scmp.eq.s32.totalorder %s42, 0
      %p89 = por %p87, %p88
      %p90 = scmp.ne.s32.totalorder %s76, %s77
      %p91 = scmp.eq.s32.totalorder %s43, 1
      %p92 = por %p90, %p91
      %p94 = scmp.ne.s32.totalorder %s77, %s93
      %p95 = scmp.eq.s32.totalorder %s43, 0
      %p96 = por %p94, %p95
      %s98 = sadd.s32 %s97, 1
      %p101 = scmp.eq.s32.totalorder %s37, 1
      %p102 = scmp.ne.s32.totalorder %s97, %s99
      %p103 = scmp.eq.s32.totalorder %s37, 0
      %p104 = por %p102, %p103
      %p105 = scmp.ne.s32.totalorder %s97, %s99
      %p106 = scmp.eq.s32.totalorder %s42, 1
      %p107 = por %p105, %p106
      %p108 = scmp.ne.s32.totalorder %s99, %s100
      %p109 = scmp.eq.s32.totalorder %s42, 0
      %p110 = por %p108, %p109
      %p111 = scmp.ne.s32.totalorder %s99, %s100
      %p112 = scmp.eq.s32.totalorder %s43, 1
      %p113 = por %p111, %p112
      %p115 = scmp.ne.s32.totalorder %s100, %s114
      %p116 = scmp.eq.s32.totalorder %s43, 0
      %p117 = por %p115, %p116
      %s119 = sadd.s32 %s118, 1
      %p122 = scmp.eq.s32.totalorder %s37, 1
      %p123 = scmp.ne.s32.totalorder %s118, %s120
      %p124 = scmp.eq.s32.totalorder %s37, 0
      %p125 = por %p123, %p124
      %p126 = scmp.ne.s32.totalorder %s118, %s120
      %p127 = scmp.eq.s32.totalorder %s42, 1
      %p128 = por %p126, %p127
      %p129 = scmp.ne.s32.totalorder %s120, %s121
      %p130 = scmp.eq.s32.totalorder %s42, 0
      %p131 = por %p129, %p130
      %p132 = scmp.ne.s32.totalorder %s120, %s121
      %p133 = scmp.eq.s32.totalorder %s43, 1
      %p134 = por %p132, %p133
      %p136 = scmp.ne.s32.totalorder %s121, %s135
      %p137 = scmp.eq.s32.totalorder %s43, 0
      %p138 = por %p136, %p137
      %s140 = sadd.s32 %s139, 1
      %p143 = scmp.eq.s32.totalorder %s37, 1
      %p144 = scmp.ne.s32.totalorder %s139, %s141
      %p145 = scmp.eq.s32.totalorder %s37, 0
      %p146 = por %p144, %p145
      %p147 = scmp.ne.s32.totalorder %s139, %s141
      %p148 = scmp.eq.s32.totalorder %s42, 1
      %p149 = por %p147, %p148
      %p150 = scmp.ne.s32.totalorder %s141, %s142
      %p151 = scmp.eq.s32.totalorder %s42, 0
      %p152 = por %p150, %p151
      %p153 = scmp.ne.s32.totalorder %s141, %s142
      %p154 = scmp.eq.s32.totalorder %s43, 1
      %p155 = por %p153, %p154
      %p157 = scmp.ne.s32.totalorder %s142, %s156
      %p158 = scmp.eq.s32.totalorder %s43, 0
      %p159 = por %p157, %p158
      %s161 = sadd.s32 %s160, 1
      %p164 = scmp.eq.s32.totalorder %s37, 1
      %p165 = scmp.ne.s32.totalorder %s160, %s162
      %p166 = scmp.eq.s32.totalorder %s37, 0
      %p167 = por %p165, %p166
      %p168 = scmp.ne.s32.totalorder %s160, %s162
      %p169 = scmp.eq.s32.totalorder %s42, 1
      %p170 = por %p168, %p169
      %p171 = scmp.ne.s32.totalorder %s162, %s163
      %p172 = scmp.eq.s32.totalorder %s42, 0
      %p173 = por %p171, %p172
      %p174 = scmp.ne.s32.totalorder %s162, %s163
      %p175 = scmp.eq.s32.totalorder %s43, 1
      %p176 = por %p174, %p175
      %p178 = scmp.ne.s32.totalorder %s163, %s177
      %p179 = scmp.eq.s32.totalorder %s43, 0
      %p180 = por %p178, %p179
      %s182 = sadd.s32 %s181, 1
      %p185 = scmp.eq.s32.totalorder %s37, 1
      %p186 = scmp.ne.s32.totalorder %s181, %s183
      %p187 = scmp.eq.s32.totalorder %s37, 0
      %p188 = por %p186, %p187
      %p189 = scmp.ne.s32.totalorder %s181, %s183
      %p190 = scmp.eq.s32.totalorder %s42, 1
      %p191 = por %p189, %p190
      %p192 = scmp.ne.s32.totalorder %s183, %s184
      %p193 = scmp.eq.s32.totalorder %s42, 0
      %p194 = por %p192, %p193
      %p195 = scmp.ne.s32.totalorder %s183, %s184
      %p196 = scmp.eq.s32.totalorder %s43, 1
      %p197 = por %p195, %p196
      %p199 = scmp.ne.s32.totalorder %s184, %s198
      %p200 = scmp.eq.s32.totalorder %s43, 0
      %p201 = por %p199, %p200
      %s203 = sadd.s32 %s202, 1
      %p206 = scmp.eq.s32.totalorder %s37, 1
      %p207 = scmp.ne.s32.totalorder %s202, %s204
      %p208 = scmp.eq.s32.totalorder %s37, 0
      %p209 = por %p207, %p208
      %p210 = scmp.ne.s32.totalorder %s202, %s204
      %p211 = scmp.eq.s32.totalorder %s42, 1
      %p212 = por %p210, %p211
      %p213 = scmp.ne.s32.totalorder %s204, %s205
      %p214 = scmp.eq.s32.totalorder %s42, 0
      %p215 = por %p213, %p214
      %p216 = scmp.ne.s32.totalorder %s204, %s205
      %p217 = scmp.eq.s32.totalorder %s43, 1
      %p218 = por %p216, %p217
      %p220 = scmp.ne.s32.totalorder %s205, %s219
      %p221 = scmp.eq.s32.totalorder %s43, 0
      %p222 = por %p220, %p221
      %s224 = sadd.s32 %s223, 1
      %p227 = scmp.eq.s32.totalorder %s37, 1
      %p228 = scmp.ne.s32.totalorder %s223, %s225
      %p229 = scmp.eq.s32.totalorder %s37, 0
      %p230 = por %p228, %p229
      %p231 = scmp.ne.s32.totalorder %s223, %s225
      %p232 = scmp.eq.s32.totalorder %s42, 1
      %p233 = por %p231, %p232
      %p234 = scmp.ne.s32.totalorder %s225, %s226
      %p235 = scmp.eq.s32.totalorder %s42, 0
      %p236 = por %p234, %p235
      %p237 = scmp.ne.s32.totalorder %s225, %s226
      %p238 = scmp.eq.s32.totalorder %s43, 1
      %p239 = por %p237, %p238
      %p241 = scmp.ne.s32.totalorder %s226, %s240
      %p242 = scmp.eq.s32.totalorder %s43, 0
      %p243 = por %p241, %p242
      %s245 = sadd.s32 %s244, 1
      %p248 = scmp.eq.s32.totalorder %s37, 1
      %p249 = scmp.ne.s32.totalorder %s244, %s246
      %p250 = scmp.eq.s32.totalorder %s37, 0
      %p251 = por %p249, %p250
      %p252 = scmp.ne.s32.totalorder %s244, %s246
      %p253 = scmp.eq.s32.totalorder %s42, 1
      %p254 = por %p252, %p253
      %p255 = scmp.ne.s32.totalorder %s246, %s247
      %p256 = scmp.eq.s32.totalorder %s42, 0
      %p257 = por %p255, %p256
      %p258 = scmp.ne.s32.totalorder %s246, %s247
      %p259 = scmp.eq.s32.totalorder %s43, 1
      %p260 = por %p258, %p259
      %p262 = scmp.ne.s32.totalorder %s247, %s261
      %p263 = scmp.eq.s32.totalorder %s43, 0
      %p264 = por %p262, %p263
      %s266 = sadd.s32 %s265, 1
      %p269 = scmp.eq.s32.totalorder %s37, 1
      %p270 = scmp.ne.s32.totalorder %s265, %s267
      %p271 = scmp.eq.s32.totalorder %s37, 0
      %p272 = por %p270, %p271
      %p273 = scmp.ne.s32.totalorder %s265, %s267
      %p274 = scmp.eq.s32.totalorder %s42, 1
      %p275 = por %p273, %p274
      %p276 = scmp.ne.s32.totalorder %s267, %s268
      %p277 = scmp.eq.s32.totalorder %s42, 0
      %p278 = por %p276, %p277
      %p279 = scmp.ne.s32.totalorder %s267, %s268
      %p280 = scmp.eq.s32.totalorder %s43, 1
      %p281 = por %p279, %p280
      %p283 = scmp.ne.s32.totalorder %s268, %s282
      %p284 = scmp.eq.s32.totalorder %s43, 0
      %p285 = por %p283, %p284
      %s287 = sadd.s32 %s286, 1
      %p290 = scmp.eq.s32.totalorder %s37, 1
      %p291 = scmp.ne.s32.totalorder %s286, %s288
      %p292 = scmp.eq.s32.totalorder %s37, 0
      %p293 = por %p291, %p292
      %p294 = scmp.ne.s32.totalorder %s286, %s288
      %p295 = scmp.eq.s32.totalorder %s42, 1
      %p296 = por %p294, %p295
      %p297 = scmp.ne.s32.totalorder %s288, %s289
      %p298 = scmp.eq.s32.totalorder %s42, 0
      %p299 = por %p297, %p298
      %p300 = scmp.ne.s32.totalorder %s288, %s289
      %p301 = scmp.eq.s32.totalorder %s43, 1
      %p302 = por %p300, %p301
      %p304 = scmp.ne.s32.totalorder %s289, %s303
      %p305 = scmp.eq.s32.totalorder %s43, 0
      %p306 = por %p304, %p305
      %s308 = sadd.s32 %s307, 1
      %p311 = scmp.eq.s32.totalorder %s37, 1
      %p312 = scmp.ne.s32.totalorder %s307, %s309
      %p313 = scmp.eq.s32.totalorder %s37, 0
      %p314 = por %p312, %p313
      %p315 = scmp.ne.s32.totalorder %s307, %s309
      %p316 = scmp.eq.s32.totalorder %s42, 1
      %p317 = por %p315, %p316
      %p318 = scmp.ne.s32.totalorder %s309, %s310
      %p319 = scmp.eq.s32.totalorder %s42, 0
      %p320 = por %p318, %p319
      %p321 = scmp.ne.s32.totalorder %s309, %s310
      %p322 = scmp.eq.s32.totalorder %s43, 1
      %p323 = por %p321, %p322
      %p325 = scmp.ne.s32.totalorder %s310, %s324
      %p326 = scmp.eq.s32.totalorder %s43, 0
      %p327 = por %p325, %p326
      %s329 = sadd.s32 %s328, 1
      %p332 = scmp.eq.s32.totalorder %s37, 1
      %p333 = scmp.ne.s32.totalorder %s328, %s330
      %p334 = scmp.eq.s32.totalorder %s37, 0
      %p335 = por %p333, %p334
      %p336 = scmp.ne.s32.totalorder %s328, %s330
      %p337 = scmp.eq.s32.totalorder %s42, 1
      %p338 = por %p336, %p337
      %p339 = scmp.ne.s32.totalorder %s330, %s331
      %p340 = scmp.eq.s32.totalorder %s42, 0
      %p341 = por %p339, %p340
      %p342 = scmp.ne.s32.totalorder %s330, %s331
      %p343 = scmp.eq.s32.totalorder %s43, 1
      %p344 = por %p342, %p343
      %p346 = scmp.ne.s32.totalorder %s331, %s345
      %p347 = scmp.eq.s32.totalorder %s43, 0
      %p348 = por %p346, %p347
      %s350 = sadd.s32 %s349, 1
      %p353 = scmp.eq.s32.totalorder %s37, 1
      %p354 = scmp.ne.s32.totalorder %s349, %s351
      %p355 = scmp.eq.s32.totalorder %s37, 0
      %p356 = por %p354, %p355
      %p357 = scmp.ne.s32.totalorder %s349, %s351
      %p358 = scmp.eq.s32.totalorder %s42, 1
      %p359 = por %p357, %p358
      %p360 = scmp.ne.s32.totalorder %s351, %s352
      %p361 = scmp.eq.s32.totalorder %s42, 0
      %p362 = por %p360, %p361
      %p363 = scmp.ne.s32.totalorder %s351, %s352
      %p364 = scmp.eq.s32.totalorder %s43, 1
      %p365 = por %p363, %p364
      %p367 = scmp.ne.s32.totalorder %s352, %s366
      %p368 = scmp.eq.s32.totalorder %s43, 0
      %p369 = por %p367, %p368
      %s371 = sadd.s32 %s370, 1
      %p374 = scmp.eq.s32.totalorder %s37, 1
      %p375 = scmp.ne.s32.totalorder %s370, %s372
      %p376 = scmp.eq.s32.totalorder %s37, 0
      %p377 = por %p375, %p376
      %p378 = scmp.ne.s32.totalorder %s370, %s372
      %p379 = scmp.eq.s32.totalorder %s42, 1
      %p380 = por %p378, %p379
      %p381 = scmp.ne.s32.totalorder %s372, %s373
      %p382 = scmp.eq.s32.totalorder %s42, 0
      %p383 = por %p381, %p382
      %p384 = scmp.ne.s32.totalorder %s372, %s373
      %p385 = scmp.eq.s32.totalorder %s43, 1
      %p386 = por %p384, %p385
      %p388 = scmp.ne.s32.totalorder %s373, %s387
      %p389 = scmp.eq.s32.totalorder %s43, 0
      %p390 = por %p388, %p389
      %s392 = sadd.s32 %s391, 1
      %p395 = scmp.eq.s32.totalorder %s37, 1
      %p396 = scmp.ne.s32.totalorder %s391, %s393
      %p397 = scmp.eq.s32.totalorder %s37, 0
      %p398 = por %p396, %p397
      %p399 = scmp.ne.s32.totalorder %s391, %s393
      %p400 = scmp.eq.s32.totalorder %s42, 1
      %p401 = por %p399, %p400
      %p402 = scmp.ne.s32.totalorder %s393, %s394
      %p403 = scmp.eq.s32.totalorder %s42, 0
      %p404 = por %p402, %p403
      %p405 = scmp.ne.s32.totalorder %s393, %s394
      %p406 = scmp.eq.s32.totalorder %s43, 1
      %p407 = por %p405, %p406
      %p409 = scmp.ne.s32.totalorder %s394, %s408
      %p410 = scmp.eq.s32.totalorder %s43, 0
      %p411 = por %p409, %p410
      %s413 = sadd.s32 %s412, 1
      %p416 = scmp.eq.s32.totalorder %s37, 1
      %p417 = scmp.ne.s32.totalorder %s412, %s414
      %p418 = scmp.eq.s32.totalorder %s37, 0
      %p419 = por %p417, %p418
      %p420 = scmp.ne.s32.totalorder %s412, %s414
      %p421 = scmp.eq.s32.totalorder %s42, 1
      %p422 = por %p420, %p421
      %p423 = scmp.ne.s32.totalorder %s414, %s415
      %p424 = scmp.eq.s32.totalorder %s42, 0
      %p425 = por %p423, %p424
      %p426 = scmp.ne.s32.totalorder %s414, %s415
      %p427 = scmp.eq.s32.totalorder %s43, 1
      %p428 = por %p426, %p427
      %p430 = scmp.ne.s32.totalorder %s415, %s429
      %p431 = scmp.eq.s32.totalorder %s43, 0
      %p432 = por %p430, %p431
      %s434 = sadd.s32 %s433, 1
      %p437 = scmp.eq.s32.totalorder %s37, 1
      %p438 = scmp.ne.s32.totalorder %s433, %s435
      %p439 = scmp.eq.s32.totalorder %s37, 0
      %p440 = por %p438, %p439
      %p441 = scmp.ne.s32.totalorder %s433, %s435
      %p442 = scmp.eq.s32.totalorder %s42, 1
      %p443 = por %p441, %p442
      %p444 = scmp.ne.s32.totalorder %s435, %s436
      %p445 = scmp.eq.s32.totalorder %s42, 0
      %p446 = por %p444, %p445
      %p447 = scmp.ne.s32.totalorder %s435, %s436
      %p448 = scmp.eq.s32.totalorder %s43, 1
      %p449 = por %p447, %p448
      %p451 = scmp.ne.s32.totalorder %s436, %s450
      %p452 = scmp.eq.s32.totalorder %s43, 0
      %p453 = por %p451, %p452
      %s455 = sadd.s32 %s454, 1
      %p458 = scmp.eq.s32.totalorder %s37, 1
      %p459 = scmp.ne.s32.totalorder %s454, %s456
      %p460 = scmp.eq.s32.totalorder %s37, 0
      %p461 = por %p459, %p460
      %p462 = scmp.ne.s32.totalorder %s454, %s456
      %p463 = scmp.eq.s32.totalorder %s42, 1
      %p464 = por %p462, %p463
      %p465 = scmp.ne.s32.totalorder %s456, %s457
      %p466 = scmp.eq.s32.totalorder %s42, 0
      %p467 = por %p465, %p466
      %p468 = scmp.ne.s32.totalorder %s456, %s457
      %p469 = scmp.eq.s32.totalorder %s43, 1
      %p470 = por %p468, %p469
      %p472 = scmp.ne.s32.totalorder %s457, %s471
      %p473 = scmp.eq.s32.totalorder %s43, 0
      %p474 = por %p472, %p473
      %s476 = sadd.s32 %s475, 1
      %p479 = scmp.eq.s32.totalorder %s37, 1
      %p480 = scmp.ne.s32.totalorder %s475, %s477
      %p481 = scmp.eq.s32.totalorder %s37, 0
      %p482 = por %p480, %p481
      %p483 = scmp.ne.s32.totalorder %s475, %s477
      %p484 = scmp.eq.s32.totalorder %s42, 1
      %p485 = por %p483, %p484
      %p486 = scmp.ne.s32.totalorder %s477, %s478
      %p487 = scmp.eq.s32.totalorder %s42, 0
      %p488 = por %p486, %p487
      %p489 = scmp.ne.s32.totalorder %s477, %s478
      %p490 = scmp.eq.s32.totalorder %s43, 1
      %p491 = por %p489, %p490
      %p493 = scmp.ne.s32.totalorder %s478, %s492
      %p494 = scmp.eq.s32.totalorder %s43, 0
      %p495 = por %p493, %p494
      %s497 = sadd.s32 %s496, 1
      %p500 = scmp.eq.s32.totalorder %s37, 1
      %p501 = scmp.ne.s32.totalorder %s496, %s498
      %p502 = scmp.eq.s32.totalorder %s37, 0
      %p503 = por %p501, %p502
      %p504 = scmp.ne.s32.totalorder %s496, %s498
      %p505 = scmp.eq.s32.totalorder %s42, 1
      %p506 = por %p504, %p505
      %p507 = scmp.ne.s32.totalorder %s498, %s499
      %p508 = scmp.eq.s32.totalorder %s42, 0
      %p509 = por %p507, %p508
      %p510 = scmp.ne.s32.totalorder %s498, %s499
      %p511 = scmp.eq.s32.totalorder %s43, 1
      %p512 = por %p510, %p511
      %p514 = scmp.ne.s32.totalorder %s499, %s513
      %p515 = scmp.eq.s32.totalorder %s43, 0
      %p516 = por %p514, %p515
      %s518 = sadd.s32 %s517, 1
      %p521 = scmp.eq.s32.totalorder %s37, 1
      %p522 = scmp.ne.s32.totalorder %s517, %s519
      %p523 = scmp.eq.s32.totalorder %s37, 0
      %p524 = por %p522, %p523
      %p525 = scmp.ne.s32.totalorder %s517, %s519
      %p526 = scmp.eq.s32.totalorder %s42, 1
      %p527 = por %p525, %p526
      %p528 = scmp.ne.s32.totalorder %s519, %s520
      %p529 = scmp.eq.s32.totalorder %s42, 0
      %p530 = por %p528, %p529
      %p531 = scmp.ne.s32.totalorder %s519, %s520
      %p532 = scmp.eq.s32.totalorder %s43, 1
      %p533 = por %p531, %p532
      %p535 = scmp.ne.s32.totalorder %s520, %s534
      %p536 = scmp.eq.s32.totalorder %s43, 0
      %p537 = por %p535, %p536
      %s539 = sadd.s32 %s538, 1
      %p542 = scmp.eq.s32.totalorder %s37, 1
      %p543 = scmp.ne.s32.totalorder %s538, %s540
      %p544 = scmp.eq.s32.totalorder %s37, 0
      %p545 = por %p543, %p544
      %p546 = scmp.ne.s32.totalorder %s538, %s540
      %p547 = scmp.eq.s32.totalorder %s42, 1
      %p548 = por %p546, %p547
      %p549 = scmp.ne.s32.totalorder %s540, %s541
      %p550 = scmp.eq.s32.totalorder %s42, 0
      %p551 = por %p549, %p550
      %p552 = scmp.ne.s32.totalorder %s540, %s541
      %p553 = scmp.eq.s32.totalorder %s43, 1
      %p554 = por %p552, %p553
      %p556 = scmp.ne.s32.totalorder %s541, %s555
      %p557 = scmp.eq.s32.totalorder %s43, 0
      %p558 = por %p556, %p557
      %s560 = sadd.s32 %s559, 1
      %p563 = scmp.eq.s32.totalorder %s37, 1
      %p564 = scmp.ne.s32.totalorder %s559, %s561
      %p565 = scmp.eq.s32.totalorder %s37, 0
      %p566 = por %p564, %p565
      %p567 = scmp.ne.s32.totalorder %s559, %s561
      %p568 = scmp.eq.s32.totalorder %s42, 1
      %p569 = por %p567, %p568
      %p570 = scmp.ne.s32.totalorder %s561, %s562
      %p571 = scmp.eq.s32.totalorder %s42, 0
      %p572 = por %p570, %p571
      %p573 = scmp.ne.s32.totalorder %s561, %s562
      %p574 = scmp.eq.s32.totalorder %s43, 1
      %p575 = por %p573, %p574
      %p577 = scmp.ne.s32.totalorder %s562, %s576
      %p578 = scmp.eq.s32.totalorder %s43, 0
      %p579 = por %p577, %p578
      %s581 = sadd.s32 %s580, 1
      %p584 = scmp.eq.s32.totalorder %s37, 1
      %p585 = scmp.ne.s32.totalorder %s580, %s582
      %p586 = scmp.eq.s32.totalorder %s37, 0
      %p587 = por %p585, %p586
      %p588 = scmp.ne.s32.totalorder %s580, %s582
      %p589 = scmp.eq.s32.totalorder %s42, 1
      %p590 = por %p588, %p589
      %p591 = scmp.ne.s32.totalorder %s582, %s583
      %p592 = scmp.eq.s32.totalorder %s42, 0
      %p593 = por %p591, %p592
      %p594 = scmp.ne.s32.totalorder %s582, %s583
      %p595 = scmp.eq.s32.totalorder %s43, 1
      %p596 = por %p594, %p595
      %p598 = scmp.ne.s32.totalorder %s583, %s597
      %p599 = scmp.eq.s32.totalorder %s43, 0
      %p600 = por %p598, %p599
      %s602 = sadd.s32 %s601, 1
      %p605 = scmp.eq.s32.totalorder %s37, 1
      %p606 = scmp.ne.s32.totalorder %s601, %s603
      %p607 = scmp.eq.s32.totalorder %s37, 0
      %p608 = por %p606, %p607
      %p609 = scmp.ne.s32.totalorder %s601, %s603
      %p610 = scmp.eq.s32.totalorder %s42, 1
      %p611 = por %p609, %p610
      %p612 = scmp.ne.s32.totalorder %s603, %s604
      %p613 = scmp.eq.s32.totalorder %s42, 0
      %p614 = por %p612, %p613
      %p615 = scmp.ne.s32.totalorder %s603, %s604
      %p616 = scmp.eq.s32.totalorder %s43, 1
      %p617 = por %p615, %p616
      %p619 = scmp.ne.s32.totalorder %s604, %s618
      %p620 = scmp.eq.s32.totalorder %s43, 0
      %p621 = por %p619, %p620
      %s623 = sadd.s32 %s622, 1
      %p626 = scmp.eq.s32.totalorder %s37, 1
      %p627 = scmp.ne.s32.totalorder %s622, %s624
      %p628 = scmp.eq.s32.totalorder %s37, 0
      %p629 = por %p627, %p628
      %p630 = scmp.ne.s32.totalorder %s622, %s624
      %p631 = scmp.eq.s32.totalorder %s42, 1
      %p632 = por %p630, %p631
      %p633 = scmp.ne.s32.totalorder %s624, %s625
      %p634 = scmp.eq.s32.totalorder %s42, 0
      %p635 = por %p633, %p634
      %p636 = scmp.ne.s32.totalorder %s624, %s625
      %p637 = scmp.eq.s32.totalorder %s43, 1
      %p638 = por %p636, %p637
      %p640 = scmp.ne.s32.totalorder %s625, %s639
      %p641 = scmp.eq.s32.totalorder %s43, 0
      %p642 = por %p640, %p641
      %s643 = ssub.s32 %s37, %s44
      %p644 = scmp.eq.s32.totalorder %s643, 0
      %s646 = sadd.s32 %s645, 1
      %s647 = scalar_select %p644, %s645, %s646
      %p650 = pneg %p644
      %p651 = scmp.eq.s32.totalorder %s37, 1
      %p652 = por %p650, %p651
      %p653 = scmp.ne.s32.totalorder %s645, %s648
      %p654 = scmp.eq.s32.totalorder %s37, 0
      %p655 = por %p653, %p654
      %p656 = scmp.ne.s32.totalorder %s645, %s648
      %p657 = scmp.eq.s32.totalorder %s42, 1
      %p658 = por %p656, %p657
      %p659 = scmp.ne.s32.totalorder %s648, %s649
      %p660 = scmp.eq.s32.totalorder %s42, 0
      %p661 = por %p659, %p660
      %p662 = scmp.ne.s32.totalorder %s648, %s649
      %p663 = scmp.eq.s32.totalorder %s43, 1
      %p664 = por %p662, %p663
      %p666 = scmp.ne.s32.totalorder %s649, %s665
      %p667 = scmp.eq.s32.totalorder %s43, 0
      %p668 = por %p666, %p667
      %p669 = scmp.le.s32.totalorder 1, %s37
      %p670 = scmp.lt.s32.totalorder %s37, 3
      %p671 = pnand %p669, %p670
      %p672 = pneg %p671
      // Predicated region
      $region9: #{unet_attention_block.1} parent=5 // pred_check
        _
      $region10: #{unet_attention_block.1} parent=5 // pred_check_branch
        %674 = sbr.rel (%p671) target = $region12
      $region11: #{unet_attention_block.1} parent=5 // pred_region
        %s675 = ssub.s32 %s37, 1
        // Predicated region
        $region13: #{unet_attention_block.1} parent=11 // pred_check
          %p676 = pneg %p110
        $region14: #{unet_attention_block.1} parent=11 // pred_check_branch
          %678 = sbr.rel (%p676) target = $region16
        $region15: #{unet_attention_block.1} parent=11 // pred_region
          _
        $region16: #{unet_attention_block.1} parent=11 // pred_fallthru
          _
        // Predicated region
        $region17: #{unet_attention_block.1} parent=11 // pred_check
          %p679 = pneg %p131
        $region18: #{unet_attention_block.1} parent=11 // pred_check_branch
          %681 = sbr.rel (%p679) target = $region20
        $region19: #{unet_attention_block.1} parent=11 // pred_region
          _
        $region20: #{unet_attention_block.1} parent=11 // pred_fallthru
          _
        // Predicated region
        $region21: #{unet_attention_block.1} parent=11 // pred_check
          %p682 = pneg %p152
        $region22: #{unet_attention_block.1} parent=11 // pred_check_branch
          %684 = sbr.rel (%p682) target = $region24
        $region23: #{unet_attention_block.1} parent=11 // pred_region
          _
        $region24: #{unet_attention_block.1} parent=11 // pred_fallthru
          _
        // Predicated region
        $region25: #{unet_attention_block.1} parent=11 // pred_check
          %p685 = pneg %p173
        $region26: #{unet_attention_block.1} parent=11 // pred_check_branch
          %687 = sbr.rel (%p685) target = $region28
        $region27: #{unet_attention_block.1} parent=11 // pred_region
          _
        $region28: #{unet_attention_block.1} parent=11 // pred_fallthru
          _
        // Predicated region
        $region29: #{unet_attention_block.1} parent=11 // pred_check
          %p688 = pneg %p194
        $region30: #{unet_attention_block.1} parent=11 // pred_check_branch
          %690 = sbr.rel (%p688) target = $region32
        $region31: #{unet_attention_block.1} parent=11 // pred_region
          _
        $region32: #{unet_attention_block.1} parent=11 // pred_fallthru
          _
        // Predicated region
        $region33: #{unet_attention_block.1} parent=11 // pred_check
          %p691 = pneg %p215
        $region34: #{unet_attention_block.1} parent=11 // pred_check_branch
          %693 = sbr.rel (%p691) target = $region36
        $region35: #{unet_attention_block.1} parent=11 // pred_region
          _
        $region36: #{unet_attention_block.1} parent=11 // pred_fallthru
          _
        // Predicated region
        $region37: #{unet_attention_block.1} parent=11 // pred_check
          %p694 = pneg %p236
        $region38: #{unet_attention_block.1} parent=11 // pred_check_branch
          %696 = sbr.rel (%p694) target = $region40
        $region39: #{unet_attention_block.1} parent=11 // pred_region
          _
        $region40: #{unet_attention_block.1} parent=11 // pred_fallthru
          _
        // Predicated region
        $region41: #{unet_attention_block.1} parent=11 // pred_check
          %p697 = pneg %p257
        $region42: #{unet_attention_block.1} parent=11 // pred_check_branch
          %699 = sbr.rel (%p697) target = $region44
        $region43: #{unet_attention_block.1} parent=11 // pred_region
          _
        $region44: #{unet_attention_block.1} parent=11 // pred_fallthru
          _
        // Predicated region
        $region45: #{unet_attention_block.1} parent=11 // pred_check
          %p700 = pneg %p278
        $region46: #{unet_attention_block.1} parent=11 // pred_check_branch
          %702 = sbr.rel (%p700) target = $region48
        $region47: #{unet_attention_block.1} parent=11 // pred_region
          _
        $region48: #{unet_attention_block.1} parent=11 // pred_fallthru
          _
        // Predicated region
        $region49: #{unet_attention_block.1} parent=11 // pred_check
          %p703 = pneg %p299
        $region50: #{unet_attention_block.1} parent=11 // pred_check_branch
          %705 = sbr.rel (%p703) target = $region52
        $region51: #{unet_attention_block.1} parent=11 // pred_region
          _
        $region52: #{unet_attention_block.1} parent=11 // pred_fallthru
          _
        // Predicated region
        $region53: #{unet_attention_block.1} parent=11 // pred_check
          %p706 = pneg %p320
        $region54: #{unet_attention_block.1} parent=11 // pred_check_branch
          %708 = sbr.rel (%p706) target = $region56
        $region55: #{unet_attention_block.1} parent=11 // pred_region
          _
        $region56: #{unet_attention_block.1} parent=11 // pred_fallthru
          _
        // Predicated region
        $region57: #{unet_attention_block.1} parent=11 // pred_check
          %p709 = pneg %p341
        $region58: #{unet_attention_block.1} parent=11 // pred_check_branch
          %711 = sbr.rel (%p709) target = $region60
        $region59: #{unet_attention_block.1} parent=11 // pred_region
          _
        $region60: #{unet_attention_block.1} parent=11 // pred_fallthru
          _
        // Predicated region
        $region61: #{unet_attention_block.1} parent=11 // pred_check
          %p712 = pneg %p362
        $region62: #{unet_attention_block.1} parent=11 // pred_check_branch
          %714 = sbr.rel (%p712) target = $region64
        $region63: #{unet_attention_block.1} parent=11 // pred_region
          _
        $region64: #{unet_attention_block.1} parent=11 // pred_fallthru
          _
        // Predicated region
        $region65: #{unet_attention_block.1} parent=11 // pred_check
          %p715 = pneg %p383
        $region66: #{unet_attention_block.1} parent=11 // pred_check_branch
          %717 = sbr.rel (%p715) target = $region68
        $region67: #{unet_attention_block.1} parent=11 // pred_region
          _
        $region68: #{unet_attention_block.1} parent=11 // pred_fallthru
          _
        // Predicated region
        $region69: #{unet_attention_block.1} parent=11 // pred_check
          %p718 = pneg %p404
        $region70: #{unet_attention_block.1} parent=11 // pred_check_branch
          %720 = sbr.rel (%p718) target = $region72
        $region71: #{unet_attention_block.1} parent=11 // pred_region
          _
        $region72: #{unet_attention_block.1} parent=11 // pred_fallthru
          _
        // Predicated region
        $region73: #{unet_attention_block.1} parent=11 // pred_check
          %p721 = pneg %p425
        $region74: #{unet_attention_block.1} parent=11 // pred_check_branch
          %723 = sbr.rel (%p721) target = $region76
        $region75: #{unet_attention_block.1} parent=11 // pred_region
          _
        $region76: #{unet_attention_block.1} parent=11 // pred_fallthru
          _
        // Predicated region
        $region77: #{unet_attention_block.1} parent=11 // pred_check
          %p724 = pneg %p446
        $region78: #{unet_attention_block.1} parent=11 // pred_check_branch
          %726 = sbr.rel (%p724) target = $region80
        $region79: #{unet_attention_block.1} parent=11 // pred_region
          _
        $region80: #{unet_attention_block.1} parent=11 // pred_fallthru
          _
        // Predicated region
        $region81: #{unet_attention_block.1} parent=11 // pred_check
          %p727 = pneg %p467
        $region82: #{unet_attention_block.1} parent=11 // pred_check_branch
          %729 = sbr.rel (%p727) target = $region84
        $region83: #{unet_attention_block.1} parent=11 // pred_region
          _
        $region84: #{unet_attention_block.1} parent=11 // pred_fallthru
          _
        // Predicated region
        $region85: #{unet_attention_block.1} parent=11 // pred_check
          %p730 = pneg %p488
        $region86: #{unet_attention_block.1} parent=11 // pred_check_branch
          %732 = sbr.rel (%p730) target = $region88
        $region87: #{unet_attention_block.1} parent=11 // pred_region
          _
        $region88: #{unet_attention_block.1} parent=11 // pred_fallthru
          _
        // Predicated region
        $region89: #{unet_attention_block.1} parent=11 // pred_check
          %p733 = pneg %p509
        $region90: #{unet_attention_block.1} parent=11 // pred_check_branch
          %735 = sbr.rel (%p733) target = $region92
        $region91: #{unet_attention_block.1} parent=11 // pred_region
          _
        $region92: #{unet_attention_block.1} parent=11 // pred_fallthru
          _
        // Predicated region
        $region93: #{unet_attention_block.1} parent=11 // pred_check
          %p736 = pneg %p530
        $region94: #{unet_attention_block.1} parent=11 // pred_check_branch
          %738 = sbr.rel (%p736) target = $region96
        $region95: #{unet_attention_block.1} parent=11 // pred_region
          _
        $region96: #{unet_attention_block.1} parent=11 // pred_fallthru
          _
        // Predicated region
        $region97: #{unet_attention_block.1} parent=11 // pred_check
          %p739 = pneg %p551
        $region98: #{unet_attention_block.1} parent=11 // pred_check_branch
          %741 = sbr.rel (%p739) target = $region100
        $region99: #{unet_attention_block.1} parent=11 // pred_region
          _
        $region100: #{unet_attention_block.1} parent=11 // pred_fallthru
          _
        // Predicated region
        $region101: #{unet_attention_block.1} parent=11 // pred_check
          %p742 = pneg %p572
        $region102: #{unet_attention_block.1} parent=11 // pred_check_branch
          %744 = sbr.rel (%p742) target = $region104
        $region103: #{unet_attention_block.1} parent=11 // pred_region
          _
        $region104: #{unet_attention_block.1} parent=11 // pred_fallthru
          _
        // Predicated region
        $region105: #{unet_attention_block.1} parent=11 // pred_check
          %p745 = pneg %p593
        $region106: #{unet_attention_block.1} parent=11 // pred_check_branch
          %747 = sbr.rel (%p745) target = $region108
        $region107: #{unet_attention_block.1} parent=11 // pred_region
          _
        $region108: #{unet_attention_block.1} parent=11 // pred_fallthru
          _
        // Predicated region
        $region109: #{unet_attention_block.1} parent=11 // pred_check
          %p748 = pneg %p614
        $region110: #{unet_attention_block.1} parent=11 // pred_check_branch
          %750 = sbr.rel (%p748) target = $region112
        $region111: #{unet_attention_block.1} parent=11 // pred_region
          _
        $region112: #{unet_attention_block.1} parent=11 // pred_fallthru
          _
        // Predicated region
        $region113: #{unet_attention_block.1} parent=11 // pred_check
          %p751 = pneg %p635
        $region114: #{unet_attention_block.1} parent=11 // pred_check_branch
          %753 = sbr.rel (%p751) target = $region116
        $region115: #{unet_attention_block.1} parent=11 // pred_region
          _
        $region116: #{unet_attention_block.1} parent=11 // pred_fallthru
          _
      $region12: #{unet_attention_block.1} parent=5 // pred_fallthru
        _
      %p754 = scmp.lt.s32.totalorder %s37, 2
      // Predicated region
      $region117: #{unet_attention_block.1} parent=5 // pred_check
        %p755 = pneg %p754
      $region118: #{unet_attention_block.1} parent=5 // pred_check_branch
        %757 = sbr.rel (%p755) target = $region120
      $region119: #{unet_attention_block.1} parent=5 // pred_region
        // Predicated region
        $region121: #{unet_attention_block.1} parent=119 // pred_check
          %p758 = pneg %p57
        $region122: #{unet_attention_block.1} parent=119 // pred_check_branch
          %760 = sbr.rel (%p758) target = $region124
        $region123: #{unet_attention_block.1} parent=119 // pred_region
          %s761 = smul.u32 8, %s37
          %p762 = scmp.lt.s32.totalorder %s761, 15
          %s763 = scalar_select %p762, %s761, 15
          %s764 = smul.addr %s763, 8
          %s765 = scalar_lea.vmem %s0, %s764
          %s766 = smul.u32 8, %s37
        $region124: #{unet_attention_block.1} parent=119 // pred_fallthru
          _
        // Predicated region
        $region125: #{unet_attention_block.1} parent=119 // pred_check
          %p767 = pneg %p83
        $region126: #{unet_attention_block.1} parent=119 // pred_check_branch
          %769 = sbr.rel (%p767) target = $region128
        $region127: #{unet_attention_block.1} parent=119 // pred_region
          %p770 = scmp.lt.s32.totalorder %s37, 1
          %s771 = scalar_select %p770, %s37, 1
          %s772 = smul.addr %s771, 2
          %s773 = smul.addr %s772, 8
          %s774 = scalar_lea.vmem %s1, %s773
        $region128: #{unet_attention_block.1} parent=119 // pred_fallthru
          _
      $region120: #{unet_attention_block.1} parent=5 // pred_fallthru
        _
      %p775 = scmp.le.s32.totalorder 1, %s37
      %p776 = scmp.lt.s32.totalorder %s37, 3
      %p777 = pnand %p775, %p776
      %p778 = pneg %p777
      // Predicated region
      $region129: #{unet_attention_block.1} parent=5 // pred_check
        _
      $region130: #{unet_attention_block.1} parent=5 // pred_check_branch
        %780 = sbr.rel (%p777) target = $region132
      $region131: #{unet_attention_block.1} parent=5 // pred_region
        %s781 = ssub.s32 %s37, 1
        %s782 = smul.u32 8, %s42
        %p783 = scmp.lt.s32.totalorder %s782, 15
        %s784 = scalar_select %p783, %s782, 15
        %s785 = smul.addr %s784, 8
        %s786 = scalar_lea.vmem %s0, %s785
        %p787 = pneg %p63
        %p788 = pneg %p60
        %p789 = scmp.lt.s32.totalorder %s42, 1
        %s790 = scalar_select %p789, %s42, 1
        %s791 = smul.addr %s790, 2
        %s792 = smul.addr %s791, 8
        %s793 = scalar_lea.vmem %s1, %s792
        %p794 = pneg %p89
        %p795 = pneg %p86
        %p796 = pneg %p110
        %p797 = pneg %p107
        %p798 = pneg %p131
        %p799 = pneg %p128
        %p800 = pneg %p152
        %p801 = pneg %p149
        %p802 = pneg %p173
        %p803 = pneg %p170
        %p804 = pneg %p194
        %p805 = pneg %p191
        %p806 = pneg %p215
        %p807 = pneg %p212
        %p808 = pneg %p236
        %p809 = pneg %p233
        %p810 = pneg %p257
        %p811 = pneg %p254
        %p812 = pneg %p278
        %p813 = pneg %p275
        %p814 = pneg %p299
        %p815 = pneg %p296
        %p816 = pneg %p320
        %p817 = pneg %p317
        %p818 = pneg %p341
        %p819 = pneg %p338
        %p820 = pneg %p362
        %p821 = pneg %p359
        %p822 = pneg %p383
        %p823 = pneg %p380
        %p824 = pneg %p404
        %p825 = pneg %p401
        %p826 = pneg %p425
        %p827 = pneg %p422
        %p828 = pneg %p446
        %p829 = pneg %p443
        %p830 = pneg %p467
        %p831 = pneg %p464
        %p832 = pneg %p488
        %p833 = pneg %p485
        %p834 = pneg %p509
        %p835 = pneg %p506
        %p836 = pneg %p530
        %p837 = pneg %p527
        %p838 = pneg %p551
        %p839 = pneg %p548
        %p840 = pneg %p572
        %p841 = pneg %p569
        %p842 = pneg %p593
        %p843 = pneg %p590
        %p844 = pneg %p614
        %p845 = pneg %p611
        %p846 = pneg %p635
        %p847 = pneg %p632
        %p848 = pneg %p661
        %p849 = pneg %p658
        %s850 = sand.u32 %s648, 1
        %s851 = scalar_lea.sflag [#allocation3], %s850
        %s852 = sand.u32 %s648, 1
        %s853 = smul.addr %s852, 64
        %s854 = scalar_lea.vmem [#allocation2], %s853
        %s855 = smul.u32 8, %s42
        %p856 = scmp.lt.s32.totalorder %s855, 15
        %s857 = scalar_select %p856, %s855, 15
        %s858 = smul.addr %s857, 8
        %s859 = scalar_lea.vmem %s0, %s858
        %s860 = smul.u32 8, %s42
        %p861 = scmp.lt.s32.totalorder %s42, 1
        %s862 = scalar_select %p861, %s42, 1
        %s863 = smul.addr %s862, 2
        %s864 = smul.addr %s863, 8
        %s865 = scalar_lea.vmem %s1, %s864
        %s866 = smul.u32 8, %s42
        %v868 = vld [vmem:[%s859] sm:$0xff]
        %v869 = vld [vmem:[%s859 + $0x8] sm:$0xff]
        %v870 = vld [vmem:[%s859 + $0x10] sm:$0xff]
        %v871 = vld [vmem:[%s859 + $0x18] sm:$0xff]
        %v872 = vld [vmem:[%s859 + $0x20] sm:$0xff]
        %v873 = vld [vmem:[%s859 + $0x28] sm:$0xff]
        %v874 = vld [vmem:[%s859 + $0x30] sm:$0xff]
        %v875 = vld [vmem:[%s859 + $0x38] sm:$0xff]
        %v876 = vld [vmem:[%s2] sm:$0xff]
        %v877 = vld [vmem:[%s2 + $0x8] sm:$0xff]
        %v878 = vld [vmem:[%s2 + $0x10] sm:$0xff]
        %v879 = vld [vmem:[%s2 + $0x18] sm:$0xff]
        %v880 = vld [vmem:[%s2 + $0x20] sm:$0xff]
        %v881 = vld [vmem:[%s2 + $0x28] sm:$0xff]
        %v882 = vld [vmem:[%s2 + $0x30] sm:$0xff]
        %v883 = vld [vmem:[%s2 + $0x38] sm:$0xff]
        %vm884 = vcmask 523264
        %v885 = vsel %vm884, %v868, 0.0
        %v886 = vsel %vm884, %v869, 0.0
        %v887 = vadd.f32 %v885, %v886
        %v888 = vsel %vm884, %v870, 0.0
        %v889 = vadd.f32 %v887, %v888
        %v890 = vsel %vm884, %v871, 0.0
        %v891 = vadd.f32 %v889, %v890
        %v892 = vsel %vm884, %v872, 0.0
        %v893 = vadd.f32 %v891, %v892
        %v894 = vsel %vm884, %v873, 0.0
        %v895 = vadd.f32 %v893, %v894
        %v896 = vsel %vm884, %v874, 0.0
        %v897 = vadd.f32 %v895, %v896
        %v898 = vsel %vm884, %v875, 0.0
        %v899 = vadd.f32 %v897, %v898
        %v900 = vrot.slane %v899, 4
        %v901 = vadd.f32 %v899, %v900
        %v902 = vrot.slane %v901, 2
        %v903 = vadd.f32 %v901, %v902
        %v904 = vrot.slane %v903, 1
        %v905 = vadd.f32 %v903, %v904
        %v907 = vsel %vm884, %v905, 0
        %909 = vmatprep.subr.mxu0 0.0
        %910 = vmatpush1.msra.mxu0 %v876
        %911 = vmatprep.subr.mxu0 0.0
        %912 = vmatpush1.msra.mxu0 %v877
        %913 = vmatprep.subr.mxu0 0.0
        %914 = vmatpush1.msra.mxu0 %v878
        %915 = vmatprep.subr.mxu0 0.0
        %916 = vmatpush1.msra.mxu0 %v879
        %917 = vmatprep.subr.mxu0 0.0
        %918 = vmatpush1.msra.mxu0 %v880
        %919 = vmatprep.subr.mxu0 0.0
        %920 = vmatpush1.msra.mxu0 %v881
        %921 = vmatprep.subr.mxu0 0.0
        %922 = vmatpush1.msra.mxu0 %v882
        %923 = vmatprep.subr.mxu0 0.0
        %924 = vmatpush1.msra.mxu0 %v883
        %925 = vmatprep.subr.mxu0 0.0
        %926 = vmatpush1.msra.mxu0 0.0
        %927 = vmatprep.subr.mxu0 0.0
        %928 = vmatpush1.msra.mxu0 0.0
        %929 = vmatprep.subr.mxu0 0.0
        %930 = vmatpush1.msra.mxu0 0.0
        %931 = vmatprep.subr.mxu0 0.0
        %932 = vmatpush1.msra.mxu0 0.0
        %933 = vmatprep.subr.mxu0 0.0
        %934 = vmatpush1.msra.mxu0 0.0
        %935 = vmatprep.subr.mxu0 0.0
        %936 = vmatpush1.msra.mxu0 0.0
        %937 = vmatprep.subr.mxu0 0.0
        %938 = vmatpush1.msra.mxu0 0.0
        %939 = vmatprep.subr.mxu0 0.0
        %940 = vmatpush1.msra.mxu0 0.0
        %941 = vmatprep.subr.mxu0 0.0
        %942 = vmatpush1.msra.mxu0 0.0
        %943 = vmatprep.subr.mxu0 0.0
        %944 = vmatpush1.msra.mxu0 0.0
        %945 = vmatprep.subr.mxu0 0.0
        %946 = vmatpush1.msra.mxu0 0.0
        %947 = vmatprep.subr.mxu0 0.0
        %948 = vmatpush1.msra.mxu0 0.0
        %949 = vmatprep.subr.mxu0 0.0
        %950 = vmatpush1.msra.mxu0 0.0
        %951 = vmatprep.subr.mxu0 0.0
        %952 = vmatpush1.msra.mxu0 0.0
        %953 = vmatprep.subr.mxu0 0.0
        %954 = vmatpush1.msra.mxu0 0.0
        %955 = vmatprep.subr.mxu0 0.0
        %956 = vmatpush1.msra.mxu0 0.0
        %957 = vmatprep.subr.mxu0 0.0
        %958 = vmatpush1.msra.mxu0 0.0
        %959 = vmatprep.subr.mxu0 0.0
        %960 = vmatpush1.msra.mxu0 0.0
        %961 = vmatprep.subr.mxu0 0.0
        %962 = vmatpush1.msra.mxu0 0.0
        %963 = vmatprep.subr.mxu0 0.0
        %964 = vmatpush1.msra.mxu0 0.0
        %965 = vmatprep.subr.mxu0 0.0
        %966 = vmatpush1.msra.mxu0 0.0
        %967 = vmatprep.subr.mxu0 0.0
        %968 = vmatpush1.msra.mxu0 0.0
        %969 = vmatprep.subr.mxu0 0.0
        %970 = vmatpush1.msra.mxu0 0.0
        %971 = vmatprep.subr.mxu0 0.0
        %972 = vmatpush1.msra.mxu0 0.0
        %973 = vmatprep.mubr.f32.mxu0 0.0
        %974 = vmatmul.mubr.f32.gmra.mrb[0].mxu0 %v907
        %v975 = vpop.f32.mrb[0].mxu0
        %v976 = vadd.f32 0.0, %v975
        %v977 = vpop.f32.mrb[0].mxu0
        %978 = vdwg.mxu0
        %v979 = vlaneseq
        %v980 = vshrl.u32 %v979, 7
        %v981 = vsub.s32 0, %v980
        %v982 = vrot.slane %v976, %v981
        %v983 = vsub.f32 %v868, %v982
        %v984 = vsub.f32 %v869, %v982
        %v985 = vsub.f32 %v870, %v982
        %v986 = vsub.f32 %v871, %v982
        %v987 = vsub.f32 %v872, %v982
        %v988 = vsub.f32 %v873, %v982
        %v989 = vsub.f32 %v874, %v982
        %v990 = vsub.f32 %v875, %v982
        %v991 = vmul.f32 %v983, %v983
        %v992 = vmul.f32 %v984, %v984
        %v993 = vmul.f32 %v985, %v985
        %v994 = vmul.f32 %v986, %v986
        %v995 = vmul.f32 %v987, %v987
        %v996 = vmul.f32 %v988, %v988
        %v997 = vmul.f32 %v989, %v989
        %v998 = vmul.f32 %v990, %v990
        %v999 = vsel %vm884, %v991, 0.0
        %v1000 = vsel %vm884, %v992, 0.0
        %v1001 = vadd.f32 %v999, %v1000
        %v1002 = vsel %vm884, %v993, 0.0
        %v1003 = vadd.f32 %v1001, %v1002
        %v1004 = vsel %vm884, %v994, 0.0
        %v1005 = vadd.f32 %v1003, %v1004
        %v1006 = vsel %vm884, %v995, 0.0
        %v1007 = vadd.f32 %v1005, %v1006
        %v1008 = vsel %vm884, %v996, 0.0
        %v1009 = vadd.f32 %v1007, %v1008
        %v1010 = vsel %vm884, %v997, 0.0
        %v1011 = vadd.f32 %v1009, %v1010
        %v1012 = vsel %vm884, %v998, 0.0
        %v1013 = vadd.f32 %v1011, %v1012
        %v1014 = vrot.slane %v1013, 4
        %v1015 = vadd.f32 %v1013, %v1014
        %v1016 = vrot.slane %v1015, 2
        %v1017 = vadd.f32 %v1015, %v1016
        %v1018 = vrot.slane %v1017, 1
        %v1019 = vadd.f32 %v1017, %v1018
        %v1021 = vsel %vm884, %v1019, 0
        %1023 = vmatprep.subr.mxu0 0.0
        %1024 = vmatpush1.msra.mxu0 %v876
        %1025 = vmatprep.subr.mxu0 0.0
        %1026 = vmatpush1.msra.mxu0 %v877
        %1027 = vmatprep.subr.mxu0 0.0
        %1028 = vmatpush1.msra.mxu0 %v878
        %1029 = vmatprep.subr.mxu0 0.0
        %1030 = vmatpush1.msra.mxu0 %v879
        %1031 = vmatprep.subr.mxu0 0.0
        %1032 = vmatpush1.msra.mxu0 %v880
        %1033 = vmatprep.subr.mxu0 0.0
        %1034 = vmatpush1.msra.mxu0 %v881
        %1035 = vmatprep.subr.mxu0 0.0
        %1036 = vmatpush1.msra.mxu0 %v882
        %1037 = vmatprep.subr.mxu0 0.0
        %1038 = vmatpush1.msra.mxu0 %v883
        %1039 = vmatprep.subr.mxu0 0.0
        %1040 = vmatpush1.msra.mxu0 0.0
        %1041 = vmatprep.subr.mxu0 0.0
        %1042 = vmatpush1.msra.mxu0 0.0
        %1043 = vmatprep.subr.mxu0 0.0
        %1044 = vmatpush1.msra.mxu0 0.0
        %1045 = vmatprep.subr.mxu0 0.0
        %1046 = vmatpush1.msra.mxu0 0.0
        %1047 = vmatprep.subr.mxu0 0.0
        %1048 = vmatpush1.msra.mxu0 0.0
        %1049 = vmatprep.subr.mxu0 0.0
        %1050 = vmatpush1.msra.mxu0 0.0
        %1051 = vmatprep.subr.mxu0 0.0
        %1052 = vmatpush1.msra.mxu0 0.0
        %1053 = vmatprep.subr.mxu0 0.0
        %1054 = vmatpush1.msra.mxu0 0.0
        %1055 = vmatprep.subr.mxu0 0.0
        %1056 = vmatpush1.msra.mxu0 0.0
        %1057 = vmatprep.subr.mxu0 0.0
        %1058 = vmatpush1.msra.mxu0 0.0
        %1059 = vmatprep.subr.mxu0 0.0
        %1060 = vmatpush1.msra.mxu0 0.0
        %1061 = vmatprep.subr.mxu0 0.0
        %1062 = vmatpush1.msra.mxu0 0.0
        %1063 = vmatprep.subr.mxu0 0.0
        %1064 = vmatpush1.msra.mxu0 0.0
        %1065 = vmatprep.subr.mxu0 0.0
        %1066 = vmatpush1.msra.mxu0 0.0
        %1067 = vmatprep.subr.mxu0 0.0
        %1068 = vmatpush1.msra.mxu0 0.0
        %1069 = vmatprep.subr.mxu0 0.0
        %1070 = vmatpush1.msra.mxu0 0.0
        %1071 = vmatprep.subr.mxu0 0.0
        %1072 = vmatpush1.msra.mxu0 0.0
        %1073 = vmatprep.subr.mxu0 0.0
        %1074 = vmatpush1.msra.mxu0 0.0
        %1075 = vmatprep.subr.mxu0 0.0
        %1076 = vmatpush1.msra.mxu0 0.0
        %1077 = vmatprep.subr.mxu0 0.0
        %1078 = vmatpush1.msra.mxu0 0.0
        %1079 = vmatprep.subr.mxu0 0.0
        %1080 = vmatpush1.msra.mxu0 0.0
        %1081 = vmatprep.subr.mxu0 0.0
        %1082 = vmatpush1.msra.mxu0 0.0
        %1083 = vmatprep.subr.mxu0 0.0
        %1084 = vmatpush1.msra.mxu0 0.0
        %1085 = vmatprep.subr.mxu0 0.0
        %1086 = vmatpush1.msra.mxu0 0.0
        %1087 = vmatprep.mubr.f32.mxu0 0.0
        %1088 = vmatmul.mubr.f32.gmra.mrb[0].mxu0 %v1021
        %v1089 = vpop.f32.mrb[0].mxu0
        %v1090 = vadd.f32 1e-06, %v1089
        %v1091 = vpop.f32.mrb[0].mxu0
        %1092 = vdwg.mxu0
        %v1093 = vrsqrt.pop %v1090
        %v1094 = vlaneseq
        %v1095 = vshrl.u32 %v1094, 7
        %v1096 = vsub.s32 0, %v1095
        %v1097 = vrot.slane %v1093, %v1096
        %v1098 = vmul.f32 %v983, %v1097
        %v1099 = vmul.f32 %v984, %v1097
        %v1100 = vmul.f32 %v985, %v1097
        %v1101 = vmul.f32 %v986, %v1097
        %v1102 = vmul.f32 %v987, %v1097
        %v1103 = vmul.f32 %v988, %v1097
        %v1104 = vmul.f32 %v989, %v1097
        %v1105 = vmul.f32 %v990, %v1097
        %v1106 = vld [vmem:[%s3] sm:$0x1]
        %v1108 = vlaneseq
        %v1109 = vshrl.u32 %v1108, 7
        %v1110 = vsub.s32 0, %v1109
        %v1111 = vrot.slane %v1106, %v1110
        %v1113 = vmul.f32 %v1098, %v1111
        %v1114 = vmul.f32 %v1099, %v1111
        %v1115 = vmul.f32 %v1100, %v1111
        %v1116 = vmul.f32 %v1101, %v1111
        %v1117 = vmul.f32 %v1102, %v1111
        %v1118 = vmul.f32 %v1103, %v1111
        %v1119 = vmul.f32 %v1104, %v1111
        %v1120 = vmul.f32 %v1105, %v1111
        %v1121 = vld [vmem:[%s4] sm:$0x1]
        %v1123 = vlaneseq
        %v1124 = vshrl.u32 %v1123, 7
        %v1125 = vsub.s32 0, %v1124
        %v1126 = vrot.slane %v1121, %v1125
        %v1128 = vadd.f32 %v1113, %v1126
        %v1129 = vadd.f32 %v1114, %v1126
        %v1130 = vadd.f32 %v1115, %v1126
        %v1131 = vadd.f32 %v1116, %v1126
        %v1132 = vadd.f32 %v1117, %v1126
        %v1133 = vadd.f32 %v1118, %v1126
        %v1134 = vadd.f32 %v1119, %v1126
        %v1135 = vadd.f32 %v1120, %v1126
        %v1136 = vlaneseq
        %v1137 = vshrl.u32 %v1136, 7
        %v1138 = vadd.s32 %v1137, 8
        %v1139 = vadd.s32 %v1137, 16
        %v1140 = vadd.s32 %v1137, 24
        %v1141 = vadd.s32 %v1137, 32
        %v1142 = vadd.s32 %v1137, 40
        %v1143 = vadd.s32 %v1137, 48
        %v1144 = vadd.s32 %v1137, 56
        %vm1145 = vcmp.lt.s32.totalorder %v1137, 0
        %v1146 = vsub.s32 0, %v1137
        %v1147 = vsel %vm1145, %v1146, %v1137
        %v1148 = vshrl.u32 %v1147, 3
        %v1149 = vand.u32 %v1147, 7
        %v1150 = vsub.s32 0, %v1149
        %v1151 = vsel %vm1145, %v1150, %v1149
        %vm1152 = vcmp.lt.s32.totalorder %v1138, 0
        %v1153 = vsub.s32 0, %v1138
        %v1154 = vsel %vm1152, %v1153, %v1138
        %v1155 = vshrl.u32 %v1154, 3
        %v1156 = vand.u32 %v1154, 7
        %v1157 = vsub.s32 0, %v1156
        %v1158 = vsel %vm1152, %v1157, %v1156
        %vm1159 = vcmp.lt.s32.totalorder %v1139, 0
        %v1160 = vsub.s32 0, %v1139
        %v1161 = vsel %vm1159, %v1160, %v1139
        %v1162 = vshrl.u32 %v1161, 3
        %v1163 = vand.u32 %v1161, 7
        %v1164 = vsub.s32 0, %v1163
        %v1165 = vsel %vm1159, %v1164, %v1163
        %vm1166 = vcmp.lt.s32.totalorder %v1140, 0
        %v1167 = vsub.s32 0, %v1140
        %v1168 = vsel %vm1166, %v1167, %v1140
        %v1169 = vshrl.u32 %v1168, 3
        %v1170 = vand.u32 %v1168, 7
        %v1171 = vsub.s32 0, %v1170
        %v1172 = vsel %vm1166, %v1171, %v1170
        %vm1173 = vcmp.lt.s32.totalorder %v1141, 0
        %v1174 = vsub.s32 0, %v1141
        %v1175 = vsel %vm1173, %v1174, %v1141
        %v1176 = vshrl.u32 %v1175, 3
        %v1177 = vand.u32 %v1175, 7
        %v1178 = vsub.s32 0, %v1177
        %v1179 = vsel %vm1173, %v1178, %v1177
        %vm1180 = vcmp.lt.s32.totalorder %v1142, 0
        %v1181 = vsub.s32 0, %v1142
        %v1182 = vsel %vm1180, %v1181, %v1142
        %v1183 = vshrl.u32 %v1182, 3
        %v1184 = vand.u32 %v1182, 7
        %v1185 = vsub.s32 0, %v1184
        %v1186 = vsel %vm1180, %v1185, %v1184
        %vm1187 = vcmp.lt.s32.totalorder %v1143, 0
        %v1188 = vsub.s32 0, %v1143
        %v1189 = vsel %vm1187, %v1188, %v1143
        %v1190 = vshrl.u32 %v1189, 3
        %v1191 = vand.u32 %v1189, 7
        %v1192 = vsub.s32 0, %v1191
        %v1193 = vsel %vm1187, %v1192, %v1191
        %vm1194 = vcmp.lt.s32.totalorder %v1144, 0
        %v1195 = vsub.s32 0, %v1144
        %v1196 = vsel %vm1194, %v1195, %v1144
        %v1197 = vshrl.u32 %v1196, 3
        %v1198 = vand.u32 %v1196, 7
        %v1199 = vsub.s32 0, %v1198
        %v1200 = vsel %vm1194, %v1199, %v1198
        %vm1201 = vcmp.ne.s32.totalorder %v1151, 0
        %vm1202 = vcmp.ne.s32.totalorder %v1158, 0
        %vm1203 = vcmp.ne.s32.totalorder %v1165, 0
        %vm1204 = vcmp.ne.s32.totalorder %v1172, 0
        %vm1205 = vcmp.ne.s32.totalorder %v1179, 0
        %vm1206 = vcmp.ne.s32.totalorder %v1186, 0
        %vm1207 = vcmp.ne.s32.totalorder %v1193, 0
        %vm1208 = vcmp.ne.s32.totalorder %v1200, 0
        %vm1209 = vcmp.lt.s32.totalorder %v1151, 0
        %vm1210 = vcmp.lt.s32.totalorder %v1158, 0
        %vm1211 = vcmp.lt.s32.totalorder %v1165, 0
        %vm1212 = vcmp.lt.s32.totalorder %v1172, 0
        %vm1213 = vcmp.lt.s32.totalorder %v1179, 0
        %vm1214 = vcmp.lt.s32.totalorder %v1186, 0
        %vm1215 = vcmp.lt.s32.totalorder %v1193, 0
        %vm1216 = vcmp.lt.s32.totalorder %v1200, 0
        %vm1217 = vmand %vm1209, %vm1201
        %vm1218 = vmand %vm1210, %vm1202
        %vm1219 = vmand %vm1211, %vm1203
        %vm1220 = vmand %vm1212, %vm1204
        %vm1221 = vmand %vm1213, %vm1205
        %vm1222 = vmand %vm1214, %vm1206
        %vm1223 = vmand %vm1215, %vm1207
        %vm1224 = vmand %vm1216, %vm1208
        %v1225 = vadd.s32 %v1151, 8
        %v1226 = vadd.s32 %v1158, 8
        %v1227 = vadd.s32 %v1165, 8
        %v1228 = vadd.s32 %v1172, 8
        %v1229 = vadd.s32 %v1179, 8
        %v1230 = vadd.s32 %v1186, 8
        %v1231 = vadd.s32 %v1193, 8
        %v1232 = vadd.s32 %v1200, 8
        %v1233 = vsel %vm1217, %v1225, %v1151
        %v1234 = vsel %vm1218, %v1226, %v1158
        %v1235 = vsel %vm1219, %v1227, %v1165
        %v1236 = vsel %vm1220, %v1228, %v1172
        %v1237 = vsel %vm1221, %v1229, %v1179
        %v1238 = vsel %vm1222, %v1230, %v1186
        %v1239 = vsel %vm1223, %v1231, %v1193
        %v1240 = vsel %vm1224, %v1232, %v1200
        %vm1241 = vcmp.gt.s32.totalorder %v1233, 0
        %vm1242 = vcmp.gt.s32.totalorder %v1234, 0
        %vm1243 = vcmp.gt.s32.totalorder %v1235, 0
        %vm1244 = vcmp.gt.s32.totalorder %v1236, 0
        %vm1245 = vcmp.gt.s32.totalorder %v1237, 0
        %vm1246 = vcmp.gt.s32.totalorder %v1238, 0
        %vm1247 = vcmp.gt.s32.totalorder %v1239, 0
        %vm1248 = vcmp.gt.s32.totalorder %v1240, 0
        %v1249 = vrot.slane %v1128, 7
        %v1250 = vrot.slane %v1129, 7
        %v1251 = vrot.slane %v1130, 7
        %v1252 = vrot.slane %v1131, 7
        %v1253 = vrot.slane %v1132, 7
        %v1254 = vrot.slane %v1133, 7
        %v1255 = vrot.slane %v1134, 7
        %v1256 = vrot.slane %v1135, 7
        %vm1257 = vcmp.lt.s32.totalorder %v1137, 1
        %v1258 = vsel %vm1257, %v1255, %v1256
        %v1259 = vsel %vm1257, %v1254, %v1255
        %v1260 = vsel %vm1257, %v1253, %v1254
        %v1261 = vsel %vm1257, %v1252, %v1253
        %v1262 = vsel %vm1257, %v1251, %v1252
        %v1263 = vsel %vm1257, %v1250, %v1251
        %v1264 = vsel %vm1257, %v1249, %v1250
        %v1265 = vsel %vm1257, %v1256, %v1249
        %v1266 = vsel %vm1241, 1, 0
        %v1267 = vsel %vm1242, 1, 0
        %v1268 = vsel %vm1243, 1, 0
        %v1269 = vsel %vm1244, 1, 0
        %v1270 = vsel %vm1245, 1, 0
        %v1271 = vsel %vm1246, 1, 0
        %v1272 = vsel %vm1247, 1, 0
        %v1273 = vsel %vm1248, 1, 0
        %vm1274 = vcmp.eq.s32.totalorder %v1266, 1
        %vm1275 = vcmp.eq.s32.totalorder %v1267, 1
        %vm1276 = vcmp.eq.s32.totalorder %v1268, 1
        %vm1277 = vcmp.eq.s32.totalorder %v1269, 1
        %vm1278 = vcmp.eq.s32.totalorder %v1270, 1
        %vm1279 = vcmp.eq.s32.totalorder %v1271, 1
        %vm1280 = vcmp.eq.s32.totalorder %v1272, 1
        %vm1281 = vcmp.eq.s32.totalorder %v1273, 1
        %v1282 = vsel %vm1274, %v1265, 0.0
        %v1283 = vsel %vm1275, %v1264, 0.0
        %v1284 = vsel %vm1276, %v1263, 0.0
        %v1285 = vsel %vm1277, %v1262, 0.0
        %v1286 = vsel %vm1278, %v1261, 0.0
        %v1287 = vsel %vm1279, %v1260, 0.0
        %v1288 = vsel %vm1280, %v1259, 0.0
        %v1289 = vsel %vm1281, %v1258, 0.0
        %vm1290 = vcmp.lt.s32.totalorder %v1233, 7
        %vm1291 = vcmp.lt.s32.totalorder %v1234, 7
        %vm1292 = vcmp.lt.s32.totalorder %v1235, 7
        %vm1293 = vcmp.lt.s32.totalorder %v1236, 7
        %vm1294 = vcmp.lt.s32.totalorder %v1237, 7
        %vm1295 = vcmp.lt.s32.totalorder %v1238, 7
        %vm1296 = vcmp.lt.s32.totalorder %v1239, 7
        %vm1297 = vcmp.lt.s32.totalorder %v1240, 7
        %v1298 = vrot.slane %v1128, 1
        %v1299 = vrot.slane %v1129, 1
        %v1300 = vrot.slane %v1130, 1
        %v1301 = vrot.slane %v1131, 1
        %v1302 = vrot.slane %v1132, 1
        %v1303 = vrot.slane %v1133, 1
        %v1304 = vrot.slane %v1134, 1
        %v1305 = vrot.slane %v1135, 1
        %vm1306 = vcmp.lt.s32.totalorder %v1137, 7
        %v1307 = vsel %vm1306, %v1304, %v1305
        %v1308 = vsel %vm1306, %v1303, %v1304
        %v1309 = vsel %vm1306, %v1302, %v1303
        %v1310 = vsel %vm1306, %v1301, %v1302
        %v1311 = vsel %vm1306, %v1300, %v1301
        %v1312 = vsel %vm1306, %v1299, %v1300
        %v1313 = vsel %vm1306, %v1298, %v1299
        %v1314 = vsel %vm1306, %v1305, %v1298
        %v1315 = vsel %vm1290, 1, 0
        %v1316 = vsel %vm1291, 1, 0
        %v1317 = vsel %vm1292, 1, 0
        %v1318 = vsel %vm1293, 1, 0
        %v1319 = vsel %vm1294, 1, 0
        %v1320 = vsel %vm1295, 1, 0
        %v1321 = vsel %vm1296, 1, 0
        %v1322 = vsel %vm1297, 1, 0
        %vm1323 = vcmp.eq.s32.totalorder %v1315, 1
        %vm1324 = vcmp.eq.s32.totalorder %v1316, 1
        %vm1325 = vcmp.eq.s32.totalorder %v1317, 1
        %vm1326 = vcmp.eq.s32.totalorder %v1318, 1
        %vm1327 = vcmp.eq.s32.totalorder %v1319, 1
        %vm1328 = vcmp.eq.s32.totalorder %v1320, 1
        %vm1329 = vcmp.eq.s32.totalorder %v1321, 1
        %vm1330 = vcmp.eq.s32.totalorder %v1322, 1
        %v1331 = vsel %vm1323, %v1313, 0.0
        %v1332 = vsel %vm1324, %v1312, 0.0
        %v1333 = vsel %vm1325, %v1311, 0.0
        %v1334 = vsel %vm1326, %v1310, 0.0
        %v1335 = vsel %vm1327, %v1309, 0.0
        %v1336 = vsel %vm1328, %v1308, 0.0
        %v1337 = vsel %vm1329, %v1307, 0.0
        %v1338 = vsel %vm1330, %v1314, 0.0
        %1347 = vrot.lane.b32.xlu0 %v1128, 64
        %v1348 = vpop.permute.xlu0 %1347
        %1349 = vrot.lane.b32.xlu0 %v1129, 64
        %v1350 = vpop.permute.xlu0 %1349
        %1351 = vrot.lane.b32.xlu0 %v1130, 64
        %v1352 = vpop.permute.xlu0 %1351
        %1353 = vrot.lane.b32.xlu0 %v1131, 64
        %v1354 = vpop.permute.xlu0 %1353
        %1355 = vrot.lane.b32.xlu0 %v1132, 64
        %v1356 = vpop.permute.xlu0 %1355
        %1357 = vrot.lane.b32.xlu0 %v1133, 64
        %v1358 = vpop.permute.xlu0 %1357
        %1359 = vrot.lane.b32.xlu0 %v1134, 64
        %v1360 = vpop.permute.xlu0 %1359
        %1361 = vrot.lane.b32.xlu0 %v1135, 64
        %v1362 = vpop.permute.xlu0 %1361
        %v1371 = vsel %vm884, %v1282, %v1348
        %v1372 = vsel %vm884, %v1283, %v1350
        %v1373 = vsel %vm884, %v1284, %v1352
        %v1374 = vsel %vm884, %v1285, %v1354
        %v1375 = vsel %vm884, %v1286, %v1356
        %v1376 = vsel %vm884, %v1287, %v1358
        %v1377 = vsel %vm884, %v1288, %v1360
        %v1378 = vsel %vm884, %v1289, %v1362
        %vm1379 = vcmp.ge.s32.totalorder %v1137, 8
        %vm1380 = vcmp.ge.s32.totalorder %v1138, 8
        %vm1381 = vcmp.ge.s32.totalorder %v1139, 8
        %vm1382 = vcmp.ge.s32.totalorder %v1140, 8
        %vm1383 = vcmp.ge.s32.totalorder %v1141, 8
        %vm1384 = vcmp.ge.s32.totalorder %v1142, 8
        %vm1385 = vcmp.ge.s32.totalorder %v1143, 8
        %vm1386 = vcmp.ge.s32.totalorder %v1144, 8
        %v1387 = vsel %vm1379, 1, 0
        %v1388 = vsel %vm1380, 1, 0
        %v1389 = vsel %vm1381, 1, 0
        %v1390 = vsel %vm1382, 1, 0
        %v1391 = vsel %vm1383, 1, 0
        %v1392 = vsel %vm1384, 1, 0
        %v1393 = vsel %vm1385, 1, 0
        %v1394 = vsel %vm1386, 1, 0
        %vm1395 = vcmp.eq.s32.totalorder %v1387, 1
        %vm1396 = vcmp.eq.s32.totalorder %v1388, 1
        %vm1397 = vcmp.eq.s32.totalorder %v1389, 1
        %vm1398 = vcmp.eq.s32.totalorder %v1390, 1
        %vm1399 = vcmp.eq.s32.totalorder %v1391, 1
        %vm1400 = vcmp.eq.s32.totalorder %v1392, 1
        %vm1401 = vcmp.eq.s32.totalorder %v1393, 1
        %vm1402 = vcmp.eq.s32.totalorder %v1394, 1
        %v1403 = vsel %vm1395, %v1378, 0.0
        %v1404 = vsel %vm1395, %v1338, 0.0
        %v1405 = vsel %vm1396, %v1371, 0.0
        %v1406 = vsel %vm1396, %v1331, 0.0
        %v1407 = vsel %vm1397, %v1372, 0.0
        %v1408 = vsel %vm1397, %v1332, 0.0
        %v1409 = vsel %vm1398, %v1373, 0.0
        %v1410 = vsel %vm1398, %v1333, 0.0
        %v1411 = vsel %vm1399, %v1374, 0.0
        %v1412 = vsel %vm1399, %v1334, 0.0
        %v1413 = vsel %vm1400, %v1375, 0.0
        %v1414 = vsel %vm1400, %v1335, 0.0
        %v1415 = vsel %vm1401, %v1376, 0.0
        %v1416 = vsel %vm1401, %v1336, 0.0
        %v1417 = vsel %vm1402, %v1377, 0.0
        %v1418 = vsel %vm1402, %v1337, 0.0
        %v1419 = vpack.c.bf16 %v1405, %v1403
        %v1420 = vpack.c.bf16 %v1406, %v1404
        %v1421 = vpack.c.bf16 %v1409, %v1407
        %v1422 = vpack.c.bf16 %v1410, %v1408
        %v1423 = vpack.c.bf16 %v1413, %v1411
        %v1424 = vpack.c.bf16 %v1414, %v1412
        %v1425 = vpack.c.bf16 %v1417, %v1415
        %v1426 = vpack.c.bf16 %v1418, %v1416
        %v1427 = vld [vmem:[%s5] sm:$0xf]
        %v1428 = vld [vmem:[%s5 + $0x4] sm:$0xf]
        %v1429 = vld [vmem:[%s5 + $0x8] sm:$0xf]
        %v1430 = vld [vmem:[%s5 + $0xc] sm:$0xf]
        %v1431 = vld [vmem:[%s5 + $0x10] sm:$0xf]
        %v1432 = vld [vmem:[%s5 + $0x14] sm:$0xf]
        %v1433 = vld [vmem:[%s5 + $0x18] sm:$0xf]
        %v1434 = vld [vmem:[%s5 + $0x1c] sm:$0xf]
        %v1435 = vld [vmem:[%s5 + $0x20] sm:$0xf]
        %v1436 = vld [vmem:[%s5 + $0x24] sm:$0xf]
        %v1437 = vld [vmem:[%s5 + $0x28] sm:$0xf]
        %v1438 = vld [vmem:[%s5 + $0x2c] sm:$0xf]
        %v1439 = vld [vmem:[%s5 + $0x30] sm:$0xf]
        %v1440 = vld [vmem:[%s5 + $0x34] sm:$0xf]
        %v1441 = vld [vmem:[%s5 + $0x38] sm:$0xf]
        %v1442 = vld [vmem:[%s5 + $0x3c] sm:$0xf]
        %v1443 = vld [vmem:[%s5 + $0x40] sm:$0xf]
        %v1444 = vld [vmem:[%s5 + $0x44] sm:$0xf]
        %v1445 = vld [vmem:[%s5 + $0x48] sm:$0xf]
        %v1446 = vld [vmem:[%s5 + $0x4c] sm:$0xf]
        %v1447 = vld [vmem:[%s5 + $0x50] sm:$0xf]
        %v1448 = vld [vmem:[%s5 + $0x54] sm:$0xf]
        %v1449 = vld [vmem:[%s5 + $0x58] sm:$0xf]
        %v1450 = vld [vmem:[%s5 + $0x5c] sm:$0xf]
        %v1451 = vpack.c.bf16 %v1372, %v1371
        %v1452 = vpack.c.bf16 %v1332, %v1331
        %v1453 = vpack.c.bf16 %v1374, %v1373
        %v1454 = vpack.c.bf16 %v1334, %v1333
        %v1455 = vpack.c.bf16 %v1376, %v1375
        %v1456 = vpack.c.bf16 %v1336, %v1335
        %v1457 = vpack.c.bf16 %v1378, %v1377
        %v1458 = vpack.c.bf16 %v1338, %v1337
        %s1459 = scalar_lea.vmem %s5, 96
        %v1460 = vld [vmem:[%s1459] sm:$0xf]
        %v1461 = vld [vmem:[%s1459 + $0x4] sm:$0xf]
        %v1462 = vld [vmem:[%s1459 + $0x8] sm:$0xf]
        %v1463 = vld [vmem:[%s1459 + $0xc] sm:$0xf]
        %v1464 = vld [vmem:[%s1459 + $0x10] sm:$0xf]
        %v1465 = vld [vmem:[%s1459 + $0x14] sm:$0xf]
        %v1466 = vld [vmem:[%s1459 + $0x18] sm:$0xf]
        %v1467 = vld [vmem:[%s1459 + $0x1c] sm:$0xf]
        %v1468 = vld [vmem:[%s1459 + $0x20] sm:$0xf]
        %v1469 = vld [vmem:[%s1459 + $0x24] sm:$0xf]
        %v1470 = vld [vmem:[%s1459 + $0x28] sm:$0xf]
        %v1471 = vld [vmem:[%s1459 + $0x2c] sm:$0xf]
        %v1472 = vld [vmem:[%s1459 + $0x30] sm:$0xf]
        %v1473 = vld [vmem:[%s1459 + $0x34] sm:$0xf]
        %v1474 = vld [vmem:[%s1459 + $0x38] sm:$0xf]
        %v1475 = vld [vmem:[%s1459 + $0x3c] sm:$0xf]
        %v1476 = vld [vmem:[%s1459 + $0x40] sm:$0xf]
        %v1477 = vld [vmem:[%s1459 + $0x44] sm:$0xf]
        %v1478 = vld [vmem:[%s1459 + $0x48] sm:$0xf]
        %v1479 = vld [vmem:[%s1459 + $0x4c] sm:$0xf]
        %v1480 = vld [vmem:[%s1459 + $0x50] sm:$0xf]
        %v1481 = vld [vmem:[%s1459 + $0x54] sm:$0xf]
        %v1482 = vld [vmem:[%s1459 + $0x58] sm:$0xf]
        %v1483 = vld [vmem:[%s1459 + $0x5c] sm:$0xf]
        %v1508 = vunpack.c.l.b16 %v1460
        %v1509 = vunpack.c.l.b16 %v1461
        %v1510 = vunpack.c.l.b16 %v1462
        %v1511 = vunpack.c.l.b16 %v1463
        %v1512 = vunpack.c.l.b16 %v1464
        %v1513 = vunpack.c.l.b16 %v1465
        %v1514 = vunpack.c.l.b16 %v1466
        %v1515 = vunpack.c.l.b16 %v1467
        %v1516 = vunpack.c.l.b16 %v1468
        %v1517 = vunpack.c.l.b16 %v1469
        %v1518 = vunpack.c.l.b16 %v1470
        %v1519 = vunpack.c.l.b16 %v1471
        %v1520 = vunpack.c.l.b16 %v1472
        %v1521 = vunpack.c.l.b16 %v1473
        %v1522 = vunpack.c.l.b16 %v1474
        %v1523 = vunpack.c.l.b16 %v1475
        %v1524 = vunpack.c.l.b16 %v1476
        %v1525 = vunpack.c.l.b16 %v1477
        %v1526 = vunpack.c.l.b16 %v1478
        %v1527 = vunpack.c.l.b16 %v1479
        %v1528 = vunpack.c.l.b16 %v1480
        %v1529 = vunpack.c.l.b16 %v1481
        %v1530 = vunpack.c.l.b16 %v1482
        %v1531 = vunpack.c.l.b16 %v1483
        %v1532 = vpack.c.b16 %v1509, %v1508
        %v1533 = vpack.c.b16 %v1511, %v1510
        %v1534 = vpack.c.b16 %v1513, %v1512
        %v1535 = vpack.c.b16 %v1515, %v1514
        %v1536 = vpack.c.b16 %v1517, %v1516
        %v1537 = vpack.c.b16 %v1519, %v1518
        %v1538 = vpack.c.b16 %v1521, %v1520
        %v1539 = vpack.c.b16 %v1523, %v1522
        %v1540 = vpack.c.b16 %v1525, %v1524
        %v1541 = vpack.c.b16 %v1527, %v1526
        %v1542 = vpack.c.b16 %v1529, %v1528
        %v1543 = vpack.c.b16 %v1531, %v1530
        %v1557 = vsel %vm884, %v1452, 0
        %v1560 = vsel %vm884, %v1454, 0
        %v1563 = vsel %vm884, %v1456, 0
        %v1566 = vsel %vm884, %v1458, 0
        %1568 = vmatprep.subr.bf16.mxu0 0
        %1569 = vmatpush1.bf16.msra.mxu0 %v1532
        %1570 = vmatprep.subr.bf16.mxu0 0
        %1571 = vmatpush1.bf16.msra.mxu0 %v1533
        %1572 = vmatprep.subr.bf16.mxu0 0
        %1573 = vmatpush1.bf16.msra.mxu0 %v1534
        %1574 = vmatprep.subr.bf16.mxu0 0
        %1575 = vmatpush1.bf16.msra.mxu0 %v1535
        %1576 = vmatprep.subr.bf16.mxu0 0
        %1577 = vmatpush1.bf16.msra.mxu0 %v1536
        %1578 = vmatprep.subr.bf16.mxu0 0
        %1579 = vmatpush1.bf16.msra.mxu0 %v1537
        %1580 = vmatprep.subr.bf16.mxu0 0
        %1581 = vmatpush1.bf16.msra.mxu0 %v1538
        %1582 = vmatprep.subr.bf16.mxu0 0
        %1583 = vmatpush1.bf16.msra.mxu0 %v1539
        %1584 = vmatprep.subr.bf16.mxu0 0
        %1585 = vmatpush1.bf16.msra.mxu0 %v1540
        %1586 = vmatprep.subr.bf16.mxu0 0
        %1587 = vmatpush1.bf16.msra.mxu0 %v1541
        %1588 = vmatprep.subr.bf16.mxu0 0
        %1589 = vmatpush1.bf16.msra.mxu0 %v1542
        %1590 = vmatprep.subr.bf16.mxu0 0
        %1591 = vmatpush1.bf16.msra.mxu0 %v1543
        %1592 = vmatprep.subr.bf16.mxu0 0
        %1593 = vmatpush1.bf16.msra.mxu0 0
        %1594 = vmatprep.subr.bf16.mxu0 0
        %1595 = vmatpush1.bf16.msra.mxu0 0
        %1596 = vmatprep.subr.bf16.mxu0 0
        %1597 = vmatpush1.bf16.msra.mxu0 0
        %1598 = vmatprep.subr.bf16.mxu0 0
        %1599 = vmatpush1.bf16.msra.mxu0 0
        %1600 = vmatprep.mubr.bf16.mxu0 %v1557
        %1601 = vmatmul.mubr.bf16.gmra.mrb[0].mxu0 %v1451
        %v1602 = vpop.f32.mrb[0].mxu0
        %v1603 = vadd.f32 0.0, %v1602
        %v1604 = vpop.f32.mrb[0].mxu0
        %v1605 = vpop.f32.mrb[0].mxu0
        %v1606 = vadd.f32 0.0, %v1605
        %v1607 = vpop.f32.mrb[0].mxu0
        %1608 = vmatprep.mubr.bf16.mxu0 %v1560
        %1609 = vmatmul.mubr.bf16.gmra.mrb[0].mxu0 %v1453
        %v1610 = vpop.f32.mrb[0].mxu0
        %v1611 = vadd.f32 0.0, %v1610
        %v1612 = vpop.f32.mrb[0].mxu0
        %v1613 = vpop.f32.mrb[0].mxu0
        %v1614 = vadd.f32 0.0, %v1613
        %v1615 = vpop.f32.mrb[0].mxu0
        %1616 = vmatprep.mubr.bf16.mxu0 %v1563
        %1617 = vmatmul.mubr.bf16.gmra.mrb[0].mxu0 %v1455
        %v1618 = vpop.f32.mrb[0].mxu0
        %v1619 = vadd.f32 0.0, %v1618
        %v1620 = vpop.f32.mrb[0].mxu0
        %v1621 = vpop.f32.mrb[0].mxu0
        %v1622 = vadd.f32 0.0, %v1621
        %v1623 = vpop.f32.mrb[0].mxu0
        %1624 = vmatprep.mubr.bf16.mxu0 %v1566
        %1625 = vmatmul.mubr.bf16.gmra.mrb[0].mxu0 %v1457
        %v1626 = vpop.f32.mrb[0].mxu0
        %v1627 = vadd.f32 0.0, %v1626
        %v1628 = vpop.f32.mrb[0].mxu0
        %v1629 = vpop.f32.mrb[0].mxu0
        %v1630 = vadd.f32 0.0, %v1629
        %v1631 = vpop.f32.mrb[0].mxu0
        %1632 = vdwg.mxu0
        %v1657 = vunpack.c.l.b16 %v1427
        %v1658 = vunpack.c.l.b16 %v1428
        %v1659 = vunpack.c.l.b16 %v1429
        %v1660 = vunpack.c.l.b16 %v1430
        %v1661 = vunpack.c.l.b16 %v1431
        %v1662 = vunpack.c.l.b16 %v1432
        %v1663 = vunpack.c.l.b16 %v1433
        %v1664 = vunpack.c.l.b16 %v1434
        %v1665 = vunpack.c.l.b16 %v1435
        %v1666 = vunpack.c.l.b16 %v1436
        %v1667 = vunpack.c.l.b16 %v1437
        %v1668 = vunpack.c.l.b16 %v1438
        %v1669 = vunpack.c.l.b16 %v1439
        %v1670 = vunpack.c.l.b16 %v1440
        %v1671 = vunpack.c.l.b16 %v1441
        %v1672 = vunpack.c.l.b16 %v1442
        %v1673 = vunpack.c.l.b16 %v1443
        %v1674 = vunpack.c.l.b16 %v1444
        %v1675 = vunpack.c.l.b16 %v1445
        %v1676 = vunpack.c.l.b16 %v1446
        %v1677 = vunpack.c.l.b16 %v1447
        %v1678 = vunpack.c.l.b16 %v1448
        %v1679 = vunpack.c.l.b16 %v1449
        %v1680 = vunpack.c.l.b16 %v1450
        %v1681 = vpack.c.b16 %v1658, %v1657
        %v1682 = vpack.c.b16 %v1660, %v1659
        %v1683 = vpack.c.b16 %v1662, %v1661
        %v1684 = vpack.c.b16 %v1664, %v1663
        %v1685 = vpack.c.b16 %v1666, %v1665
        %v1686 = vpack.c.b16 %v1668, %v1667
        %v1687 = vpack.c.b16 %v1670, %v1669
        %v1688 = vpack.c.b16 %v1672, %v1671
        %v1689 = vpack.c.b16 %v1674, %v1673
        %v1690 = vpack.c.b16 %v1676, %v1675
        %v1691 = vpack.c.b16 %v1678, %v1677
        %v1692 = vpack.c.b16 %v1680, %v1679
        %v1706 = vsel %vm884, %v1420, 0
        %v1709 = vsel %vm884, %v1422, 0
        %v1712 = vsel %vm884, %v1424, 0
        %v1715 = vsel %vm884, %v1426, 0
        %1717 = vmatprep.subr.bf16.mxu0 0
        %1718 = vmatpush1.bf16.msra.mxu0 %v1681
        %1719 = vmatprep.subr.bf16.mxu0 0
        %1720 = vmatpush1.bf16.msra.mxu0 %v1682
        %1721 = vmatprep.subr.bf16.mxu0 0
        %1722 = vmatpush1.bf16.msra.mxu0 %v1683
        %1723 = vmatprep.subr.bf16.mxu0 0
        %1724 = vmatpush1.bf16.msra.mxu0 %v1684
        %1725 = vmatprep.subr.bf16.mxu0 0
        %1726 = vmatpush1.bf16.msra.mxu0 %v1685
        %1727 = vmatprep.subr.bf16.mxu0 0
        %1728 = vmatpush1.bf16.msra.mxu0 %v1686
        %1729 = vmatprep.subr.bf16.mxu0 0
        %1730 = vmatpush1.bf16.msra.mxu0 %v1687
        %1731 = vmatprep.subr.bf16.mxu0 0
        %1732 = vmatpush1.bf16.msra.mxu0 %v1688
        %1733 = vmatprep.subr.bf16.mxu0 0
        %1734 = vmatpush1.bf16.msra.mxu0 %v1689
        %1735 = vmatprep.subr.bf16.mxu0 0
        %1736 = vmatpush1.bf16.msra.mxu0 %v1690
        %1737 = vmatprep.subr.bf16.mxu0 0
        %1738 = vmatpush1.bf16.msra.mxu0 %v1691
        %1739 = vmatprep.subr.bf16.mxu0 0
        %1740 = vmatpush1.bf16.msra.mxu0 %v1692
        %1741 = vmatprep.subr.bf16.mxu0 0
        %1742 = vmatpush1.bf16.msra.mxu0 0
        %1743 = vmatprep.subr.bf16.mxu0 0
        %1744 = vmatpush1.bf16.msra.mxu0 0
        %1745 = vmatprep.subr.bf16.mxu0 0
        %1746 = vmatpush1.bf16.msra.mxu0 0
        %1747 = vmatprep.subr.bf16.mxu0 0
        %1748 = vmatpush1.bf16.msra.mxu0 0
        %1749 = vmatprep.mubr.bf16.mxu0 %v1706
        %1750 = vmatmul.mubr.bf16.gmra.mrb[0].mxu0 %v1419
        %v1751 = vpop.f32.mrb[0].mxu0
        %v1752 = vadd.f32 %v1603, %v1751
        %v1753 = vpop.f32.mrb[0].mxu0
        %v1754 = vpop.f32.mrb[0].mxu0
        %v1755 = vadd.f32 %v1606, %v1754
        %v1756 = vpop.f32.mrb[0].mxu0
        %1757 = vmatprep.mubr.bf16.mxu0 %v1709
        %1758 = vmatmul.mubr.bf16.gmra.mrb[0].mxu0 %v1421
        %v1759 = vpop.f32.mrb[0].mxu0
        %v1760 = vadd.f32 %v1611, %v1759
        %v1761 = vpop.f32.mrb[0].mxu0
        %v1762 = vpop.f32.mrb[0].mxu0
        %v1763 = vadd.f32 %v1614, %v1762
        %v1764 = vpop.f32.mrb[0].mxu0
        %1765 = vmatprep.mubr.bf16.mxu0 %v1712
        %1766 = vmatmul.mubr.bf16.gmra.mrb[0].mxu0 %v1423
        %v1767 = vpop.f32.mrb[0].mxu0
        %v1768 = vadd.f32 %v1619, %v1767
        %v1769 = vpop.f32.mrb[0].mxu0
        %v1770 = vpop.f32.mrb[0].mxu0
        %v1771 = vadd.f32 %v1622, %v1770
        %v1772 = vpop.f32.mrb[0].mxu0
        %1773 = vmatprep.mubr.bf16.mxu0 %v1715
        %1774 = vmatmul.mubr.bf16.gmra.mrb[0].mxu0 %v1425
        %v1775 = vpop.f32.mrb[0].mxu0
        %v1776 = vadd.f32 %v1627, %v1775
        %v1777 = vpop.f32.mrb[0].mxu0
        %v1778 = vpop.f32.mrb[0].mxu0
        %v1779 = vadd.f32 %v1630, %v1778
        %v1780 = vpop.f32.mrb[0].mxu0
        %1781 = vdwg.mxu0
        %vm1782 = vcmp.lt.s32.totalorder %v1137, 56
        %vm1783 = vcmp.lt.s32.totalorder %v1138, 56
        %vm1784 = vcmp.lt.s32.totalorder %v1139, 56
        %vm1785 = vcmp.lt.s32.totalorder %v1140, 56
        %vm1786 = vcmp.lt.s32.totalorder %v1141, 56
        %vm1787 = vcmp.lt.s32.totalorder %v1142, 56
        %vm1788 = vcmp.lt.s32.totalorder %v1143, 56
        %vm1789 = vcmp.lt.s32.totalorder %v1144, 56
        %v1790 = vsel %vm1782, 1, 0
        %v1791 = vsel %vm1783, 1, 0
        %v1792 = vsel %vm1784, 1, 0
        %v1793 = vsel %vm1785, 1, 0
        %v1794 = vsel %vm1786, 1, 0
        %v1795 = vsel %vm1787, 1, 0
        %v1796 = vsel %vm1788, 1, 0
        %v1797 = vsel %vm1789, 1, 0
        %vm1798 = vcmp.eq.s32.totalorder %v1790, 1
        %vm1799 = vcmp.eq.s32.totalorder %v1791, 1
        %vm1800 = vcmp.eq.s32.totalorder %v1792, 1
        %vm1801 = vcmp.eq.s32.totalorder %v1793, 1
        %vm1802 = vcmp.eq.s32.totalorder %v1794, 1
        %vm1803 = vcmp.eq.s32.totalorder %v1795, 1
        %vm1804 = vcmp.eq.s32.totalorder %v1796, 1
        %vm1805 = vcmp.eq.s32.totalorder %v1797, 1
        %v1806 = vsel %vm1798, %v1372, 0.0
        %v1807 = vsel %vm1798, %v1332, 0.0
        %v1808 = vsel %vm1799, %v1373, 0.0
        %v1809 = vsel %vm1799, %v1333, 0.0
        %v1810 = vsel %vm1800, %v1374, 0.0
        %v1811 = vsel %vm1800, %v1334, 0.0
        %v1812 = vsel %vm1801, %v1375, 0.0
        %v1813 = vsel %vm1801, %v1335, 0.0
        %v1814 = vsel %vm1802, %v1376, 0.0
        %v1815 = vsel %vm1802, %v1336, 0.0
        %v1816 = vsel %vm1803, %v1377, 0.0
        %v1817 = vsel %vm1803, %v1337, 0.0
        %v1818 = vsel %vm1804, %v1378, 0.0
        %v1819 = vsel %vm1804, %v1338, 0.0
        %v1820 = vsel %vm1805, %v1371, 0.0
        %v1821 = vsel %vm1805, %v1331, 0.0
        %v1822 = vpack.c.bf16 %v1808, %v1806
        %v1823 = vpack.c.bf16 %v1809, %v1807
        %v1824 = vpack.c.bf16 %v1812, %v1810
        %v1825 = vpack.c.bf16 %v1813, %v1811
        %v1826 = vpack.c.bf16 %v1816, %v1814
        %v1827 = vpack.c.bf16 %v1817, %v1815
        %v1828 = vpack.c.bf16 %v1820, %v1818
        %v1829 = vpack.c.bf16 %v1821, %v1819
        %s1830 = scalar_lea.vmem %s5, 192
        %v1831 = vld [vmem:[%s1830] sm:$0xf]
        %v1832 = vld [vmem:[%s1830 + $0x4] sm:$0xf]
        %v1833 = vld [vmem:[%s1830 + $0x8] sm:$0xf]
        %v1834 = vld [vmem:[%s1830 + $0xc] sm:$0xf]
        %v1835 = vld [vmem:[%s1830 + $0x10] sm:$0xf]
        %v1836 = vld [vmem:[%s1830 + $0x14] sm:$0xf]
        %v1837 = vld [vmem:[%s1830 + $0x18] sm:$0xf]
        %v1838 = vld [vmem:[%s1830 + $0x1c] sm:$0xf]
        %v1839 = vld [vmem:[%s1830 + $0x20] sm:$0xf]
        %v1840 = vld [vmem:[%s1830 + $0x24] sm:$0xf]
        %v1841 = vld [vmem:[%s1830 + $0x28] sm:$0xf]
        %v1842 = vld [vmem:[%s1830 + $0x2c] sm:$0xf]
        %v1843 = vld [vmem:[%s1830 + $0x30] sm:$0xf]
        %v1844 = vld [vmem:[%s1830 + $0x34] sm:$0xf]
        %v1845 = vld [vmem:[%s1830 + $0x38] sm:$0xf]
        %v1846 = vld [vmem:[%s1830 + $0x3c] sm:$0xf]
        %v1847 = vld [vmem:[%s1830 + $0x40] sm:$0xf]
        %v1848 = vld [vmem:[%s1830 + $0x44] sm:$0xf]
        %v1849 = vld [vmem:[%s1830 + $0x48] sm:$0xf]
        %v1850 = vld [vmem:[%s1830 + $0x4c] sm:$0xf]
        %v1851 = vld [vmem:[%s1830 + $0x50] sm:$0xf]
        %v1852 = vld [vmem:[%s1830 + $0x54] sm:$0xf]
        %v1853 = vld [vmem:[%s1830 + $0x58] sm:$0xf]
        %v1854 = vld [vmem:[%s1830 + $0x5c] sm:$0xf]
        %v1879 = vunpack.c.l.b16 %v1831
        %v1880 = vunpack.c.l.b16 %v1832
        %v1881 = vunpack.c.l.b16 %v1833
        %v1882 = vunpack.c.l.b16 %v1834
        %v1883 = vunpack.c.l.b16 %v1835
        %v1884 = vunpack.c.l.b16 %v1836
        %v1885 = vunpack.c.l.b16 %v1837
        %v1886 = vunpack.c.l.b16 %v1838
        %v1887 = vunpack.c.l.b16 %v1839
        %v1888 = vunpack.c.l.b16 %v1840
        %v1889 = vunpack.c.l.b16 %v1841
        %v1890 = vunpack.c.l.b16 %v1842
        %v1891 = vunpack.c.l.b16 %v1843
        %v1892 = vunpack.c.l.b16 %v1844
        %v1893 = vunpack.c.l.b16 %v1845
        %v1894 = vunpack.c.l.b16 %v1846
        %v1895 = vunpack.c.l.b16 %v1847
        %v1896 = vunpack.c.l.b16 %v1848
        %v1897 = vunpack.c.l.b16 %v1849
        %v1898 = vunpack.c.l.b16 %v1850
        %v1899 = vunpack.c.l.b16 %v1851
        %v1900 = vunpack.c.l.b16 %v1852
        %v1901 = vunpack.c.l.b16 %v1853
        %v1902 = vunpack.c.l.b16 %v1854
        %v1903 = vpack.c.b16 %v1880, %v1879
        %v1904 = vpack.c.b16 %v1882, %v1881
        %v1905 = vpack.c.b16 %v1884, %v1883
        %v1906 = vpack.c.b16 %v1886, %v1885
        %v1907 = vpack.c.b16 %v1888, %v1887
        %v1908 = vpack.c.b16 %v1890, %v1889
        %v1909 = vpack.c.b16 %v1892, %v1891
        %v1910 = vpack.c.b16 %v1894, %v1893
        %v1911 = vpack.c.b16 %v1896, %v1895
        %v1912 = vpack.c.b16 %v1898, %v1897
        %v1913 = vpack.c.b16 %v1900, %v1899
        %v1914 = vpack.c.b16 %v1902, %v1901
        %v1928 = vsel %vm884, %v1823, 0
        %v1931 = vsel %vm884, %v1825, 0
        %v1934 = vsel %vm884, %v1827, 0
        %v1937 = vsel %vm884, %v1829, 0
        %1939 = vmatprep.subr.bf16.mxu0 0
        %1940 = vmatpush1.bf16.msra.mxu0 %v1903
        %1941 = vmatprep.subr.bf16.mxu0 0
        %1942 = vmatpush1.bf16.msra.mxu0 %v1904
        %1943 = vmatprep.subr.bf16.mxu0 0
        %1944 = vmatpush1.bf16.msra.mxu0 %v1905
        %1945 = vmatprep.subr.bf16.mxu0 0
        %1946 = vmatpush1.bf16.msra.mxu0 %v1906
        %1947 = vmatprep.subr.bf16.mxu0 0
        %1948 = vmatpush1.bf16.msra.mxu0 %v1907
        %1949 = vmatprep.subr.bf16.mxu0 0
        %1950 = vmatpush1.bf16.msra.mxu0 %v1908
        %1951 = vmatprep.subr.bf16.mxu0 0
        %1952 = vmatpush1.bf16.msra.mxu0 %v1909
        %1953 = vmatprep.subr.bf16.mxu0 0
        %1954 = vmatpush1.bf16.msra.mxu0 %v1910
        %1955 = vmatprep.subr.bf16.mxu0 0
        %1956 = vmatpush1.bf16.msra.mxu0 %v1911
        %1957 = vmatprep.subr.bf16.mxu0 0
        %1958 = vmatpush1.bf16.msra.mxu0 %v1912
        %1959 = vmatprep.subr.bf16.mxu0 0
        %1960 = vmatpush1.bf16.msra.mxu0 %v1913
        %1961 = vmatprep.subr.bf16.mxu0 0
        %1962 = vmatpush1.bf16.msra.mxu0 %v1914
        %1963 = vmatprep.subr.bf16.mxu0 0
        %1964 = vmatpush1.bf16.msra.mxu0 0
        %1965 = vmatprep.subr.bf16.mxu0 0
        %1966 = vmatpush1.bf16.msra.mxu0 0
        %1967 = vmatprep.subr.bf16.mxu0 0
        %1968 = vmatpush1.bf16.msra.mxu0 0
        %1969 = vmatprep.subr.bf16.mxu0 0
        %1970 = vmatpush1.bf16.msra.mxu0 0
        %1971 = vmatprep.mubr.bf16.mxu0 %v1928
        %1972 = vmatmul.mubr.bf16.gmra.mrb[0].mxu0 %v1822
        %v1973 = vpop.f32.mrb[0].mxu0
        %v1974 = vadd.f32 0.0, %v1973
        %v1975 = vpop.f32.mrb[0].mxu0
        %v1976 = vpop.f32.mrb[0].mxu0
        %v1977 = vadd.f32 0.0, %v1976
        %v1978 = vpop.f32.mrb[0].mxu0
        %1979 = vmatprep.mubr.bf16.mxu0 %v1931
        %1980 = vmatmul.mubr.bf16.gmra.mrb[0].mxu0 %v1824
        %v1981 = vpop.f32.mrb[0].mxu0
        %v1982 = vadd.f32 0.0, %v1981
        %v1983 = vpop.f32.mrb[0].mxu0
        %v1984 = vpop.f32.mrb[0].mxu0
        %v1985 = vadd.f32 0.0, %v1984
        %v1986 = vpop.f32.mrb[0].mxu0
        %1987 = vmatprep.mubr.bf16.mxu0 %v1934
        %1988 = vmatmul.mubr.bf16.gmra.mrb[0].mxu0 %v1826
        %v1989 = vpop.f32.mrb[0].mxu0
        %v1990 = vadd.f32 0.0, %v1989
        %v1991 = vpop.f32.mrb[0].mxu0
        %v1992 = vpop.f32.mrb[0].mxu0
        %v1993 = vadd.f32 0.0, %v1992
        %v1994 = vpop.f32.mrb[0].mxu0
        %1995 = vmatprep.mubr.bf16.mxu0 %v1937
        %1996 = vmatmul.mubr.bf16.gmra.mrb[0].mxu0 %v1828
        %v1997 = vpop.f32.mrb[0].mxu0
        %v1998 = vadd.f32 0.0, %v1997
        %v1999 = vpop.f32.mrb[0].mxu0
        %v2000 = vpop.f32.mrb[0].mxu0
        %v2001 = vadd.f32 0.0, %v2000
        %v2002 = vpop.f32.mrb[0].mxu0
        %2003 = vdwg.mxu0
        %v2004 = vadd.f32 %v1752, %v1974
        %v2005 = vadd.f32 %v1755, %v1977
        %v2006 = vadd.f32 %v1760, %v1982
        %v2007 = vadd.f32 %v1763, %v1985
        %v2008 = vadd.f32 %v1768, %v1990
        %v2009 = vadd.f32 %v1771, %v1993
        %v2010 = vadd.f32 %v1776, %v1998
        %v2011 = vadd.f32 %v1779, %v2001
        %v2012 = vld [vmem:[%s6] sm:$0x1]
        %v2014 = vlaneseq
        %v2015 = vshrl.u32 %v2014, 7
        %v2016 = vsub.s32 0, %v2015
        %v2017 = vrot.slane %v2012, %v2016
        %v2019 = vadd.f32 %v2004, %v2017
        %v2020 = vadd.f32 %v2005, %v2017
        %v2021 = vadd.f32 %v2006, %v2017
        %v2022 = vadd.f32 %v2007, %v2017
        %v2023 = vadd.f32 %v2008, %v2017
        %v2024 = vadd.f32 %v2009, %v2017
        %v2025 = vadd.f32 %v2010, %v2017
        %v2026 = vadd.f32 %v2011, %v2017
        %v2027 = vld [vmem:[%s7] sm:$0x1]
        %v2028 = vld [vmem:[%s8] sm:$0x1]
        %v2029 = vsel %vm884, %v2019, 0.0
        %2030 = vadd.xlane.f32.xlu0 %v2029
        %v2031 = vpop.xlane.xlu0 %2030
        %v2032 = vsel %vm884, %v2020, 0.0
        %2033 = vadd.xlane.f32.xlu0 %v2032
        %v2034 = vpop.xlane.xlu0 %2033
        %v2035 = vsel %vm884, %v2021, 0.0
        %2036 = vadd.xlane.f32.xlu0 %v2035
        %v2037 = vpop.xlane.xlu0 %2036
        %v2038 = vsel %vm884, %v2022, 0.0
        %2039 = vadd.xlane.f32.xlu0 %v2038
        %v2040 = vpop.xlane.xlu0 %2039
        %v2041 = vsel %vm884, %v2023, 0.0
        %2042 = vadd.xlane.f32.xlu0 %v2041
        %v2043 = vpop.xlane.xlu0 %2042
        %v2044 = vsel %vm884, %v2024, 0.0
        %2045 = vadd.xlane.f32.xlu0 %v2044
        %v2046 = vpop.xlane.xlu0 %2045
        %v2047 = vsel %vm884, %v2025, 0.0
        %2048 = vadd.xlane.f32.xlu0 %v2047
        %v2049 = vpop.xlane.xlu0 %2048
        %v2050 = vsel %vm884, %v2026, 0.0
        %2051 = vadd.xlane.f32.xlu0 %v2050
        %v2052 = vpop.xlane.xlu0 %2051
        %v2053 = vrcp.pop 64.0
        %v2054 = vmul.f32 %v2031, %v2053
        %v2055 = vmul.f32 %v2034, %v2053
        %v2056 = vmul.f32 %v2037, %v2053
        %v2057 = vmul.f32 %v2040, %v2053
        %v2058 = vmul.f32 %v2043, %v2053
        %v2059 = vmul.f32 %v2046, %v2053
        %v2060 = vmul.f32 %v2049, %v2053
        %v2061 = vmul.f32 %v2052, %v2053
        %v2062 = vsub.f32 %v2019, %v2054
        %v2063 = vsub.f32 %v2020, %v2055
        %v2064 = vsub.f32 %v2021, %v2056
        %v2065 = vsub.f32 %v2022, %v2057
        %v2066 = vsub.f32 %v2023, %v2058
        %v2067 = vsub.f32 %v2024, %v2059
        %v2068 = vsub.f32 %v2025, %v2060
        %v2069 = vsub.f32 %v2026, %v2061
        %v2070 = vmul.f32 %v2062, %v2062
        %v2071 = vmul.f32 %v2063, %v2063
        %v2072 = vmul.f32 %v2064, %v2064
        %v2073 = vmul.f32 %v2065, %v2065
        %v2074 = vmul.f32 %v2066, %v2066
        %v2075 = vmul.f32 %v2067, %v2067
        %v2076 = vmul.f32 %v2068, %v2068
        %v2077 = vmul.f32 %v2069, %v2069
        %v2078 = vsel %vm884, %v2070, 0.0
        %2079 = vadd.xlane.f32.xlu0 %v2078
        %v2080 = vpop.xlane.xlu0 %2079
        %v2081 = vsel %vm884, %v2071, 0.0
        %2082 = vadd.xlane.f32.xlu0 %v2081
        %v2083 = vpop.xlane.xlu0 %2082
        %v2084 = vsel %vm884, %v2072, 0.0
        %2085 = vadd.xlane.f32.xlu0 %v2084
        %v2086 = vpop.xlane.xlu0 %2085
        %v2087 = vsel %vm884, %v2073, 0.0
        %2088 = vadd.xlane.f32.xlu0 %v2087
        %v2089 = vpop.xlane.xlu0 %2088
        %v2090 = vsel %vm884, %v2074, 0.0
        %2091 = vadd.xlane.f32.xlu0 %v2090
        %v2092 = vpop.xlane.xlu0 %2091
        %v2093 = vsel %vm884, %v2075, 0.0
        %2094 = vadd.xlane.f32.xlu0 %v2093
        %v2095 = vpop.xlane.xlu0 %2094
        %v2096 = vsel %vm884, %v2076, 0.0
        %2097 = vadd.xlane.f32.xlu0 %v2096
        %v2098 = vpop.xlane.xlu0 %2097
        %v2099 = vsel %vm884, %v2077, 0.0
        %2100 = vadd.xlane.f32.xlu0 %v2099
        %v2101 = vpop.xlane.xlu0 %2100
        %v2102 = vmul.f32 %v2080, %v2053
        %v2103 = vmul.f32 %v2083, %v2053
        %v2104 = vmul.f32 %v2086, %v2053
        %v2105 = vmul.f32 %v2089, %v2053
        %v2106 = vmul.f32 %v2092, %v2053
        %v2107 = vmul.f32 %v2095, %v2053
        %v2108 = vmul.f32 %v2098, %v2053
        %v2109 = vmul.f32 %v2101, %v2053
        %v2110 = vadd.f32 %v2102, 1e-05
        %v2111 = vadd.f32 %v2103, 1e-05
        %v2112 = vadd.f32 %v2104, 1e-05
        %v2113 = vadd.f32 %v2105, 1e-05
        %v2114 = vadd.f32 %v2106, 1e-05
        %v2115 = vadd.f32 %v2107, 1e-05
        %v2116 = vadd.f32 %v2108, 1e-05
        %v2117 = vadd.f32 %v2109, 1e-05
        %v2118 = vrsqrt.pop %v2110
        %v2119 = vrsqrt.pop %v2111
        %v2120 = vrsqrt.pop %v2112
        %v2121 = vrsqrt.pop %v2113
        %v2122 = vrsqrt.pop %v2114
        %v2123 = vrsqrt.pop %v2115
        %v2124 = vrsqrt.pop %v2116
        %v2125 = vrsqrt.pop %v2117
        %v2126 = vmul.f32 %v2062, %v2118
        %v2127 = vmul.f32 %v2063, %v2119
        %v2128 = vmul.f32 %v2064, %v2120
        %v2129 = vmul.f32 %v2065, %v2121
        %v2130 = vmul.f32 %v2066, %v2122
        %v2131 = vmul.f32 %v2067, %v2123
        %v2132 = vmul.f32 %v2068, %v2124
        %v2133 = vmul.f32 %v2069, %v2125
        %v2135 = vlaneseq
        %v2136 = vshrl.u32 %v2135, 7
        %v2137 = vsub.s32 0, %v2136
        %v2138 = vrot.slane %v2027, %v2137
        %v2140 = vmul.f32 %v2126, %v2138
        %v2141 = vmul.f32 %v2127, %v2138
        %v2142 = vmul.f32 %v2128, %v2138
        %v2143 = vmul.f32 %v2129, %v2138
        %v2144 = vmul.f32 %v2130, %v2138
        %v2145 = vmul.f32 %v2131, %v2138
        %v2146 = vmul.f32 %v2132, %v2138
        %v2147 = vmul.f32 %v2133, %v2138
        %v2149 = vlaneseq
        %v2150 = vshrl.u32 %v2149, 7
        %v2151 = vsub.s32 0, %v2150
        %v2152 = vrot.slane %v2028, %v2151
        %v2154 = vadd.f32 %v2140, %v2152
        %v2155 = vadd.f32 %v2141, %v2152
        %v2156 = vadd.f32 %v2142, %v2152
        %v2157 = vadd.f32 %v2143, %v2152
        %v2158 = vadd.f32 %v2144, %v2152
        %v2159 = vadd.f32 %v2145, %v2152
        %v2160 = vadd.f32 %v2146, %v2152
        %v2161 = vadd.f32 %v2147, %v2152
        %v2162 = vpack.c.bf16 %v2155, %v2154
        %v2163 = vpack.c.bf16 %v2157, %v2156
        %v2164 = vpack.c.bf16 %v2159, %v2158
        %v2165 = vpack.c.bf16 %v2161, %v2160
        %v2166 = vld [vmem:[%s9] sm:$0xff]
        %v2167 = vld [vmem:[%s9 + $0x8] sm:$0xff]
        %v2168 = vld [vmem:[%s9 + $0x10] sm:$0xff]
        %v2169 = vld [vmem:[%s9 + $0x18] sm:$0xff]
        %v2170 = vld [vmem:[%s9 + $0x20] sm:$0xff]
        %v2171 = vld [vmem:[%s9 + $0x28] sm:$0xff]
        %v2172 = vld [vmem:[%s9 + $0x30] sm:$0xff]
        %v2173 = vld [vmem:[%s9 + $0x38] sm:$0xff]
        %v2182 = vunpack.c.l.b16 %v2166
        %v2183 = vunpack.c.h.b16 %v2166
        %v2184 = vunpack.c.l.b16 %v2167
        %v2185 = vunpack.c.h.b16 %v2167
        %v2186 = vunpack.c.l.b16 %v2168
        %v2187 = vunpack.c.h.b16 %v2168
        %v2188 = vunpack.c.l.b16 %v2169
        %v2189 = vunpack.c.h.b16 %v2169
        %v2190 = vunpack.c.l.b16 %v2170
        %v2191 = vunpack.c.h.b16 %v2170
        %v2192 = vunpack.c.l.b16 %v2171
        %v2193 = vunpack.c.h.b16 %v2171
        %v2194 = vunpack.c.l.b16 %v2172
        %v2195 = vunpack.c.h.b16 %v2172
        %v2196 = vunpack.c.l.b16 %v2173
        %v2197 = vunpack.c.h.b16 %v2173
        %v2198 = vpack.c.b16 %v2184, %v2182
        %v2199 = vpack.c.b16 %v2185, %v2183
        %v2200 = vpack.c.b16 %v2188, %v2186
        %v2201 = vpack.c.b16 %v2189, %v2187
        %v2202 = vpack.c.b16 %v2192, %v2190
        %v2203 = vpack.c.b16 %v2193, %v2191
        %v2204 = vpack.c.b16 %v2196, %v2194
        %v2205 = vpack.c.b16 %v2197, %v2195
        %v2215 = vsel %vm884, %v2162, 0
        %v2218 = vsel %vm884, %v2163, 0
        %v2221 = vsel %vm884, %v2164, 0
        %v2224 = vsel %vm884, %v2165, 0
        %2226 = vmatprep.subr.bf16.mxu0 %v2199
        %2227 = vmatpush1.bf16.msra.mxu0 %v2198
        %2228 = vmatprep.subr.bf16.mxu0 %v2201
        %2229 = vmatpush1.bf16.msra.mxu0 %v2200
        %2230 = vmatprep.subr.bf16.mxu0 %v2203
        %2231 = vmatpush1.bf16.msra.mxu0 %v2202
        %2232 = vmatprep.subr.bf16.mxu0 %v2205
        %2233 = vmatpush1.bf16.msra.mxu0 %v2204
        %2234 = vmatprep.subr.bf16.mxu0 0
        %2235 = vmatpush1.bf16.msra.mxu0 0
        %2236 = vmatprep.subr.bf16.mxu0 0
        %2237 = vmatpush1.bf16.msra.mxu0 0
        %2238 = vmatprep.subr.bf16.mxu0 0
        %2239 = vmatpush1.bf16.msra.mxu0 0
        %2240 = vmatprep.subr.bf16.mxu0 0
        %2241 = vmatpush1.bf16.msra.mxu0 0
        %2242 = vmatprep.subr.bf16.mxu0 0
        %2243 = vmatpush1.bf16.msra.mxu0 0
        %2244 = vmatprep.subr.bf16.mxu0 0
        %2245 = vmatpush1.bf16.msra.mxu0 0
        %2246 = vmatprep.subr.bf16.mxu0 0
        %2247 = vmatpush1.bf16.msra.mxu0 0
        %2248 = vmatprep.subr.bf16.mxu0 0
        %2249 = vmatpush1.bf16.msra.mxu0 0
        %2250 = vmatprep.subr.bf16.mxu0 0
        %2251 = vmatpush1.bf16.msra.mxu0 0
        %2252 = vmatprep.subr.bf16.mxu0 0
        %2253 = vmatpush1.bf16.msra.mxu0 0
        %2254 = vmatprep.subr.bf16.mxu0 0
        %2255 = vmatpush1.bf16.msra.mxu0 0
        %2256 = vmatprep.subr.bf16.mxu0 0
        %2257 = vmatpush1.bf16.msra.mxu0 0
        %2258 = vmatprep.mubr.bf16.mxu0 0
        %2259 = vmatmul.mubr.bf16.gmra.mrb[0].mxu0 %v2215
        %v2260 = vpop.f32.mrb[0].mxu0
        %v2261 = vadd.f32 0.0, %v2260
        %v2262 = vpop.f32.mrb[0].mxu0
        %v2263 = vadd.f32 0.0, %v2262
        %v2264 = vpop.f32.mrb[0].mxu0
        %v2265 = vadd.f32 0.0, %v2264
        %v2266 = vpop.f32.mrb[0].mxu0
        %v2267 = vadd.f32 0.0, %v2266
        %2268 = vmatprep.mubr.bf16.mxu0 0
        %2269 = vmatmul.mubr.bf16.gmra.mrb[0].mxu0 %v2218
        %v2270 = vpop.f32.mrb[0].mxu0
        %v2271 = vadd.f32 0.0, %v2270
        %v2272 = vpop.f32.mrb[0].mxu0
        %v2273 = vadd.f32 0.0, %v2272
        %v2274 = vpop.f32.mrb[0].mxu0
        %v2275 = vadd.f32 0.0, %v2274
        %v2276 = vpop.f32.mrb[0].mxu0
        %v2277 = vadd.f32 0.0, %v2276
        %2278 = vmatprep.mubr.bf16.mxu0 0
        %2279 = vmatmul.mubr.bf16.gmra.mrb[0].mxu0 %v2221
        %v2280 = vpop.f32.mrb[0].mxu0
        %v2281 = vadd.f32 0.0, %v2280
        %v2282 = vpop.f32.mrb[0].mxu0
        %v2283 = vadd.f32 0.0, %v2282
        %v2284 = vpop.f32.mrb[0].mxu0
        %v2285 = vadd.f32 0.0, %v2284
        %v2286 = vpop.f32.mrb[0].mxu0
        %v2287 = vadd.f32 0.0, %v2286
        %2288 = vmatprep.mubr.bf16.mxu0 0
        %2289 = vmatmul.mubr.bf16.gmra.mrb[0].mxu0 %v2224
        %v2290 = vpop.f32.mrb[0].mxu0
        %v2291 = vadd.f32 0.0, %v2290
        %v2292 = vpop.f32.mrb[0].mxu0
        %v2293 = vadd.f32 0.0, %v2292
        %v2294 = vpop.f32.mrb[0].mxu0
        %v2295 = vadd.f32 0.0, %v2294
        %v2296 = vpop.f32.mrb[0].mxu0
        %v2297 = vadd.f32 0.0, %v2296
        %2298 = vdwg.mxu0
        %v2299 = vpack.c.bf16 %v2265, %v2261
        %v2300 = vpack.c.bf16 %v2275, %v2271
        %v2301 = vpack.c.bf16 %v2285, %v2281
        %v2302 = vpack.c.bf16 %v2295, %v2291
        %2307 = vrot.lane.b32.xlu0 %v2299, 64
        %v2308 = vpop.permute.xlu0 %2307
        %2309 = vrot.lane.b32.xlu0 %v2300, 64
        %v2310 = vpop.permute.xlu0 %2309
        %2311 = vrot.lane.b32.xlu0 %v2301, 64
        %v2312 = vpop.permute.xlu0 %2311
        %2313 = vrot.lane.b32.xlu0 %v2302, 64
        %v2314 = vpop.permute.xlu0 %2313
        %vm2315 = vcmask 261120
        %v2317 = vsel %vm2315, %v2299, 0
        %v2320 = vsel %vm2315, %v2300, 0
        %v2323 = vsel %vm2315, %v2301, 0
        %v2326 = vsel %vm2315, %v2302, 0
        %v2329 = vsel %vm2315, %v2308, 0
        %v2332 = vsel %vm2315, %v2310, 0
        %v2335 = vsel %vm2315, %v2312, 0
        %v2338 = vsel %vm2315, %v2314, 0
        %2340 = vmatprep.subr.bf16.mxu0 0
        %2341 = vmatpush1.bf16.xpose.msra.mxu0 %v2329
        %2342 = vmatprep.subr.bf16.mxu0 0
        %2343 = vmatpush1.bf16.xpose.msra.mxu0 %v2332
        %2344 = vmatprep.subr.bf16.mxu0 0
        %2345 = vmatpush1.bf16.xpose.msra.mxu0 %v2335
        %2346 = vmatprep.subr.bf16.mxu0 0
        %2347 = vmatpush1.bf16.xpose.msra.mxu0 %v2338
        %2348 = vmatprep.subr.bf16.mxu0 0
        %2349 = vmatpush1.bf16.xpose.msra.mxu0 0
        %2350 = vmatprep.subr.bf16.mxu0 0
        %2351 = vmatpush1.bf16.xpose.msra.mxu0 0
        %2352 = vmatprep.subr.bf16.mxu0 0
        %2353 = vmatpush1.bf16.xpose.msra.mxu0 0
        %2354 = vmatprep.subr.bf16.mxu0 0
        %2355 = vmatpush1.bf16.xpose.msra.mxu0 0
        %2356 = vmatprep.subr.bf16.mxu0 0
        %2357 = vmatpush1.bf16.xpose.msra.mxu0 0
        %2358 = vmatprep.subr.bf16.mxu0 0
        %2359 = vmatpush1.bf16.xpose.msra.mxu0 0
        %2360 = vmatprep.subr.bf16.mxu0 0
        %2361 = vmatpush1.bf16.xpose.msra.mxu0 0
        %2362 = vmatprep.subr.bf16.mxu0 0
        %2363 = vmatpush1.bf16.xpose.msra.mxu0 0
        %2364 = vmatprep.subr.bf16.mxu0 0
        %2365 = vmatpush1.bf16.xpose.msra.mxu0 0
        %2366 = vmatprep.subr.bf16.mxu0 0
        %2367 = vmatpush1.bf16.xpose.msra.mxu0 0
        %2368 = vmatprep.subr.bf16.mxu0 0
        %2369 = vmatpush1.bf16.xpose.msra.mxu0 0
        %2370 = vmatprep.subr.bf16.mxu0 0
        %2371 = vmatpush1.bf16.xpose.msra.mxu0 0
        %2372 = vmatprep.mubr.bf16.mxu0 0
        %2373 = vmatmul.mubr.bf16.gmra.mrb[0].mxu0 %v2317
        %v2374 = vpop.f32.mrb[0].mxu0
        %v2375 = vadd.f32 0.0, %v2374
        %v2376 = vpop.f32.mrb[0].mxu0
        %v2377 = vpop.f32.mrb[0].mxu0
        %v2378 = vadd.f32 0.0, %v2377
        %v2379 = vpop.f32.mrb[0].mxu0
        %2380 = vmatprep.mubr.bf16.mxu0 0
        %2381 = vmatmul.mubr.bf16.gmra.mrb[0].mxu0 %v2320
        %v2382 = vpop.f32.mrb[0].mxu0
        %v2383 = vadd.f32 0.0, %v2382
        %v2384 = vpop.f32.mrb[0].mxu0
        %v2385 = vpop.f32.mrb[0].mxu0
        %v2386 = vadd.f32 0.0, %v2385
        %v2387 = vpop.f32.mrb[0].mxu0
        %2388 = vmatprep.mubr.bf16.mxu0 0
        %2389 = vmatmul.mubr.bf16.gmra.mrb[0].mxu0 %v2323
        %v2390 = vpop.f32.mrb[0].mxu0
        %v2391 = vadd.f32 0.0, %v2390
        %v2392 = vpop.f32.mrb[0].mxu0
        %v2393 = vpop.f32.mrb[0].mxu0
        %v2394 = vadd.f32 0.0, %v2393
        %v2395 = vpop.f32.mrb[0].mxu0
        %2396 = vmatprep.mubr.bf16.mxu0 0
        %2397 = vmatmul.mubr.bf16.gmra.mrb[0].mxu0 %v2326
        %v2398 = vpop.f32.mrb[0].mxu0
        %v2399 = vadd.f32 0.0, %v2398
        %v2400 = vpop.f32.mrb[0].mxu0
        %v2401 = vpop.f32.mrb[0].mxu0
        %v2402 = vadd.f32 0.0, %v2401
        %v2403 = vpop.f32.mrb[0].mxu0
        %2404 = vdwg.mxu0
        %2405 = vrot.lane.b32.xlu0 %v2299, 96
        %v2406 = vpop.permute.xlu0 %2405
        %2407 = vrot.lane.b32.xlu0 %v2300, 96
        %v2408 = vpop.permute.xlu0 %2407
        %2409 = vrot.lane.b32.xlu0 %v2301, 96
        %v2410 = vpop.permute.xlu0 %2409
        %2411 = vrot.lane.b32.xlu0 %v2302, 96
        %v2412 = vpop.permute.xlu0 %2411
        %2413 = vrot.lane.b32.xlu0 %v2299, 32
        %v2414 = vpop.permute.xlu0 %2413
        %2415 = vrot.lane.b32.xlu0 %v2300, 32
        %v2416 = vpop.permute.xlu0 %2415
        %2417 = vrot.lane.b32.xlu0 %v2301, 32
        %v2418 = vpop.permute.xlu0 %2417
        %2419 = vrot.lane.b32.xlu0 %v2302, 32
        %v2420 = vpop.permute.xlu0 %2419
        %v2422 = vsel %vm2315, %v2406, 0
        %v2425 = vsel %vm2315, %v2408, 0
        %v2428 = vsel %vm2315, %v2410, 0
        %v2431 = vsel %vm2315, %v2412, 0
        %v2434 = vsel %vm2315, %v2414, 0
        %v2437 = vsel %vm2315, %v2416, 0
        %v2440 = vsel %vm2315, %v2418, 0
        %v2443 = vsel %vm2315, %v2420, 0
        %2445 = vmatprep.subr.bf16.mxu0 0
        %2446 = vmatpush1.bf16.xpose.msra.mxu0 %v2434
        %2447 = vmatprep.subr.bf16.mxu0 0
        %2448 = vmatpush1.bf16.xpose.msra.mxu0 %v2437
        %2449 = vmatprep.subr.bf16.mxu0 0
        %2450 = vmatpush1.bf16.xpose.msra.mxu0 %v2440
        %2451 = vmatprep.subr.bf16.mxu0 0
        %2452 = vmatpush1.bf16.xpose.msra.mxu0 %v2443
        %2453 = vmatprep.subr.bf16.mxu0 0
        %2454 = vmatpush1.bf16.xpose.msra.mxu0 0
        %2455 = vmatprep.subr.bf16.mxu0 0
        %2456 = vmatpush1.bf16.xpose.msra.mxu0 0
        %2457 = vmatprep.subr.bf16.mxu0 0
        %2458 = vmatpush1.bf16.xpose.msra.mxu0 0
        %2459 = vmatprep.subr.bf16.mxu0 0
        %2460 = vmatpush1.bf16.xpose.msra.mxu0 0
        %2461 = vmatprep.subr.bf16.mxu0 0
        %2462 = vmatpush1.bf16.xpose.msra.mxu0 0
        %2463 = vmatprep.subr.bf16.mxu0 0
        %2464 = vmatpush1.bf16.xpose.msra.mxu0 0
        %2465 = vmatprep.subr.bf16.mxu0 0
        %2466 = vmatpush1.bf16.xpose.msra.mxu0 0
        %2467 = vmatprep.subr.bf16.mxu0 0
        %2468 = vmatpush1.bf16.xpose.msra.mxu0 0
        %2469 = vmatprep.subr.bf16.mxu0 0
        %2470 = vmatpush1.bf16.xpose.msra.mxu0 0
        %2471 = vmatprep.subr.bf16.mxu0 0
        %2472 = vmatpush1.bf16.xpose.msra.mxu0 0
        %2473 = vmatprep.subr.bf16.mxu0 0
        %2474 = vmatpush1.bf16.xpose.msra.mxu0 0
        %2475 = vmatprep.subr.bf16.mxu0 0
        %2476 = vmatpush1.bf16.xpose.msra.mxu0 0
        %2477 = vmatprep.mubr.bf16.mxu0 0
        %2478 = vmatmul.mubr.bf16.gmra.mrb[0].mxu0 %v2422
        %v2479 = vpop.f32.mrb[0].mxu0
        %v2480 = vadd.f32 0.0, %v2479
        %v2481 = vpop.f32.mrb[0].mxu0
        %v2482 = vpop.f32.mrb[0].mxu0
        %v2483 = vadd.f32 0.0, %v2482
        %v2484 = vpop.f32.mrb[0].mxu0
        %2485 = vmatprep.mubr.bf16.mxu0 0
        %2486 = vmatmul.mubr.bf16.gmra.mrb[0].mxu0 %v2425
        %v2487 = vpop.f32.mrb[0].mxu0
        %v2488 = vadd.f32 0.0, %v2487
        %v2489 = vpop.f32.mrb[0].mxu0
        %v2490 = vpop.f32.mrb[0].mxu0
        %v2491 = vadd.f32 0.0, %v2490
        %v2492 = vpop.f32.mrb[0].mxu0
        %2493 = vmatprep.mubr.bf16.mxu0 0
        %2494 = vmatmul.mubr.bf16.gmra.mrb[0].mxu0 %v2428
        %v2495 = vpop.f32.mrb[0].mxu0
        %v2496 = vadd.f32 0.0, %v2495
        %v2497 = vpop.f32.mrb[0].mxu0
        %v2498 = vpop.f32.mrb[0].mxu0
        %v2499 = vadd.f32 0.0, %v2498
        %v2500 = vpop.f32.mrb[0].mxu0
        %2501 = vmatprep.mubr.bf16.mxu0 0
        %2502 = vmatmul.mubr.bf16.gmra.mrb[0].mxu0 %v2431
        %v2503 = vpop.f32.mrb[0].mxu0
        %v2504 = vadd.f32 0.0, %v2503
        %v2505 = vpop.f32.mrb[0].mxu0
        %v2506 = vpop.f32.mrb[0].mxu0
        %v2507 = vadd.f32 0.0, %v2506
        %v2508 = vpop.f32.mrb[0].mxu0
        %2509 = vdwg.mxu0
        %v2510 = vmul.f32 %v2375, 0.17677669
        %v2511 = vmul.f32 %v2378, 0.17677669
        %v2512 = vmul.f32 %v2383, 0.17677669
        %v2513 = vmul.f32 %v2386, 0.17677669
        %v2514 = vmul.f32 %v2391, 0.17677669
        %v2515 = vmul.f32 %v2394, 0.17677669
        %v2516 = vmul.f32 %v2399, 0.17677669
        %v2517 = vmul.f32 %v2402, 0.17677669
        %v2518 = vmul.f32 %v2480, 0.17677669
        %v2519 = vmul.f32 %v2483, 0.17677669
        %v2520 = vmul.f32 %v2488, 0.17677669
        %v2521 = vmul.f32 %v2491, 0.17677669
        %v2522 = vmul.f32 %v2496, 0.17677669
        %v2523 = vmul.f32 %v2499, 0.17677669
        %v2524 = vmul.f32 %v2504, 0.17677669
        %v2525 = vmul.f32 %v2507, 0.17677669
        %v2526 = vsel %vm884, %v2510, -inf
        %2527 = vmax.xlane.f32.xlu0 %v2526
        %v2528 = vpop.xlane.xlu0 %2527
        %v2529 = vsel %vm884, %v2511, -inf
        %2530 = vmax.xlane.f32.xlu0 %v2529
        %v2531 = vpop.xlane.xlu0 %2530
        %v2532 = vsel %vm884, %v2512, -inf
        %2533 = vmax.xlane.f32.xlu0 %v2532
        %v2534 = vpop.xlane.xlu0 %2533
        %v2535 = vsel %vm884, %v2513, -inf
        %2536 = vmax.xlane.f32.xlu0 %v2535
        %v2537 = vpop.xlane.xlu0 %2536
        %v2538 = vsel %vm884, %v2514, -inf
        %2539 = vmax.xlane.f32.xlu0 %v2538
        %v2540 = vpop.xlane.xlu0 %2539
        %v2541 = vsel %vm884, %v2515, -inf
        %2542 = vmax.xlane.f32.xlu0 %v2541
        %v2543 = vpop.xlane.xlu0 %2542
        %v2544 = vsel %vm884, %v2516, -inf
        %2545 = vmax.xlane.f32.xlu0 %v2544
        %v2546 = vpop.xlane.xlu0 %2545
        %v2547 = vsel %vm884, %v2517, -inf
        %2548 = vmax.xlane.f32.xlu0 %v2547
        %v2549 = vpop.xlane.xlu0 %2548
        %v2550 = vsel %vm884, %v2518, -inf
        %2551 = vmax.xlane.f32.xlu0 %v2550
        %v2552 = vpop.xlane.xlu0 %2551
        %v2553 = vsel %vm884, %v2519, -inf
        %2554 = vmax.xlane.f32.xlu0 %v2553
        %v2555 = vpop.xlane.xlu0 %2554
        %v2556 = vsel %vm884, %v2520, -inf
        %2557 = vmax.xlane.f32.xlu0 %v2556
        %v2558 = vpop.xlane.xlu0 %2557
        %v2559 = vsel %vm884, %v2521, -inf
        %2560 = vmax.xlane.f32.xlu0 %v2559
        %v2561 = vpop.xlane.xlu0 %2560
        %v2562 = vsel %vm884, %v2522, -inf
        %2563 = vmax.xlane.f32.xlu0 %v2562
        %v2564 = vpop.xlane.xlu0 %2563
        %v2565 = vsel %vm884, %v2523, -inf
        %2566 = vmax.xlane.f32.xlu0 %v2565
        %v2567 = vpop.xlane.xlu0 %2566
        %v2568 = vsel %vm884, %v2524, -inf
        %2569 = vmax.xlane.f32.xlu0 %v2568
        %v2570 = vpop.xlane.xlu0 %2569
        %v2571 = vsel %vm884, %v2525, -inf
        %2572 = vmax.xlane.f32.xlu0 %v2571
        %v2573 = vpop.xlane.xlu0 %2572
        %v2574 = vsub.f32 %v2510, %v2528
        %v2575 = vsub.f32 %v2511, %v2531
        %v2576 = vsub.f32 %v2512, %v2534
        %v2577 = vsub.f32 %v2513, %v2537
        %v2578 = vsub.f32 %v2514, %v2540
        %v2579 = vsub.f32 %v2515, %v2543
        %v2580 = vsub.f32 %v2516, %v2546
        %v2581 = vsub.f32 %v2517, %v2549
        %v2582 = vsub.f32 %v2518, %v2552
        %v2583 = vsub.f32 %v2519, %v2555
        %v2584 = vsub.f32 %v2520, %v2558
        %v2585 = vsub.f32 %v2521, %v2561
        %v2586 = vsub.f32 %v2522, %v2564
        %v2587 = vsub.f32 %v2523, %v2567
        %v2588 = vsub.f32 %v2524, %v2570
        %v2589 = vsub.f32 %v2525, %v2573
        %v2590 = vmul.f32 %v2574, 1.442695
        %v2591 = vpow.pop %v2590
        %v2592 = vmul.f32 %v2575, 1.442695
        %v2593 = vpow.pop %v2592
        %v2594 = vmul.f32 %v2576, 1.442695
        %v2595 = vpow.pop %v2594
        %v2596 = vmul.f32 %v2577, 1.442695
        %v2597 = vpow.pop %v2596
        %v2598 = vmul.f32 %v2578, 1.442695
        %v2599 = vpow.pop %v2598
        %v2600 = vmul.f32 %v2579, 1.442695
        %v2601 = vpow.pop %v2600
        %v2602 = vmul.f32 %v2580, 1.442695
        %v2603 = vpow.pop %v2602
        %v2604 = vmul.f32 %v2581, 1.442695
        %v2605 = vpow.pop %v2604
        %v2606 = vmul.f32 %v2582, 1.442695
        %v2607 = vpow.pop %v2606
        %v2608 = vmul.f32 %v2583, 1.442695
        %v2609 = vpow.pop %v2608
        %v2610 = vmul.f32 %v2584, 1.442695
        %v2611 = vpow.pop %v2610
        %v2612 = vmul.f32 %v2585, 1.442695
        %v2613 = vpow.pop %v2612
        %v2614 = vmul.f32 %v2586, 1.442695
        %v2615 = vpow.pop %v2614
        %v2616 = vmul.f32 %v2587, 1.442695
        %v2617 = vpow.pop %v2616
        %v2618 = vmul.f32 %v2588, 1.442695
        %v2619 = vpow.pop %v2618
        %v2620 = vmul.f32 %v2589, 1.442695
        %v2621 = vpow.pop %v2620
        %v2622 = vsel %vm884, %v2591, 0.0
        %2623 = vadd.xlane.f32.xlu0 %v2622
        %v2624 = vpop.xlane.xlu0 %2623
        %v2625 = vsel %vm884, %v2593, 0.0
        %2626 = vadd.xlane.f32.xlu0 %v2625
        %v2627 = vpop.xlane.xlu0 %2626
        %v2628 = vsel %vm884, %v2595, 0.0
        %2629 = vadd.xlane.f32.xlu0 %v2628
        %v2630 = vpop.xlane.xlu0 %2629
        %v2631 = vsel %vm884, %v2597, 0.0
        %2632 = vadd.xlane.f32.xlu0 %v2631
        %v2633 = vpop.xlane.xlu0 %2632
        %v2634 = vsel %vm884, %v2599, 0.0
        %2635 = vadd.xlane.f32.xlu0 %v2634
        %v2636 = vpop.xlane.xlu0 %2635
        %v2637 = vsel %vm884, %v2601, 0.0
        %2638 = vadd.xlane.f32.xlu0 %v2637
        %v2639 = vpop.xlane.xlu0 %2638
        %v2640 = vsel %vm884, %v2603, 0.0
        %2641 = vadd.xlane.f32.xlu0 %v2640
        %v2642 = vpop.xlane.xlu0 %2641
        %v2643 = vsel %vm884, %v2605, 0.0
        %2644 = vadd.xlane.f32.xlu0 %v2643
        %v2645 = vpop.xlane.xlu0 %2644
        %v2646 = vsel %vm884, %v2607, 0.0
        %2647 = vadd.xlane.f32.xlu0 %v2646
        %v2648 = vpop.xlane.xlu0 %2647
        %v2649 = vsel %vm884, %v2609, 0.0
        %2650 = vadd.xlane.f32.xlu0 %v2649
        %v2651 = vpop.xlane.xlu0 %2650
        %v2652 = vsel %vm884, %v2611, 0.0
        %2653 = vadd.xlane.f32.xlu0 %v2652
        %v2654 = vpop.xlane.xlu0 %2653
        %v2655 = vsel %vm884, %v2613, 0.0
        %2656 = vadd.xlane.f32.xlu0 %v2655
        %v2657 = vpop.xlane.xlu0 %2656
        %v2658 = vsel %vm884, %v2615, 0.0
        %2659 = vadd.xlane.f32.xlu0 %v2658
        %v2660 = vpop.xlane.xlu0 %2659
        %v2661 = vsel %vm884, %v2617, 0.0
        %2662 = vadd.xlane.f32.xlu0 %v2661
        %v2663 = vpop.xlane.xlu0 %2662
        %v2664 = vsel %vm884, %v2619, 0.0
        %2665 = vadd.xlane.f32.xlu0 %v2664
        %v2666 = vpop.xlane.xlu0 %2665
        %v2667 = vsel %vm884, %v2621, 0.0
        %2668 = vadd.xlane.f32.xlu0 %v2667
        %v2669 = vpop.xlane.xlu0 %2668
        %v2670 = vrcp.pop %v2624
        %v2671 = vrcp.pop %v2627
        %v2672 = vrcp.pop %v2630
        %v2673 = vrcp.pop %v2633
        %v2674 = vrcp.pop %v2636
        %v2675 = vrcp.pop %v2639
        %v2676 = vrcp.pop %v2642
        %v2677 = vrcp.pop %v2645
        %v2678 = vrcp.pop %v2648
        %v2679 = vrcp.pop %v2651
        %v2680 = vrcp.pop %v2654
        %v2681 = vrcp.pop %v2657
        %v2682 = vrcp.pop %v2660
        %v2683 = vrcp.pop %v2663
        %v2684 = vrcp.pop %v2666
        %v2685 = vrcp.pop %v2669
        %v2686 = vmul.f32 %v2591, %v2670
        %v2687 = vmul.f32 %v2593, %v2671
        %v2688 = vmul.f32 %v2595, %v2672
        %v2689 = vmul.f32 %v2597, %v2673
        %v2690 = vmul.f32 %v2599, %v2674
        %v2691 = vmul.f32 %v2601, %v2675
        %v2692 = vmul.f32 %v2603, %v2676
        %v2693 = vmul.f32 %v2605, %v2677
        %v2694 = vmul.f32 %v2607, %v2678
        %v2695 = vmul.f32 %v2609, %v2679
        %v2696 = vmul.f32 %v2611, %v2680
        %v2697 = vmul.f32 %v2613, %v2681
        %v2698 = vmul.f32 %v2615, %v2682
        %v2699 = vmul.f32 %v2617, %v2683
        %v2700 = vmul.f32 %v2619, %v2684
        %v2701 = vmul.f32 %v2621, %v2685
        %v2702 = vpack.c.bf16 %v2687, %v2686
        %v2703 = vpack.c.bf16 %v2689, %v2688
        %v2704 = vpack.c.bf16 %v2691, %v2690
        %v2705 = vpack.c.bf16 %v2693, %v2692
        %v2706 = vpack.c.bf16 %v2267, %v2263
        %v2707 = vpack.c.bf16 %v2277, %v2273
        %v2708 = vpack.c.bf16 %v2287, %v2283
        %v2709 = vpack.c.bf16 %v2297, %v2293
        %v2711 = vsel %vm884, %v2702, 0
        %v2714 = vsel %vm884, %v2703, 0
        %v2717 = vsel %vm884, %v2704, 0
        %v2720 = vsel %vm884, %v2705, 0
        %2722 = vmatprep.subr.bf16.mxu0 0
        %2723 = vmatpush1.bf16.msra.mxu0 %v2706
        %2724 = vmatprep.subr.bf16.mxu0 0
        %2725 = vmatpush1.bf16.msra.mxu0 %v2707
        %2726 = vmatprep.subr.bf16.mxu0 0
        %2727 = vmatpush1.bf16.msra.mxu0 %v2708
        %2728 = vmatprep.subr.bf16.mxu0 0
        %2729 = vmatpush1.bf16.msra.mxu0 %v2709
        %2730 = vmatprep.subr.bf16.mxu0 0
        %2731 = vmatpush1.bf16.msra.mxu0 0
        %2732 = vmatprep.subr.bf16.mxu0 0
        %2733 = vmatpush1.bf16.msra.mxu0 0
        %2734 = vmatprep.subr.bf16.mxu0 0
        %2735 = vmatpush1.bf16.msra.mxu0 0
        %2736 = vmatprep.subr.bf16.mxu0 0
        %2737 = vmatpush1.bf16.msra.mxu0 0
        %2738 = vmatprep.subr.bf16.mxu0 0
        %2739 = vmatpush1.bf16.msra.mxu0 0
        %2740 = vmatprep.subr.bf16.mxu0 0
        %2741 = vmatpush1.bf16.msra.mxu0 0
        %2742 = vmatprep.subr.bf16.mxu0 0
        %2743 = vmatpush1.bf16.msra.mxu0 0
        %2744 = vmatprep.subr.bf16.mxu0 0
        %2745 = vmatpush1.bf16.msra.mxu0 0
        %2746 = vmatprep.subr.bf16.mxu0 0
        %2747 = vmatpush1.bf16.msra.mxu0 0
        %2748 = vmatprep.subr.bf16.mxu0 0
        %2749 = vmatpush1.bf16.msra.mxu0 0
        %2750 = vmatprep.subr.bf16.mxu0 0
        %2751 = vmatpush1.bf16.msra.mxu0 0
        %2752 = vmatprep.subr.bf16.mxu0 0
        %2753 = vmatpush1.bf16.msra.mxu0 0
        %2754 = vmatprep.mubr.bf16.mxu0 0
        %2755 = vmatmul.mubr.bf16.gmra.mrb[0].mxu0 %v2711
        %v2756 = vpop.f32.mrb[0].mxu0
        %v2757 = vadd.f32 0.0, %v2756
        %v2758 = vpop.f32.mrb[0].mxu0
        %v2759 = vpop.f32.mrb[0].mxu0
        %v2760 = vadd.f32 0.0, %v2759
        %v2761 = vpop.f32.mrb[0].mxu0
        %2762 = vmatprep.mubr.bf16.mxu0 0
        %2763 = vmatmul.mubr.bf16.gmra.mrb[0].mxu0 %v2714
        %v2764 = vpop.f32.mrb[0].mxu0
        %v2765 = vadd.f32 0.0, %v2764
        %v2766 = vpop.f32.mrb[0].mxu0
        %v2767 = vpop.f32.mrb[0].mxu0
        %v2768 = vadd.f32 0.0, %v2767
        %v2769 = vpop.f32.mrb[0].mxu0
        %2770 = vmatprep.mubr.bf16.mxu0 0
        %2771 = vmatmul.mubr.bf16.gmra.mrb[0].mxu0 %v2717
        %v2772 = vpop.f32.mrb[0].mxu0
        %v2773 = vadd.f32 0.0, %v2772
        %v2774 = vpop.f32.mrb[0].mxu0
        %v2775 = vpop.f32.mrb[0].mxu0
        %v2776 = vadd.f32 0.0, %v2775
        %v2777 = vpop.f32.mrb[0].mxu0
        %2778 = vmatprep.mubr.bf16.mxu0 0
        %2779 = vmatmul.mubr.bf16.gmra.mrb[0].mxu0 %v2720
        %v2780 = vpop.f32.mrb[0].mxu0
        %v2781 = vadd.f32 0.0, %v2780
        %v2782 = vpop.f32.mrb[0].mxu0
        %v2783 = vpop.f32.mrb[0].mxu0
        %v2784 = vadd.f32 0.0, %v2783
        %v2785 = vpop.f32.mrb[0].mxu0
        %2786 = vdwg.mxu0
        %v2787 = vpack.c.bf16 %v2760, %v2757
        %v2788 = vpack.c.bf16 %v2768, %v2765
        %v2789 = vpack.c.bf16 %v2776, %v2773
        %v2790 = vpack.c.bf16 %v2784, %v2781
        %v2791 = vld [vmem:[%s10] sm:$0xf]
        %v2792 = vld [vmem:[%s10 + $0x4] sm:$0xf]
        %v2793 = vld [vmem:[%s10 + $0x8] sm:$0xf]
        %v2794 = vld [vmem:[%s10 + $0xc] sm:$0xf]
        %v2795 = vpack.c.bf16 %v2695, %v2694
        %v2796 = vpack.c.bf16 %v2697, %v2696
        %v2797 = vpack.c.bf16 %v2699, %v2698
        %v2798 = vpack.c.bf16 %v2701, %v2700
        %2803 = vrot.lane.b32.xlu0 %v2706, 96
        %v2804 = vpop.permute.xlu0 %2803
        %2805 = vrot.lane.b32.xlu0 %v2707, 96
        %v2806 = vpop.permute.xlu0 %2805
        %2807 = vrot.lane.b32.xlu0 %v2708, 96
        %v2808 = vpop.permute.xlu0 %2807
        %2809 = vrot.lane.b32.xlu0 %v2709, 96
        %v2810 = vpop.permute.xlu0 %2809
        %v2816 = vsel %vm884, %v2795, 0
        %v2819 = vsel %vm884, %v2796, 0
        %v2822 = vsel %vm884, %v2797, 0
        %v2825 = vsel %vm884, %v2798, 0
        %2827 = vmatprep.subr.bf16.mxu0 0
        %2828 = vmatpush1.bf16.msra.mxu0 %v2804
        %2829 = vmatprep.subr.bf16.mxu0 0
        %2830 = vmatpush1.bf16.msra.mxu0 %v2806
        %2831 = vmatprep.subr.bf16.mxu0 0
        %2832 = vmatpush1.bf16.msra.mxu0 %v2808
        %2833 = vmatprep.subr.bf16.mxu0 0
        %2834 = vmatpush1.bf16.msra.mxu0 %v2810
        %2835 = vmatprep.subr.bf16.mxu0 0
        %2836 = vmatpush1.bf16.msra.mxu0 0
        %2837 = vmatprep.subr.bf16.mxu0 0
        %2838 = vmatpush1.bf16.msra.mxu0 0
        %2839 = vmatprep.subr.bf16.mxu0 0
        %2840 = vmatpush1.bf16.msra.mxu0 0
        %2841 = vmatprep.subr.bf16.mxu0 0
        %2842 = vmatpush1.bf16.msra.mxu0 0
        %2843 = vmatprep.subr.bf16.mxu0 0
        %2844 = vmatpush1.bf16.msra.mxu0 0
        %2845 = vmatprep.subr.bf16.mxu0 0
        %2846 = vmatpush1.bf16.msra.mxu0 0
        %2847 = vmatprep.subr.bf16.mxu0 0
        %2848 = vmatpush1.bf16.msra.mxu0 0
        %2849 = vmatprep.subr.bf16.mxu0 0
        %2850 = vmatpush1.bf16.msra.mxu0 0
        %2851 = vmatprep.subr.bf16.mxu0 0
        %2852 = vmatpush1.bf16.msra.mxu0 0
        %2853 = vmatprep.subr.bf16.mxu0 0
        %2854 = vmatpush1.bf16.msra.mxu0 0
        %2855 = vmatprep.subr.bf16.mxu0 0
        %2856 = vmatpush1.bf16.msra.mxu0 0
        %2857 = vmatprep.subr.bf16.mxu0 0
        %2858 = vmatpush1.bf16.msra.mxu0 0
        %2859 = vmatprep.mubr.bf16.mxu0 0
        %2860 = vmatmul.mubr.bf16.gmra.mrb[0].mxu0 %v2816
        %v2861 = vpop.f32.mrb[0].mxu0
        %v2862 = vadd.f32 0.0, %v2861
        %v2863 = vpop.f32.mrb[0].mxu0
        %v2864 = vpop.f32.mrb[0].mxu0
        %v2865 = vadd.f32 0.0, %v2864
        %v2866 = vpop.f32.mrb[0].mxu0
        %2867 = vmatprep.mubr.bf16.mxu0 0
        %2868 = vmatmul.mubr.bf16.gmra.mrb[0].mxu0 %v2819
        %v2869 = vpop.f32.mrb[0].mxu0
        %v2870 = vadd.f32 0.0, %v2869
        %v2871 = vpop.f32.mrb[0].mxu0
        %v2872 = vpop.f32.mrb[0].mxu0
        %v2873 = vadd.f32 0.0, %v2872
        %v2874 = vpop.f32.mrb[0].mxu0
        %2875 = vmatprep.mubr.bf16.mxu0 0
        %2876 = vmatmul.mubr.bf16.gmra.mrb[0].mxu0 %v2822
        %v2877 = vpop.f32.mrb[0].mxu0
        %v2878 = vadd.f32 0.0, %v2877
        %v2879 = vpop.f32.mrb[0].mxu0
        %v2880 = vpop.f32.mrb[0].mxu0
        %v2881 = vadd.f32 0.0, %v2880
        %v2882 = vpop.f32.mrb[0].mxu0
        %2883 = vmatprep.mubr.bf16.mxu0 0
        %2884 = vmatmul.mubr.bf16.gmra.mrb[0].mxu0 %v2825
        %v2885 = vpop.f32.mrb[0].mxu0
        %v2886 = vadd.f32 0.0, %v2885
        %v2887 = vpop.f32.mrb[0].mxu0
        %v2888 = vpop.f32.mrb[0].mxu0
        %v2889 = vadd.f32 0.0, %v2888
        %v2890 = vpop.f32.mrb[0].mxu0
        %2891 = vdwg.mxu0
        %v2892 = vpack.c.bf16 %v2865, %v2862
        %v2893 = vpack.c.bf16 %v2873, %v2870
        %v2894 = vpack.c.bf16 %v2881, %v2878
        %v2895 = vpack.c.bf16 %v2889, %v2886
        %v2896 = vld [vmem:[%s10 + $0x10] sm:$0xf]
        %v2897 = vld [vmem:[%s10 + $0x14] sm:$0xf]
        %v2898 = vld [vmem:[%s10 + $0x18] sm:$0xf]
        %v2899 = vld [vmem:[%s10 + $0x1c] sm:$0xf]
        %v2904 = vunpack.c.l.b16 %v2896
        %v2905 = vunpack.c.l.b16 %v2897
        %v2906 = vunpack.c.l.b16 %v2898
        %v2907 = vunpack.c.l.b16 %v2899
        %v2908 = vpack.c.b16 %v2905, %v2904
        %v2909 = vpack.c.b16 %v2907, %v2906
        %v2913 = vsel %vm2315, %v2892, 0
        %v2916 = vsel %vm2315, %v2893, 0
        %v2919 = vsel %vm2315, %v2894, 0
        %v2922 = vsel %vm2315, %v2895, 0
        %2924 = vmatprep.subr.bf16.mxu0 0
        %2925 = vmatpush1.bf16.msra.mxu0 %v2908
        %2926 = vmatprep.subr.bf16.mxu0 0
        %2927 = vmatpush1.bf16.msra.mxu0 %v2909
        %2928 = vmatprep.subr.bf16.mxu0 0
        %2929 = vmatpush1.bf16.msra.mxu0 0
        %2930 = vmatprep.subr.bf16.mxu0 0
        %2931 = vmatpush1.bf16.msra.mxu0 0
        %2932 = vmatprep.subr.bf16.mxu0 0
        %2933 = vmatpush1.bf16.msra.mxu0 0
        %2934 = vmatprep.subr.bf16.mxu0 0
        %2935 = vmatpush1.bf16.msra.mxu0 0
        %2936 = vmatprep.subr.bf16.mxu0 0
        %2937 = vmatpush1.bf16.msra.mxu0 0
        %2938 = vmatprep.subr.bf16.mxu0 0
        %2939 = vmatpush1.bf16.msra.mxu0 0
        %2940 = vmatprep.subr.bf16.mxu0 0
        %2941 = vmatpush1.bf16.msra.mxu0 0
        %2942 = vmatprep.subr.bf16.mxu0 0
        %2943 = vmatpush1.bf16.msra.mxu0 0
        %2944 = vmatprep.subr.bf16.mxu0 0
        %2945 = vmatpush1.bf16.msra.mxu0 0
        %2946 = vmatprep.subr.bf16.mxu0 0
        %2947 = vmatpush1.bf16.msra.mxu0 0
        %2948 = vmatprep.subr.bf16.mxu0 0
        %2949 = vmatpush1.bf16.msra.mxu0 0
        %2950 = vmatprep.subr.bf16.mxu0 0
        %2951 = vmatpush1.bf16.msra.mxu0 0
        %2952 = vmatprep.subr.bf16.mxu0 0
        %2953 = vmatpush1.bf16.msra.mxu0 0
        %2954 = vmatprep.subr.bf16.mxu0 0
        %2955 = vmatpush1.bf16.msra.mxu0 0
        %2956 = vmatprep.mubr.bf16.mxu0 0
        %2957 = vmatmul.mubr.bf16.gmra.mrb[0].mxu0 %v2913
        %v2958 = vpop.f32.mrb[0].mxu0
        %v2959 = vadd.f32 0.0, %v2958
        %v2960 = vpop.f32.mrb[0].mxu0
        %v2961 = vpop.f32.mrb[0].mxu0
        %v2962 = vadd.f32 0.0, %v2961
        %v2963 = vpop.f32.mrb[0].mxu0
        %2964 = vmatprep.mubr.bf16.mxu0 0
        %2965 = vmatmul.mubr.bf16.gmra.mrb[0].mxu0 %v2916
        %v2966 = vpop.f32.mrb[0].mxu0
        %v2967 = vadd.f32 0.0, %v2966
        %v2968 = vpop.f32.mrb[0].mxu0
        %v2969 = vpop.f32.mrb[0].mxu0
        %v2970 = vadd.f32 0.0, %v2969
        %v2971 = vpop.f32.mrb[0].mxu0
        %2972 = vmatprep.mubr.bf16.mxu0 0
        %2973 = vmatmul.mubr.bf16.gmra.mrb[0].mxu0 %v2919
        %v2974 = vpop.f32.mrb[0].mxu0
        %v2975 = vadd.f32 0.0, %v2974
        %v2976 = vpop.f32.mrb[0].mxu0
        %v2977 = vpop.f32.mrb[0].mxu0
        %v2978 = vadd.f32 0.0, %v2977
        %v2979 = vpop.f32.mrb[0].mxu0
        %2980 = vmatprep.mubr.bf16.mxu0 0
        %2981 = vmatmul.mubr.bf16.gmra.mrb[0].mxu0 %v2922
        %v2982 = vpop.f32.mrb[0].mxu0
        %v2983 = vadd.f32 0.0, %v2982
        %v2984 = vpop.f32.mrb[0].mxu0
        %v2985 = vpop.f32.mrb[0].mxu0
        %v2986 = vadd.f32 0.0, %v2985
        %v2987 = vpop.f32.mrb[0].mxu0
        %2988 = vdwg.mxu0
        %v2993 = vunpack.c.l.b16 %v2791
        %v2994 = vunpack.c.l.b16 %v2792
        %v2995 = vunpack.c.l.b16 %v2793
        %v2996 = vunpack.c.l.b16 %v2794
        %v2997 = vpack.c.b16 %v2994, %v2993
        %v2998 = vpack.c.b16 %v2996, %v2995
        %v3002 = vsel %vm2315, %v2787, 0
        %v3005 = vsel %vm2315, %v2788, 0
        %v3008 = vsel %vm2315, %v2789, 0
        %v3011 = vsel %vm2315, %v2790, 0
        %3013 = vmatprep.subr.bf16.mxu0 0
        %3014 = vmatpush1.bf16.msra.mxu0 %v2997
        %3015 = vmatprep.subr.bf16.mxu0 0
        %3016 = vmatpush1.bf16.msra.mxu0 %v2998
        %3017 = vmatprep.subr.bf16.mxu0 0
        %3018 = vmatpush1.bf16.msra.mxu0 0
        %3019 = vmatprep.subr.bf16.mxu0 0
        %3020 = vmatpush1.bf16.msra.mxu0 0
        %3021 = vmatprep.subr.bf16.mxu0 0
        %3022 = vmatpush1.bf16.msra.mxu0 0
        %3023 = vmatprep.subr.bf16.mxu0 0
        %3024 = vmatpush1.bf16.msra.mxu0 0
        %3025 = vmatprep.subr.bf16.mxu0 0
        %3026 = vmatpush1.bf16.msra.mxu0 0
        %3027 = vmatprep.subr.bf16.mxu0 0
        %3028 = vmatpush1.bf16.msra.mxu0 0
        %3029 = vmatprep.subr.bf16.mxu0 0
        %3030 = vmatpush1.bf16.msra.mxu0 0
        %3031 = vmatprep.subr.bf16.mxu0 0
        %3032 = vmatpush1.bf16.msra.mxu0 0
        %3033 = vmatprep.subr.bf16.mxu0 0
        %3034 = vmatpush1.bf16.msra.mxu0 0
        %3035 = vmatprep.subr.bf16.mxu0 0
        %3036 = vmatpush1.bf16.msra.mxu0 0
        %3037 = vmatprep.subr.bf16.mxu0 0
        %3038 = vmatpush1.bf16.msra.mxu0 0
        %3039 = vmatprep.subr.bf16.mxu0 0
        %3040 = vmatpush1.bf16.msra.mxu0 0
        %3041 = vmatprep.subr.bf16.mxu0 0
        %3042 = vmatpush1.bf16.msra.mxu0 0
        %3043 = vmatprep.subr.bf16.mxu0 0
        %3044 = vmatpush1.bf16.msra.mxu0 0
        %3045 = vmatprep.mubr.bf16.mxu0 0
        %3046 = vmatmul.mubr.bf16.gmra.mrb[0].mxu0 %v3002
        %v3047 = vpop.f32.mrb[0].mxu0
        %v3048 = vadd.f32 %v2959, %v3047
        %v3049 = vpop.f32.mrb[0].mxu0
        %v3050 = vpop.f32.mrb[0].mxu0
        %v3051 = vadd.f32 %v2962, %v3050
        %v3052 = vpop.f32.mrb[0].mxu0
        %3053 = vmatprep.mubr.bf16.mxu0 0
        %3054 = vmatmul.mubr.bf16.gmra.mrb[0].mxu0 %v3005
        %v3055 = vpop.f32.mrb[0].mxu0
        %v3056 = vadd.f32 %v2967, %v3055
        %v3057 = vpop.f32.mrb[0].mxu0
        %v3058 = vpop.f32.mrb[0].mxu0
        %v3059 = vadd.f32 %v2970, %v3058
        %v3060 = vpop.f32.mrb[0].mxu0
        %3061 = vmatprep.mubr.bf16.mxu0 0
        %3062 = vmatmul.mubr.bf16.gmra.mrb[0].mxu0 %v3008
        %v3063 = vpop.f32.mrb[0].mxu0
        %v3064 = vadd.f32 %v2975, %v3063
        %v3065 = vpop.f32.mrb[0].mxu0
        %v3066 = vpop.f32.mrb[0].mxu0
        %v3067 = vadd.f32 %v2978, %v3066
        %v3068 = vpop.f32.mrb[0].mxu0
        %3069 = vmatprep.mubr.bf16.mxu0 0
        %3070 = vmatmul.mubr.bf16.gmra.mrb[0].mxu0 %v3011
        %v3071 = vpop.f32.mrb[0].mxu0
        %v3072 = vadd.f32 %v2983, %v3071
        %v3073 = vpop.f32.mrb[0].mxu0
        %v3074 = vpop.f32.mrb[0].mxu0
        %v3075 = vadd.f32 %v2986, %v3074
        %v3076 = vpop.f32.mrb[0].mxu0
        %3077 = vdwg.mxu0
        %v3078 = vld [vmem:[%s11] sm:$0x1]
        %v3080 = vlaneseq
        %v3081 = vshrl.u32 %v3080, 7
        %v3082 = vsub.s32 0, %v3081
        %v3083 = vrot.slane %v3078, %v3082
        %v3085 = vadd.f32 %v3048, %v3083
        %v3086 = vadd.f32 %v3051, %v3083
        %v3087 = vadd.f32 %v3056, %v3083
        %v3088 = vadd.f32 %v3059, %v3083
        %v3089 = vadd.f32 %v3064, %v3083
        %v3090 = vadd.f32 %v3067, %v3083
        %v3091 = vadd.f32 %v3072, %v3083
        %v3092 = vadd.f32 %v3075, %v3083
        %v3093 = vadd.f32 %v3085, %v2019
        %v3094 = vadd.f32 %v3086, %v2020
        %v3095 = vadd.f32 %v3087, %v2021
        %v3096 = vadd.f32 %v3088, %v2022
        %v3097 = vadd.f32 %v3089, %v2023
        %v3098 = vadd.f32 %v3090, %v2024
        %v3099 = vadd.f32 %v3091, %v2025
        %v3100 = vadd.f32 %v3092, %v2026
        %v3101 = vld [vmem:[%s12] sm:$0x1]
        %v3102 = vld [vmem:[%s13] sm:$0x1]
        %v3103 = vsel %vm884, %v3093, 0.0
        %3104 = vadd.xlane.f32.xlu0 %v3103
        %v3105 = vpop.xlane.xlu0 %3104
        %v3106 = vsel %vm884, %v3094, 0.0
        %3107 = vadd.xlane.f32.xlu0 %v3106
        %v3108 = vpop.xlane.xlu0 %3107
        %v3109 = vsel %vm884, %v3095, 0.0
        %3110 = vadd.xlane.f32.xlu0 %v3109
        %v3111 = vpop.xlane.xlu0 %3110
        %v3112 = vsel %vm884, %v3096, 0.0
        %3113 = vadd.xlane.f32.xlu0 %v3112
        %v3114 = vpop.xlane.xlu0 %3113
        %v3115 = vsel %vm884, %v3097, 0.0
        %3116 = vadd.xlane.f32.xlu0 %v3115
        %v3117 = vpop.xlane.xlu0 %3116
        %v3118 = vsel %vm884, %v3098, 0.0
        %3119 = vadd.xlane.f32.xlu0 %v3118
        %v3120 = vpop.xlane.xlu0 %3119
        %v3121 = vsel %vm884, %v3099, 0.0
        %3122 = vadd.xlane.f32.xlu0 %v3121
        %v3123 = vpop.xlane.xlu0 %3122
        %v3124 = vsel %vm884, %v3100, 0.0
        %3125 = vadd.xlane.f32.xlu0 %v3124
        %v3126 = vpop.xlane.xlu0 %3125
        %v3127 = vmul.f32 %v3105, %v2053
        %v3128 = vmul.f32 %v3108, %v2053
        %v3129 = vmul.f32 %v3111, %v2053
        %v3130 = vmul.f32 %v3114, %v2053
        %v3131 = vmul.f32 %v3117, %v2053
        %v3132 = vmul.f32 %v3120, %v2053
        %v3133 = vmul.f32 %v3123, %v2053
        %v3134 = vmul.f32 %v3126, %v2053
        %v3135 = vsub.f32 %v3093, %v3127
        %v3136 = vsub.f32 %v3094, %v3128
        %v3137 = vsub.f32 %v3095, %v3129
        %v3138 = vsub.f32 %v3096, %v3130
        %v3139 = vsub.f32 %v3097, %v3131
        %v3140 = vsub.f32 %v3098, %v3132
        %v3141 = vsub.f32 %v3099, %v3133
        %v3142 = vsub.f32 %v3100, %v3134
        %v3143 = vmul.f32 %v3135, %v3135
        %v3144 = vmul.f32 %v3136, %v3136
        %v3145 = vmul.f32 %v3137, %v3137
        %v3146 = vmul.f32 %v3138, %v3138
        %v3147 = vmul.f32 %v3139, %v3139
        %v3148 = vmul.f32 %v3140, %v3140
        %v3149 = vmul.f32 %v3141, %v3141
        %v3150 = vmul.f32 %v3142, %v3142
        %v3151 = vsel %vm884, %v3143, 0.0
        %3152 = vadd.xlane.f32.xlu0 %v3151
        %v3153 = vpop.xlane.xlu0 %3152
        %v3154 = vsel %vm884, %v3144, 0.0
        %3155 = vadd.xlane.f32.xlu0 %v3154
        %v3156 = vpop.xlane.xlu0 %3155
        %v3157 = vsel %vm884, %v3145, 0.0
        %3158 = vadd.xlane.f32.xlu0 %v3157
        %v3159 = vpop.xlane.xlu0 %3158
        %v3160 = vsel %vm884, %v3146, 0.0
        %3161 = vadd.xlane.f32.xlu0 %v3160
        %v3162 = vpop.xlane.xlu0 %3161
        %v3163 = vsel %vm884, %v3147, 0.0
        %3164 = vadd.xlane.f32.xlu0 %v3163
        %v3165 = vpop.xlane.xlu0 %3164
        %v3166 = vsel %vm884, %v3148, 0.0
        %3167 = vadd.xlane.f32.xlu0 %v3166
        %v3168 = vpop.xlane.xlu0 %3167
        %v3169 = vsel %vm884, %v3149, 0.0
        %3170 = vadd.xlane.f32.xlu0 %v3169
        %v3171 = vpop.xlane.xlu0 %3170
        %v3172 = vsel %vm884, %v3150, 0.0
        %3173 = vadd.xlane.f32.xlu0 %v3172
        %v3174 = vpop.xlane.xlu0 %3173
        %v3175 = vmul.f32 %v3153, %v2053
        %v3176 = vmul.f32 %v3156, %v2053
        %v3177 = vmul.f32 %v3159, %v2053
        %v3178 = vmul.f32 %v3162, %v2053
        %v3179 = vmul.f32 %v3165, %v2053
        %v3180 = vmul.f32 %v3168, %v2053
        %v3181 = vmul.f32 %v3171, %v2053
        %v3182 = vmul.f32 %v3174, %v2053
        %v3183 = vadd.f32 %v3175, 1e-05
        %v3184 = vadd.f32 %v3176, 1e-05
        %v3185 = vadd.f32 %v3177, 1e-05
        %v3186 = vadd.f32 %v3178, 1e-05
        %v3187 = vadd.f32 %v3179, 1e-05
        %v3188 = vadd.f32 %v3180, 1e-05
        %v3189 = vadd.f32 %v3181, 1e-05
        %v3190 = vadd.f32 %v3182, 1e-05
        %v3191 = vrsqrt.pop %v3183
        %v3192 = vrsqrt.pop %v3184
        %v3193 = vrsqrt.pop %v3185
        %v3194 = vrsqrt.pop %v3186
        %v3195 = vrsqrt.pop %v3187
        %v3196 = vrsqrt.pop %v3188
        %v3197 = vrsqrt.pop %v3189
        %v3198 = vrsqrt.pop %v3190
        %v3199 = vmul.f32 %v3135, %v3191
        %v3200 = vmul.f32 %v3136, %v3192
        %v3201 = vmul.f32 %v3137, %v3193
        %v3202 = vmul.f32 %v3138, %v3194
        %v3203 = vmul.f32 %v3139, %v3195
        %v3204 = vmul.f32 %v3140, %v3196
        %v3205 = vmul.f32 %v3141, %v3197
        %v3206 = vmul.f32 %v3142, %v3198
        %v3208 = vlaneseq
        %v3209 = vshrl.u32 %v3208, 7
        %v3210 = vsub.s32 0, %v3209
        %v3211 = vrot.slane %v3101, %v3210
        %v3213 = vmul.f32 %v3199, %v3211
        %v3214 = vmul.f32 %v3200, %v3211
        %v3215 = vmul.f32 %v3201, %v3211
        %v3216 = vmul.f32 %v3202, %v3211
        %v3217 = vmul.f32 %v3203, %v3211
        %v3218 = vmul.f32 %v3204, %v3211
        %v3219 = vmul.f32 %v3205, %v3211
        %v3220 = vmul.f32 %v3206, %v3211
        %v3222 = vlaneseq
        %v3223 = vshrl.u32 %v3222, 7
        %v3224 = vsub.s32 0, %v3223
        %v3225 = vrot.slane %v3102, %v3224
        %v3227 = vadd.f32 %v3213, %v3225
        %v3228 = vadd.f32 %v3214, %v3225
        %v3229 = vadd.f32 %v3215, %v3225
        %v3230 = vadd.f32 %v3216, %v3225
        %v3231 = vadd.f32 %v3217, %v3225
        %v3232 = vadd.f32 %v3218, %v3225
        %v3233 = vadd.f32 %v3219, %v3225
        %v3234 = vadd.f32 %v3220, %v3225
        %v3235 = vpack.c.bf16 %v3228, %v3227
        %v3236 = vpack.c.bf16 %v3230, %v3229
        %v3237 = vpack.c.bf16 %v3232, %v3231
        %v3238 = vpack.c.bf16 %v3234, %v3233
        %v3239 = vld [vmem:[%s14] sm:$0xf]
        %v3240 = vld [vmem:[%s14 + $0x4] sm:$0xf]
        %v3241 = vld [vmem:[%s14 + $0x8] sm:$0xf]
        %v3242 = vld [vmem:[%s14 + $0xc] sm:$0xf]
        %v3243 = vld [vmem:[%s14 + $0x10] sm:$0xf]
        %v3244 = vld [vmem:[%s14 + $0x14] sm:$0xf]
        %v3245 = vld [vmem:[%s14 + $0x18] sm:$0xf]
        %v3246 = vld [vmem:[%s14 + $0x1c] sm:$0xf]
        %v3255 = vunpack.c.l.b16 %v3239
        %v3256 = vunpack.c.l.b16 %v3240
        %v3257 = vunpack.c.l.b16 %v3241
        %v3258 = vunpack.c.l.b16 %v3242
        %v3259 = vunpack.c.l.b16 %v3243
        %v3260 = vunpack.c.l.b16 %v3244
        %v3261 = vunpack.c.l.b16 %v3245
        %v3262 = vunpack.c.l.b16 %v3246
        %v3263 = vpack.c.b16 %v3256, %v3255
        %v3264 = vpack.c.b16 %v3258, %v3257
        %v3265 = vpack.c.b16 %v3260, %v3259
        %v3266 = vpack.c.b16 %v3262, %v3261
        %v3272 = vsel %vm884, %v3235, 0
        %v3275 = vsel %vm884, %v3236, 0
        %v3278 = vsel %vm884, %v3237, 0
        %v3281 = vsel %vm884, %v3238, 0
        %3283 = vmatprep.subr.bf16.mxu0 0
        %3284 = vmatpush1.bf16.msra.mxu0 %v3263
        %3285 = vmatprep.subr.bf16.mxu0 0
        %3286 = vmatpush1.bf16.msra.mxu0 %v3264
        %3287 = vmatprep.subr.bf16.mxu0 0
        %3288 = vmatpush1.bf16.msra.mxu0 %v3265
        %3289 = vmatprep.subr.bf16.mxu0 0
        %3290 = vmatpush1.bf16.msra.mxu0 %v3266
        %3291 = vmatprep.subr.bf16.mxu0 0
        %3292 = vmatpush1.bf16.msra.mxu0 0
        %3293 = vmatprep.subr.bf16.mxu0 0
        %3294 = vmatpush1.bf16.msra.mxu0 0
        %3295 = vmatprep.subr.bf16.mxu0 0
        %3296 = vmatpush1.bf16.msra.mxu0 0
        %3297 = vmatprep.subr.bf16.mxu0 0
        %3298 = vmatpush1.bf16.msra.mxu0 0
        %3299 = vmatprep.subr.bf16.mxu0 0
        %3300 = vmatpush1.bf16.msra.mxu0 0
        %3301 = vmatprep.subr.bf16.mxu0 0
        %3302 = vmatpush1.bf16.msra.mxu0 0
        %3303 = vmatprep.subr.bf16.mxu0 0
        %3304 = vmatpush1.bf16.msra.mxu0 0
        %3305 = vmatprep.subr.bf16.mxu0 0
        %3306 = vmatpush1.bf16.msra.mxu0 0
        %3307 = vmatprep.subr.bf16.mxu0 0
        %3308 = vmatpush1.bf16.msra.mxu0 0
        %3309 = vmatprep.subr.bf16.mxu0 0
        %3310 = vmatpush1.bf16.msra.mxu0 0
        %3311 = vmatprep.subr.bf16.mxu0 0
        %3312 = vmatpush1.bf16.msra.mxu0 0
        %3313 = vmatprep.subr.bf16.mxu0 0
        %3314 = vmatpush1.bf16.msra.mxu0 0
        %3315 = vmatprep.mubr.bf16.mxu0 0
        %3316 = vmatmul.mubr.bf16.gmra.mrb[0].mxu0 %v3272
        %v3317 = vpop.f32.mrb[0].mxu0
        %v3318 = vadd.f32 0.0, %v3317
        %v3319 = vpop.f32.mrb[0].mxu0
        %v3320 = vpop.f32.mrb[0].mxu0
        %v3321 = vadd.f32 0.0, %v3320
        %v3322 = vpop.f32.mrb[0].mxu0
        %3323 = vmatprep.mubr.bf16.mxu0 0
        %3324 = vmatmul.mubr.bf16.gmra.mrb[0].mxu0 %v3275
        %v3325 = vpop.f32.mrb[0].mxu0
        %v3326 = vadd.f32 0.0, %v3325
        %v3327 = vpop.f32.mrb[0].mxu0
        %v3328 = vpop.f32.mrb[0].mxu0
        %v3329 = vadd.f32 0.0, %v3328
        %v3330 = vpop.f32.mrb[0].mxu0
        %3331 = vmatprep.mubr.bf16.mxu0 0
        %3332 = vmatmul.mubr.bf16.gmra.mrb[0].mxu0 %v3278
        %v3333 = vpop.f32.mrb[0].mxu0
        %v3334 = vadd.f32 0.0, %v3333
        %v3335 = vpop.f32.mrb[0].mxu0
        %v3336 = vpop.f32.mrb[0].mxu0
        %v3337 = vadd.f32 0.0, %v3336
        %v3338 = vpop.f32.mrb[0].mxu0
        %3339 = vmatprep.mubr.bf16.mxu0 0
        %3340 = vmatmul.mubr.bf16.gmra.mrb[0].mxu0 %v3281
        %v3341 = vpop.f32.mrb[0].mxu0
        %v3342 = vadd.f32 0.0, %v3341
        %v3343 = vpop.f32.mrb[0].mxu0
        %v3344 = vpop.f32.mrb[0].mxu0
        %v3345 = vadd.f32 0.0, %v3344
        %v3346 = vpop.f32.mrb[0].mxu0
        %3347 = vdwg.mxu0
        %v3348 = vld [vmem:[%s865] sm:$0xff]
        %v3349 = vld [vmem:[%s865 + $0x8] sm:$0xff]
        %v3350 = vpack.c.bf16 %v3349, %v3348
        %v3351 = vld [vmem:[%s15] sm:$0xf]
        %v3352 = vld [vmem:[%s15 + $0x4] sm:$0xf]
        %v3353 = vld [vmem:[%s15 + $0x8] sm:$0xf]
        %v3354 = vld [vmem:[%s15 + $0xc] sm:$0xf]
        %v3355 = vld [vmem:[%s15 + $0x10] sm:$0xf]
        %v3356 = vld [vmem:[%s15 + $0x14] sm:$0xf]
        %v3357 = vld [vmem:[%s15 + $0x18] sm:$0xf]
        %v3358 = vld [vmem:[%s15 + $0x1c] sm:$0xf]
        %v3367 = vunpack.c.l.b16 %v3351
        %v3368 = vunpack.c.l.b16 %v3352
        %v3369 = vunpack.c.l.b16 %v3353
        %v3370 = vunpack.c.l.b16 %v3354
        %v3371 = vunpack.c.l.b16 %v3355
        %v3372 = vunpack.c.l.b16 %v3356
        %v3373 = vunpack.c.l.b16 %v3357
        %v3374 = vunpack.c.l.b16 %v3358
        %v3375 = vpack.c.b16 %v3368, %v3367
        %v3376 = vpack.c.b16 %v3370, %v3369
        %v3377 = vpack.c.b16 %v3372, %v3371
        %v3378 = vpack.c.b16 %v3374, %v3373
        %v3384 = vsel %vm884, %v3350, 0
        %3386 = vmatprep.subr.bf16.mxu0 0
        %3387 = vmatpush1.bf16.msra.mxu0 %v3375
        %3388 = vmatprep.subr.bf16.mxu0 0
        %3389 = vmatpush1.bf16.msra.mxu0 %v3376
        %3390 = vmatprep.subr.bf16.mxu0 0
        %3391 = vmatpush1.bf16.msra.mxu0 %v3377
        %3392 = vmatprep.subr.bf16.mxu0 0
        %3393 = vmatpush1.bf16.msra.mxu0 %v3378
        %3394 = vmatprep.subr.bf16.mxu0 0
        %3395 = vmatpush1.bf16.msra.mxu0 0
        %3396 = vmatprep.subr.bf16.mxu0 0
        %3397 = vmatpush1.bf16.msra.mxu0 0
        %3398 = vmatprep.subr.bf16.mxu0 0
        %3399 = vmatpush1.bf16.msra.mxu0 0
        %3400 = vmatprep.subr.bf16.mxu0 0
        %3401 = vmatpush1.bf16.msra.mxu0 0
        %3402 = vmatprep.subr.bf16.mxu0 0
        %3403 = vmatpush1.bf16.msra.mxu0 0
        %3404 = vmatprep.subr.bf16.mxu0 0
        %3405 = vmatpush1.bf16.msra.mxu0 0
        %3406 = vmatprep.subr.bf16.mxu0 0
        %3407 = vmatpush1.bf16.msra.mxu0 0
        %3408 = vmatprep.subr.bf16.mxu0 0
        %3409 = vmatpush1.bf16.msra.mxu0 0
        %3410 = vmatprep.subr.bf16.mxu0 0
        %3411 = vmatpush1.bf16.msra.mxu0 0
        %3412 = vmatprep.subr.bf16.mxu0 0
        %3413 = vmatpush1.bf16.msra.mxu0 0
        %3414 = vmatprep.subr.bf16.mxu0 0
        %3415 = vmatpush1.bf16.msra.mxu0 0
        %3416 = vmatprep.subr.bf16.mxu0 0
        %3417 = vmatpush1.bf16.msra.mxu0 0
        %3418 = vmatprep.mubr.bf16.mxu0 0
        %3419 = vmatmul.mubr.bf16.gmra.mrb[0].mxu0 %v3384
        %v3420 = vpop.f32.mrb[0].mxu0
        %v3421 = vadd.f32 0.0, %v3420
        %v3422 = vpop.f32.mrb[0].mxu0
        %v3423 = vpop.f32.mrb[0].mxu0
        %v3424 = vadd.f32 0.0, %v3423
        %v3425 = vpop.f32.mrb[0].mxu0
        %3426 = vdwg.mxu0
        %v3427 = vpack.c.bf16 %v3321, %v3318
        %v3428 = vpack.c.bf16 %v3329, %v3326
        %v3429 = vpack.c.bf16 %v3337, %v3334
        %v3430 = vpack.c.bf16 %v3345, %v3342
        %v3431 = vpack.c.bf16 %v3424, %v3421
        %v3433 = vsel %vm2315, %v3427, 0
        %v3436 = vsel %vm2315, %v3428, 0
        %v3439 = vsel %vm2315, %v3429, 0
        %v3442 = vsel %vm2315, %v3430, 0
        %v3445 = vsel %vm2315, %v3431, 0
        %3447 = vmatprep.subr.bf16.mxu0 0
        %3448 = vmatpush1.bf16.xpose.msra.mxu0 %v3445
        %3449 = vmatprep.subr.bf16.mxu0 0
        %3450 = vmatpush1.bf16.xpose.msra.mxu0 0
        %3451 = vmatprep.subr.bf16.mxu0 0
        %3452 = vmatpush1.bf16.xpose.msra.mxu0 0
        %3453 = vmatprep.subr.bf16.mxu0 0
        %3454 = vmatpush1.bf16.xpose.msra.mxu0 0
        %3455 = vmatprep.subr.bf16.mxu0 0
        %3456 = vmatpush1.bf16.xpose.msra.mxu0 0
        %3457 = vmatprep.subr.bf16.mxu0 0
        %3458 = vmatpush1.bf16.xpose.msra.mxu0 0
        %3459 = vmatprep.subr.bf16.mxu0 0
        %3460 = vmatpush1.bf16.xpose.msra.mxu0 0
        %3461 = vmatprep.subr.bf16.mxu0 0
        %3462 = vmatpush1.bf16.xpose.msra.mxu0 0
        %3463 = vmatprep.subr.bf16.mxu0 0
        %3464 = vmatpush1.bf16.xpose.msra.mxu0 0
        %3465 = vmatprep.subr.bf16.mxu0 0
        %3466 = vmatpush1.bf16.xpose.msra.mxu0 0
        %3467 = vmatprep.subr.bf16.mxu0 0
        %3468 = vmatpush1.bf16.xpose.msra.mxu0 0
        %3469 = vmatprep.subr.bf16.mxu0 0
        %3470 = vmatpush1.bf16.xpose.msra.mxu0 0
        %3471 = vmatprep.subr.bf16.mxu0 0
        %3472 = vmatpush1.bf16.xpose.msra.mxu0 0
        %3473 = vmatprep.subr.bf16.mxu0 0
        %3474 = vmatpush1.bf16.xpose.msra.mxu0 0
        %3475 = vmatprep.subr.bf16.mxu0 0
        %3476 = vmatpush1.bf16.xpose.msra.mxu0 0
        %3477 = vmatprep.subr.bf16.mxu0 0
        %3478 = vmatpush1.bf16.xpose.msra.mxu0 0
        %3479 = vmatprep.mubr.bf16.mxu0 0
        %3480 = vmatmul.mubr.bf16.gmra.mrb[0].mxu0 %v3433
        %v3481 = vpop.f32.mrb[0].mxu0
        %v3482 = vadd.f32 0.0, %v3481
        %v3483 = vpop.f32.mrb[0].mxu0
        %v3484 = vpop.f32.mrb[0].mxu0
        %v3485 = vadd.f32 0.0, %v3484
        %v3486 = vpop.f32.mrb[0].mxu0
        %3487 = vmatprep.mubr.bf16.mxu0 0
        %3488 = vmatmul.mubr.bf16.gmra.mrb[0].mxu0 %v3436
        %v3489 = vpop.f32.mrb[0].mxu0
        %v3490 = vadd.f32 0.0, %v3489
        %v3491 = vpop.f32.mrb[0].mxu0
        %v3492 = vpop.f32.mrb[0].mxu0
        %v3493 = vadd.f32 0.0, %v3492
        %v3494 = vpop.f32.mrb[0].mxu0
        %3495 = vmatprep.mubr.bf16.mxu0 0
        %3496 = vmatmul.mubr.bf16.gmra.mrb[0].mxu0 %v3439
        %v3497 = vpop.f32.mrb[0].mxu0
        %v3498 = vadd.f32 0.0, %v3497
        %v3499 = vpop.f32.mrb[0].mxu0
        %v3500 = vpop.f32.mrb[0].mxu0
        %v3501 = vadd.f32 0.0, %v3500
        %v3502 = vpop.f32.mrb[0].mxu0
        %3503 = vmatprep.mubr.bf16.mxu0 0
        %3504 = vmatmul.mubr.bf16.gmra.mrb[0].mxu0 %v3442
        %v3505 = vpop.f32.mrb[0].mxu0
        %v3506 = vadd.f32 0.0, %v3505
        %v3507 = vpop.f32.mrb[0].mxu0
        %v3508 = vpop.f32.mrb[0].mxu0
        %v3509 = vadd.f32 0.0, %v3508
        %v3510 = vpop.f32.mrb[0].mxu0
        %3511 = vdwg.mxu0
        %3516 = vrot.lane.b32.xlu0 %v3427, 96
        %v3517 = vpop.permute.xlu0 %3516
        %3518 = vrot.lane.b32.xlu0 %v3428, 96
        %v3519 = vpop.permute.xlu0 %3518
        %3520 = vrot.lane.b32.xlu0 %v3429, 96
        %v3521 = vpop.permute.xlu0 %3520
        %3522 = vrot.lane.b32.xlu0 %v3430, 96
        %v3523 = vpop.permute.xlu0 %3522
        %3525 = vrot.lane.b32.xlu0 %v3431, 96
        %v3526 = vpop.permute.xlu0 %3525
        %v3528 = vsel %vm2315, %v3517, 0
        %v3531 = vsel %vm2315, %v3519, 0
        %v3534 = vsel %vm2315, %v3521, 0
        %v3537 = vsel %vm2315, %v3523, 0
        %v3540 = vsel %vm2315, %v3526, 0
        %3542 = vmatprep.subr.bf16.mxu0 0
        %3543 = vmatpush1.bf16.xpose.msra.mxu0 %v3540
        %3544 = vmatprep.subr.bf16.mxu0 0
        %3545 = vmatpush1.bf16.xpose.msra.mxu0 0
        %3546 = vmatprep.subr.bf16.mxu0 0
        %3547 = vmatpush1.bf16.xpose.msra.mxu0 0
        %3548 = vmatprep.subr.bf16.mxu0 0
        %3549 = vmatpush1.bf16.xpose.msra.mxu0 0
        %3550 = vmatprep.subr.bf16.mxu0 0
        %3551 = vmatpush1.bf16.xpose.msra.mxu0 0
        %3552 = vmatprep.subr.bf16.mxu0 0
        %3553 = vmatpush1.bf16.xpose.msra.mxu0 0
        %3554 = vmatprep.subr.bf16.mxu0 0
        %3555 = vmatpush1.bf16.xpose.msra.mxu0 0
        %3556 = vmatprep.subr.bf16.mxu0 0
        %3557 = vmatpush1.bf16.xpose.msra.mxu0 0
        %3558 = vmatprep.subr.bf16.mxu0 0
        %3559 = vmatpush1.bf16.xpose.msra.mxu0 0
        %3560 = vmatprep.subr.bf16.mxu0 0
        %3561 = vmatpush1.bf16.xpose.msra.mxu0 0
        %3562 = vmatprep.subr.bf16.mxu0 0
        %3563 = vmatpush1.bf16.xpose.msra.mxu0 0
        %3564 = vmatprep.subr.bf16.mxu0 0
        %3565 = vmatpush1.bf16.xpose.msra.mxu0 0
        %3566 = vmatprep.subr.bf16.mxu0 0
        %3567 = vmatpush1.bf16.xpose.msra.mxu0 0
        %3568 = vmatprep.subr.bf16.mxu0 0
        %3569 = vmatpush1.bf16.xpose.msra.mxu0 0
        %3570 = vmatprep.subr.bf16.mxu0 0
        %3571 = vmatpush1.bf16.xpose.msra.mxu0 0
        %3572 = vmatprep.subr.bf16.mxu0 0
        %3573 = vmatpush1.bf16.xpose.msra.mxu0 0
        %3574 = vmatprep.mubr.bf16.mxu0 0
        %3575 = vmatmul.mubr.bf16.gmra.mrb[0].mxu0 %v3528
        %v3576 = vpop.f32.mrb[0].mxu0
        %v3577 = vadd.f32 0.0, %v3576
        %v3578 = vpop.f32.mrb[0].mxu0
        %v3579 = vpop.f32.mrb[0].mxu0
        %v3580 = vadd.f32 0.0, %v3579
        %v3581 = vpop.f32.mrb[0].mxu0
        %3582 = vmatprep.mubr.bf16.mxu0 0
        %3583 = vmatmul.mubr.bf16.gmra.mrb[0].mxu0 %v3531
        %v3584 = vpop.f32.mrb[0].mxu0
        %v3585 = vadd.f32 0.0, %v3584
        %v3586 = vpop.f32.mrb[0].mxu0
        %v3587 = vpop.f32.mrb[0].mxu0
        %v3588 = vadd.f32 0.0, %v3587
        %v3589 = vpop.f32.mrb[0].mxu0
        %3590 = vmatprep.mubr.bf16.mxu0 0
        %3591 = vmatmul.mubr.bf16.gmra.mrb[0].mxu0 %v3534
        %v3592 = vpop.f32.mrb[0].mxu0
        %v3593 = vadd.f32 0.0, %v3592
        %v3594 = vpop.f32.mrb[0].mxu0
        %v3595 = vpop.f32.mrb[0].mxu0
        %v3596 = vadd.f32 0.0, %v3595
        %v3597 = vpop.f32.mrb[0].mxu0
        %3598 = vmatprep.mubr.bf16.mxu0 0
        %3599 = vmatmul.mubr.bf16.gmra.mrb[0].mxu0 %v3537
        %v3600 = vpop.f32.mrb[0].mxu0
        %v3601 = vadd.f32 0.0, %v3600
        %v3602 = vpop.f32.mrb[0].mxu0
        %v3603 = vpop.f32.mrb[0].mxu0
        %v3604 = vadd.f32 0.0, %v3603
        %v3605 = vpop.f32.mrb[0].mxu0
        %3606 = vdwg.mxu0
        %v3607 = vmul.f32 %v3482, 0.17677669
        %v3608 = vmul.f32 %v3485, 0.17677669
        %v3609 = vmul.f32 %v3490, 0.17677669
        %v3610 = vmul.f32 %v3493, 0.17677669
        %v3611 = vmul.f32 %v3498, 0.17677669
        %v3612 = vmul.f32 %v3501, 0.17677669
        %v3613 = vmul.f32 %v3506, 0.17677669
        %v3614 = vmul.f32 %v3509, 0.17677669
        %v3615 = vmul.f32 %v3577, 0.17677669
        %v3616 = vmul.f32 %v3580, 0.17677669
        %v3617 = vmul.f32 %v3585, 0.17677669
        %v3618 = vmul.f32 %v3588, 0.17677669
        %v3619 = vmul.f32 %v3593, 0.17677669
        %v3620 = vmul.f32 %v3596, 0.17677669
        %v3621 = vmul.f32 %v3601, 0.17677669
        %v3622 = vmul.f32 %v3604, 0.17677669
        %vm3623 = vcmask 130048
        %v3624 = vsel %vm3623, %v3607, -inf
        %3625 = vmax.xlane.f32.xlu0 %v3624
        %v3626 = vpop.xlane.xlu0 %3625
        %v3627 = vsel %vm3623, %v3608, -inf
        %3628 = vmax.xlane.f32.xlu0 %v3627
        %v3629 = vpop.xlane.xlu0 %3628
        %v3630 = vsel %vm3623, %v3609, -inf
        %3631 = vmax.xlane.f32.xlu0 %v3630
        %v3632 = vpop.xlane.xlu0 %3631
        %v3633 = vsel %vm3623, %v3610, -inf
        %3634 = vmax.xlane.f32.xlu0 %v3633
        %v3635 = vpop.xlane.xlu0 %3634
        %v3636 = vsel %vm3623, %v3611, -inf
        %3637 = vmax.xlane.f32.xlu0 %v3636
        %v3638 = vpop.xlane.xlu0 %3637
        %v3639 = vsel %vm3623, %v3612, -inf
        %3640 = vmax.xlane.f32.xlu0 %v3639
        %v3641 = vpop.xlane.xlu0 %3640
        %v3642 = vsel %vm3623, %v3613, -inf
        %3643 = vmax.xlane.f32.xlu0 %v3642
        %v3644 = vpop.xlane.xlu0 %3643
        %v3645 = vsel %vm3623, %v3614, -inf
        %3646 = vmax.xlane.f32.xlu0 %v3645
        %v3647 = vpop.xlane.xlu0 %3646
        %v3648 = vsel %vm3623, %v3615, -inf
        %3649 = vmax.xlane.f32.xlu0 %v3648
        %v3650 = vpop.xlane.xlu0 %3649
        %v3651 = vsel %vm3623, %v3616, -inf
        %3652 = vmax.xlane.f32.xlu0 %v3651
        %v3653 = vpop.xlane.xlu0 %3652
        %v3654 = vsel %vm3623, %v3617, -inf
        %3655 = vmax.xlane.f32.xlu0 %v3654
        %v3656 = vpop.xlane.xlu0 %3655
        %v3657 = vsel %vm3623, %v3618, -inf
        %3658 = vmax.xlane.f32.xlu0 %v3657
        %v3659 = vpop.xlane.xlu0 %3658
        %v3660 = vsel %vm3623, %v3619, -inf
        %3661 = vmax.xlane.f32.xlu0 %v3660
        %v3662 = vpop.xlane.xlu0 %3661
        %v3663 = vsel %vm3623, %v3620, -inf
        %3664 = vmax.xlane.f32.xlu0 %v3663
        %v3665 = vpop.xlane.xlu0 %3664
        %v3666 = vsel %vm3623, %v3621, -inf
        %3667 = vmax.xlane.f32.xlu0 %v3666
        %v3668 = vpop.xlane.xlu0 %3667
        %v3669 = vsel %vm3623, %v3622, -inf
        %3670 = vmax.xlane.f32.xlu0 %v3669
        %v3671 = vpop.xlane.xlu0 %3670
        %v3672 = vsub.f32 %v3607, %v3626
        %v3673 = vsub.f32 %v3608, %v3629
        %v3674 = vsub.f32 %v3609, %v3632
        %v3675 = vsub.f32 %v3610, %v3635
        %v3676 = vsub.f32 %v3611, %v3638
        %v3677 = vsub.f32 %v3612, %v3641
        %v3678 = vsub.f32 %v3613, %v3644
        %v3679 = vsub.f32 %v3614, %v3647
        %v3680 = vsub.f32 %v3615, %v3650
        %v3681 = vsub.f32 %v3616, %v3653
        %v3682 = vsub.f32 %v3617, %v3656
        %v3683 = vsub.f32 %v3618, %v3659
        %v3684 = vsub.f32 %v3619, %v3662
        %v3685 = vsub.f32 %v3620, %v3665
        %v3686 = vsub.f32 %v3621, %v3668
        %v3687 = vsub.f32 %v3622, %v3671
        %v3688 = vmul.f32 %v3672, 1.442695
        %v3689 = vpow.pop %v3688
        %v3690 = vmul.f32 %v3673, 1.442695
        %v3691 = vpow.pop %v3690
        %v3692 = vmul.f32 %v3674, 1.442695
        %v3693 = vpow.pop %v3692
        %v3694 = vmul.f32 %v3675, 1.442695
        %v3695 = vpow.pop %v3694
        %v3696 = vmul.f32 %v3676, 1.442695
        %v3697 = vpow.pop %v3696
        %v3698 = vmul.f32 %v3677, 1.442695
        %v3699 = vpow.pop %v3698
        %v3700 = vmul.f32 %v3678, 1.442695
        %v3701 = vpow.pop %v3700
        %v3702 = vmul.f32 %v3679, 1.442695
        %v3703 = vpow.pop %v3702
        %v3704 = vmul.f32 %v3680, 1.442695
        %v3705 = vpow.pop %v3704
        %v3706 = vmul.f32 %v3681, 1.442695
        %v3707 = vpow.pop %v3706
        %v3708 = vmul.f32 %v3682, 1.442695
        %v3709 = vpow.pop %v3708
        %v3710 = vmul.f32 %v3683, 1.442695
        %v3711 = vpow.pop %v3710
        %v3712 = vmul.f32 %v3684, 1.442695
        %v3713 = vpow.pop %v3712
        %v3714 = vmul.f32 %v3685, 1.442695
        %v3715 = vpow.pop %v3714
        %v3716 = vmul.f32 %v3686, 1.442695
        %v3717 = vpow.pop %v3716
        %v3718 = vmul.f32 %v3687, 1.442695
        %v3719 = vpow.pop %v3718
        %v3720 = vsel %vm3623, %v3689, 0.0
        %3721 = vadd.xlane.f32.xlu0 %v3720
        %v3722 = vpop.xlane.xlu0 %3721
        %v3723 = vsel %vm3623, %v3691, 0.0
        %3724 = vadd.xlane.f32.xlu0 %v3723
        %v3725 = vpop.xlane.xlu0 %3724
        %v3726 = vsel %vm3623, %v3693, 0.0
        %3727 = vadd.xlane.f32.xlu0 %v3726
        %v3728 = vpop.xlane.xlu0 %3727
        %v3729 = vsel %vm3623, %v3695, 0.0
        %3730 = vadd.xlane.f32.xlu0 %v3729
        %v3731 = vpop.xlane.xlu0 %3730
        %v3732 = vsel %vm3623, %v3697, 0.0
        %3733 = vadd.xlane.f32.xlu0 %v3732
        %v3734 = vpop.xlane.xlu0 %3733
        %v3735 = vsel %vm3623, %v3699, 0.0
        %3736 = vadd.xlane.f32.xlu0 %v3735
        %v3737 = vpop.xlane.xlu0 %3736
        %v3738 = vsel %vm3623, %v3701, 0.0
        %3739 = vadd.xlane.f32.xlu0 %v3738
        %v3740 = vpop.xlane.xlu0 %3739
        %v3741 = vsel %vm3623, %v3703, 0.0
        %3742 = vadd.xlane.f32.xlu0 %v3741
        %v3743 = vpop.xlane.xlu0 %3742
        %v3744 = vsel %vm3623, %v3705, 0.0
        %3745 = vadd.xlane.f32.xlu0 %v3744
        %v3746 = vpop.xlane.xlu0 %3745
        %v3747 = vsel %vm3623, %v3707, 0.0
        %3748 = vadd.xlane.f32.xlu0 %v3747
        %v3749 = vpop.xlane.xlu0 %3748
        %v3750 = vsel %vm3623, %v3709, 0.0
        %3751 = vadd.xlane.f32.xlu0 %v3750
        %v3752 = vpop.xlane.xlu0 %3751
        %v3753 = vsel %vm3623, %v3711, 0.0
        %3754 = vadd.xlane.f32.xlu0 %v3753
        %v3755 = vpop.xlane.xlu0 %3754
        %v3756 = vsel %vm3623, %v3713, 0.0
        %3757 = vadd.xlane.f32.xlu0 %v3756
        %v3758 = vpop.xlane.xlu0 %3757
        %v3759 = vsel %vm3623, %v3715, 0.0
        %3760 = vadd.xlane.f32.xlu0 %v3759
        %v3761 = vpop.xlane.xlu0 %3760
        %v3762 = vsel %vm3623, %v3717, 0.0
        %3763 = vadd.xlane.f32.xlu0 %v3762
        %v3764 = vpop.xlane.xlu0 %3763
        %v3765 = vsel %vm3623, %v3719, 0.0
        %3766 = vadd.xlane.f32.xlu0 %v3765
        %v3767 = vpop.xlane.xlu0 %3766
        %v3768 = vrcp.pop %v3722
        %v3769 = vrcp.pop %v3725
        %v3770 = vrcp.pop %v3728
        %v3771 = vrcp.pop %v3731
        %v3772 = vrcp.pop %v3734
        %v3773 = vrcp.pop %v3737
        %v3774 = vrcp.pop %v3740
        %v3775 = vrcp.pop %v3743
        %v3776 = vrcp.pop %v3746
        %v3777 = vrcp.pop %v3749
        %v3778 = vrcp.pop %v3752
        %v3779 = vrcp.pop %v3755
        %v3780 = vrcp.pop %v3758
        %v3781 = vrcp.pop %v3761
        %v3782 = vrcp.pop %v3764
        %v3783 = vrcp.pop %v3767
        %v3784 = vmul.f32 %v3689, %v3768
        %v3785 = vmul.f32 %v3691, %v3769
        %v3786 = vmul.f32 %v3693, %v3770
        %v3787 = vmul.f32 %v3695, %v3771
        %v3788 = vmul.f32 %v3697, %v3772
        %v3789 = vmul.f32 %v3699, %v3773
        %v3790 = vmul.f32 %v3701, %v3774
        %v3791 = vmul.f32 %v3703, %v3775
        %v3792 = vmul.f32 %v3705, %v3776
        %v3793 = vmul.f32 %v3707, %v3777
        %v3794 = vmul.f32 %v3709, %v3778
        %v3795 = vmul.f32 %v3711, %v3779
        %v3796 = vmul.f32 %v3713, %v3780
        %v3797 = vmul.f32 %v3715, %v3781
        %v3798 = vmul.f32 %v3717, %v3782
        %v3799 = vmul.f32 %v3719, %v3783
        %v3800 = vpack.c.bf16 %v3785, %v3784
        %v3801 = vpack.c.bf16 %v3787, %v3786
        %v3802 = vpack.c.bf16 %v3789, %v3788
        %v3803 = vpack.c.bf16 %v3791, %v3790
        %3804 = vrot.lane.b32.xlu0 %v3431, 64
        %v3805 = vpop.permute.xlu0 %3804
        %v3808 = vsel %vm3623, %v3800, 0
        %v3811 = vsel %vm3623, %v3801, 0
        %v3814 = vsel %vm3623, %v3802, 0
        %v3817 = vsel %vm3623, %v3803, 0
        %3819 = vmatprep.subr.bf16.mxu0 0
        %3820 = vmatpush1.bf16.msra.mxu0 %v3805
        %3821 = vmatprep.subr.bf16.mxu0 0
        %3822 = vmatpush1.bf16.msra.mxu0 0
        %3823 = vmatprep.subr.bf16.mxu0 0
        %3824 = vmatpush1.bf16.msra.mxu0 0
        %3825 = vmatprep.subr.bf16.mxu0 0
        %3826 = vmatpush1.bf16.msra.mxu0 0
        %3827 = vmatprep.subr.bf16.mxu0 0
        %3828 = vmatpush1.bf16.msra.mxu0 0
        %3829 = vmatprep.subr.bf16.mxu0 0
        %3830 = vmatpush1.bf16.msra.mxu0 0
        %3831 = vmatprep.subr.bf16.mxu0 0
        %3832 = vmatpush1.bf16.msra.mxu0 0
        %3833 = vmatprep.subr.bf16.mxu0 0
        %3834 = vmatpush1.bf16.msra.mxu0 0
        %3835 = vmatprep.subr.bf16.mxu0 0
        %3836 = vmatpush1.bf16.msra.mxu0 0
        %3837 = vmatprep.subr.bf16.mxu0 0
        %3838 = vmatpush1.bf16.msra.mxu0 0
        %3839 = vmatprep.subr.bf16.mxu0 0
        %3840 = vmatpush1.bf16.msra.mxu0 0
        %3841 = vmatprep.subr.bf16.mxu0 0
        %3842 = vmatpush1.bf16.msra.mxu0 0
        %3843 = vmatprep.subr.bf16.mxu0 0
        %3844 = vmatpush1.bf16.msra.mxu0 0
        %3845 = vmatprep.subr.bf16.mxu0 0
        %3846 = vmatpush1.bf16.msra.mxu0 0
        %3847 = vmatprep.subr.bf16.mxu0 0
        %3848 = vmatpush1.bf16.msra.mxu0 0
        %3849 = vmatprep.subr.bf16.mxu0 0
        %3850 = vmatpush1.bf16.msra.mxu0 0
        %3851 = vmatprep.mubr.bf16.mxu0 0
        %3852 = vmatmul.mubr.bf16.gmra.mrb[0].mxu0 %v3808
        %v3853 = vpop.f32.mrb[0].mxu0
        %v3854 = vadd.f32 0.0, %v3853
        %v3855 = vpop.f32.mrb[0].mxu0
        %v3856 = vpop.f32.mrb[0].mxu0
        %v3857 = vadd.f32 0.0, %v3856
        %v3858 = vpop.f32.mrb[0].mxu0
        %3859 = vmatprep.mubr.bf16.mxu0 0
        %3860 = vmatmul.mubr.bf16.gmra.mrb[0].mxu0 %v3811
        %v3861 = vpop.f32.mrb[0].mxu0
        %v3862 = vadd.f32 0.0, %v3861
        %v3863 = vpop.f32.mrb[0].mxu0
        %v3864 = vpop.f32.mrb[0].mxu0
        %v3865 = vadd.f32 0.0, %v3864
        %v3866 = vpop.f32.mrb[0].mxu0
        %3867 = vmatprep.mubr.bf16.mxu0 0
        %3868 = vmatmul.mubr.bf16.gmra.mrb[0].mxu0 %v3814
        %v3869 = vpop.f32.mrb[0].mxu0
        %v3870 = vadd.f32 0.0, %v3869
        %v3871 = vpop.f32.mrb[0].mxu0
        %v3872 = vpop.f32.mrb[0].mxu0
        %v3873 = vadd.f32 0.0, %v3872
        %v3874 = vpop.f32.mrb[0].mxu0
        %3875 = vmatprep.mubr.bf16.mxu0 0
        %3876 = vmatmul.mubr.bf16.gmra.mrb[0].mxu0 %v3817
        %v3877 = vpop.f32.mrb[0].mxu0
        %v3878 = vadd.f32 0.0, %v3877
        %v3879 = vpop.f32.mrb[0].mxu0
        %v3880 = vpop.f32.mrb[0].mxu0
        %v3881 = vadd.f32 0.0, %v3880
        %v3882 = vpop.f32.mrb[0].mxu0
        %3883 = vdwg.mxu0
        %v3884 = vpack.c.bf16 %v3857, %v3854
        %v3885 = vpack.c.bf16 %v3865, %v3862
        %v3886 = vpack.c.bf16 %v3873, %v3870
        %v3887 = vpack.c.bf16 %v3881, %v3878
        %v3888 = vld [vmem:[%s16] sm:$0xf]
        %v3889 = vld [vmem:[%s16 + $0x4] sm:$0xf]
        %v3890 = vld [vmem:[%s16 + $0x8] sm:$0xf]
        %v3891 = vld [vmem:[%s16 + $0xc] sm:$0xf]
        %v3892 = vpack.c.bf16 %v3793, %v3792
        %v3893 = vpack.c.bf16 %v3795, %v3794
        %v3894 = vpack.c.bf16 %v3797, %v3796
        %v3895 = vpack.c.bf16 %v3799, %v3798
        %3896 = vrot.lane.b32.xlu0 %v3431, 32
        %v3897 = vpop.permute.xlu0 %3896
        %v3900 = vsel %vm3623, %v3892, 0
        %v3903 = vsel %vm3623, %v3893, 0
        %v3906 = vsel %vm3623, %v3894, 0
        %v3909 = vsel %vm3623, %v3895, 0
        %3911 = vmatprep.subr.bf16.mxu0 0
        %3912 = vmatpush1.bf16.msra.mxu0 %v3897
        %3913 = vmatprep.subr.bf16.mxu0 0
        %3914 = vmatpush1.bf16.msra.mxu0 0
        %3915 = vmatprep.subr.bf16.mxu0 0
        %3916 = vmatpush1.bf16.msra.mxu0 0
        %3917 = vmatprep.subr.bf16.mxu0 0
        %3918 = vmatpush1.bf16.msra.mxu0 0
        %3919 = vmatprep.subr.bf16.mxu0 0
        %3920 = vmatpush1.bf16.msra.mxu0 0
        %3921 = vmatprep.subr.bf16.mxu0 0
        %3922 = vmatpush1.bf16.msra.mxu0 0
        %3923 = vmatprep.subr.bf16.mxu0 0
        %3924 = vmatpush1.bf16.msra.mxu0 0
        %3925 = vmatprep.subr.bf16.mxu0 0
        %3926 = vmatpush1.bf16.msra.mxu0 0
        %3927 = vmatprep.subr.bf16.mxu0 0
        %3928 = vmatpush1.bf16.msra.mxu0 0
        %3929 = vmatprep.subr.bf16.mxu0 0
        %3930 = vmatpush1.bf16.msra.mxu0 0
        %3931 = vmatprep.subr.bf16.mxu0 0
        %3932 = vmatpush1.bf16.msra.mxu0 0
        %3933 = vmatprep.subr.bf16.mxu0 0
        %3934 = vmatpush1.bf16.msra.mxu0 0
        %3935 = vmatprep.subr.bf16.mxu0 0
        %3936 = vmatpush1.bf16.msra.mxu0 0
        %3937 = vmatprep.subr.bf16.mxu0 0
        %3938 = vmatpush1.bf16.msra.mxu0 0
        %3939 = vmatprep.subr.bf16.mxu0 0
        %3940 = vmatpush1.bf16.msra.mxu0 0
        %3941 = vmatprep.subr.bf16.mxu0 0
        %3942 = vmatpush1.bf16.msra.mxu0 0
        %3943 = vmatprep.mubr.bf16.mxu0 0
        %3944 = vmatmul.mubr.bf16.gmra.mrb[0].mxu0 %v3900
        %v3945 = vpop.f32.mrb[0].mxu0
        %v3946 = vadd.f32 0.0, %v3945
        %v3947 = vpop.f32.mrb[0].mxu0
        %v3948 = vpop.f32.mrb[0].mxu0
        %v3949 = vadd.f32 0.0, %v3948
        %v3950 = vpop.f32.mrb[0].mxu0
        %3951 = vmatprep.mubr.bf16.mxu0 0
        %3952 = vmatmul.mubr.bf16.gmra.mrb[0].mxu0 %v3903
        %v3953 = vpop.f32.mrb[0].mxu0
        %v3954 = vadd.f32 0.0, %v3953
        %v3955 = vpop.f32.mrb[0].mxu0
        %v3956 = vpop.f32.mrb[0].mxu0
        %v3957 = vadd.f32 0.0, %v3956
        %v3958 = vpop.f32.mrb[0].mxu0
        %3959 = vmatprep.mubr.bf16.mxu0 0
        %3960 = vmatmul.mubr.bf16.gmra.mrb[0].mxu0 %v3906
        %v3961 = vpop.f32.mrb[0].mxu0
        %v3962 = vadd.f32 0.0, %v3961
        %v3963 = vpop.f32.mrb[0].mxu0
        %v3964 = vpop.f32.mrb[0].mxu0
        %v3965 = vadd.f32 0.0, %v3964
        %v3966 = vpop.f32.mrb[0].mxu0
        %3967 = vmatprep.mubr.bf16.mxu0 0
        %3968 = vmatmul.mubr.bf16.gmra.mrb[0].mxu0 %v3909
        %v3969 = vpop.f32.mrb[0].mxu0
        %v3970 = vadd.f32 0.0, %v3969
        %v3971 = vpop.f32.mrb[0].mxu0
        %v3972 = vpop.f32.mrb[0].mxu0
        %v3973 = vadd.f32 0.0, %v3972
        %v3974 = vpop.f32.mrb[0].mxu0
        %3975 = vdwg.mxu0
        %v3976 = vpack.c.bf16 %v3949, %v3946
        %v3977 = vpack.c.bf16 %v3957, %v3954
        %v3978 = vpack.c.bf16 %v3965, %v3962
        %v3979 = vpack.c.bf16 %v3973, %v3970
        %v3980 = vld [vmem:[%s16 + $0x10] sm:$0xf]
        %v3981 = vld [vmem:[%s16 + $0x14] sm:$0xf]
        %v3982 = vld [vmem:[%s16 + $0x18] sm:$0xf]
        %v3983 = vld [vmem:[%s16 + $0x1c] sm:$0xf]
        %v3988 = vunpack.c.l.b16 %v3980
        %v3989 = vunpack.c.l.b16 %v3981
        %v3990 = vunpack.c.l.b16 %v3982
        %v3991 = vunpack.c.l.b16 %v3983
        %v3992 = vpack.c.b16 %v3989, %v3988
        %v3993 = vpack.c.b16 %v3991, %v3990
        %v3997 = vsel %vm2315, %v3976, 0
        %v4000 = vsel %vm2315, %v3977, 0
        %v4003 = vsel %vm2315, %v3978, 0
        %v4006 = vsel %vm2315, %v3979, 0
        %4008 = vmatprep.subr.bf16.mxu0 0
        %4009 = vmatpush1.bf16.msra.mxu0 %v3992
        %4010 = vmatprep.subr.bf16.mxu0 0
        %4011 = vmatpush1.bf16.msra.mxu0 %v3993
        %4012 = vmatprep.subr.bf16.mxu0 0
        %4013 = vmatpush1.bf16.msra.mxu0 0
        %4014 = vmatprep.subr.bf16.mxu0 0
        %4015 = vmatpush1.bf16.msra.mxu0 0
        %4016 = vmatprep.subr.bf16.mxu0 0
        %4017 = vmatpush1.bf16.msra.mxu0 0
        %4018 = vmatprep.subr.bf16.mxu0 0
        %4019 = vmatpush1.bf16.msra.mxu0 0
        %4020 = vmatprep.subr.bf16.mxu0 0
        %4021 = vmatpush1.bf16.msra.mxu0 0
        %4022 = vmatprep.subr.bf16.mxu0 0
        %4023 = vmatpush1.bf16.msra.mxu0 0
        %4024 = vmatprep.subr.bf16.mxu0 0
        %4025 = vmatpush1.bf16.msra.mxu0 0
        %4026 = vmatprep.subr.bf16.mxu0 0
        %4027 = vmatpush1.bf16.msra.mxu0 0
        %4028 = vmatprep.subr.bf16.mxu0 0
        %4029 = vmatpush1.bf16.msra.mxu0 0
        %4030 = vmatprep.subr.bf16.mxu0 0
        %4031 = vmatpush1.bf16.msra.mxu0 0
        %4032 = vmatprep.subr.bf16.mxu0 0
        %4033 = vmatpush1.bf16.msra.mxu0 0
        %4034 = vmatprep.subr.bf16.mxu0 0
        %4035 = vmatpush1.bf16.msra.mxu0 0
        %4036 = vmatprep.subr.bf16.mxu0 0
        %4037 = vmatpush1.bf16.msra.mxu0 0
        %4038 = vmatprep.subr.bf16.mxu0 0
        %4039 = vmatpush1.bf16.msra.mxu0 0
        %4040 = vmatprep.mubr.bf16.mxu0 0
        %4041 = vmatmul.mubr.bf16.gmra.mrb[0].mxu0 %v3997
        %v4042 = vpop.f32.mrb[0].mxu0
        %v4043 = vadd.f32 0.0, %v4042
        %v4044 = vpop.f32.mrb[0].mxu0
        %v4045 = vpop.f32.mrb[0].mxu0
        %v4046 = vadd.f32 0.0, %v4045
        %v4047 = vpop.f32.mrb[0].mxu0
        %4048 = vmatprep.mubr.bf16.mxu0 0
        %4049 = vmatmul.mubr.bf16.gmra.mrb[0].mxu0 %v4000
        %v4050 = vpop.f32.mrb[0].mxu0
        %v4051 = vadd.f32 0.0, %v4050
        %v4052 = vpop.f32.mrb[0].mxu0
        %v4053 = vpop.f32.mrb[0].mxu0
        %v4054 = vadd.f32 0.0, %v4053
        %v4055 = vpop.f32.mrb[0].mxu0
        %4056 = vmatprep.mubr.bf16.mxu0 0
        %4057 = vmatmul.mubr.bf16.gmra.mrb[0].mxu0 %v4003
        %v4058 = vpop.f32.mrb[0].mxu0
        %v4059 = vadd.f32 0.0, %v4058
        %v4060 = vpop.f32.mrb[0].mxu0
        %v4061 = vpop.f32.mrb[0].mxu0
        %v4062 = vadd.f32 0.0, %v4061
        %v4063 = vpop.f32.mrb[0].mxu0
        %4064 = vmatprep.mubr.bf16.mxu0 0
        %4065 = vmatmul.mubr.bf16.gmra.mrb[0].mxu0 %v4006
        %v4066 = vpop.f32.mrb[0].mxu0
        %v4067 = vadd.f32 0.0, %v4066
        %v4068 = vpop.f32.mrb[0].mxu0
        %v4069 = vpop.f32.mrb[0].mxu0
        %v4070 = vadd.f32 0.0, %v4069
        %v4071 = vpop.f32.mrb[0].mxu0
        %4072 = vdwg.mxu0
        %v4077 = vunpack.c.l.b16 %v3888
        %v4078 = vunpack.c.l.b16 %v3889
        %v4079 = vunpack.c.l.b16 %v3890
        %v4080 = vunpack.c.l.b16 %v3891
        %v4081 = vpack.c.b16 %v4078, %v4077
        %v4082 = vpack.c.b16 %v4080, %v4079
        %v4086 = vsel %vm2315, %v3884, 0
        %v4089 = vsel %vm2315, %v3885, 0
        %v4092 = vsel %vm2315, %v3886, 0
        %v4095 = vsel %vm2315, %v3887, 0
        %4097 = vmatprep.subr.bf16.mxu0 0
        %4098 = vmatpush1.bf16.msra.mxu0 %v4081
        %4099 = vmatprep.subr.bf16.mxu0 0
        %4100 = vmatpush1.bf16.msra.mxu0 %v4082
        %4101 = vmatprep.subr.bf16.mxu0 0
        %4102 = vmatpush1.bf16.msra.mxu0 0
        %4103 = vmatprep.subr.bf16.mxu0 0
        %4104 = vmatpush1.bf16.msra.mxu0 0
        %4105 = vmatprep.subr.bf16.mxu0 0
        %4106 = vmatpush1.bf16.msra.mxu0 0
        %4107 = vmatprep.subr.bf16.mxu0 0
        %4108 = vmatpush1.bf16.msra.mxu0 0
        %4109 = vmatprep.subr.bf16.mxu0 0
        %4110 = vmatpush1.bf16.msra.mxu0 0
        %4111 = vmatprep.subr.bf16.mxu0 0
        %4112 = vmatpush1.bf16.msra.mxu0 0
        %4113 = vmatprep.subr.bf16.mxu0 0
        %4114 = vmatpush1.bf16.msra.mxu0 0
        %4115 = vmatprep.subr.bf16.mxu0 0
        %4116 = vmatpush1.bf16.msra.mxu0 0
        %4117 = vmatprep.subr.bf16.mxu0 0
        %4118 = vmatpush1.bf16.msra.mxu0 0
        %4119 = vmatprep.subr.bf16.mxu0 0
        %4120 = vmatpush1.bf16.msra.mxu0 0
        %4121 = vmatprep.subr.bf16.mxu0 0
        %4122 = vmatpush1.bf16.msra.mxu0 0
        %4123 = vmatprep.subr.bf16.mxu0 0
        %4124 = vmatpush1.bf16.msra.mxu0 0
        %4125 = vmatprep.subr.bf16.mxu0 0
        %4126 = vmatpush1.bf16.msra.mxu0 0
        %4127 = vmatprep.subr.bf16.mxu0 0
        %4128 = vmatpush1.bf16.msra.mxu0 0
        %4129 = vmatprep.mubr.bf16.mxu0 0
        %4130 = vmatmul.mubr.bf16.gmra.mrb[0].mxu0 %v4086
        %v4131 = vpop.f32.mrb[0].mxu0
        %v4132 = vadd.f32 %v4043, %v4131
        %v4133 = vpop.f32.mrb[0].mxu0
        %v4134 = vpop.f32.mrb[0].mxu0
        %v4135 = vadd.f32 %v4046, %v4134
        %v4136 = vpop.f32.mrb[0].mxu0
        %4137 = vmatprep.mubr.bf16.mxu0 0
        %4138 = vmatmul.mubr.bf16.gmra.mrb[0].mxu0 %v4089
        %v4139 = vpop.f32.mrb[0].mxu0
        %v4140 = vadd.f32 %v4051, %v4139
        %v4141 = vpop.f32.mrb[0].mxu0
        %v4142 = vpop.f32.mrb[0].mxu0
        %v4143 = vadd.f32 %v4054, %v4142
        %v4144 = vpop.f32.mrb[0].mxu0
        %4145 = vmatprep.mubr.bf16.mxu0 0
        %4146 = vmatmul.mubr.bf16.gmra.mrb[0].mxu0 %v4092
        %v4147 = vpop.f32.mrb[0].mxu0
        %v4148 = vadd.f32 %v4059, %v4147
        %v4149 = vpop.f32.mrb[0].mxu0
        %v4150 = vpop.f32.mrb[0].mxu0
        %v4151 = vadd.f32 %v4062, %v4150
        %v4152 = vpop.f32.mrb[0].mxu0
        %4153 = vmatprep.mubr.bf16.mxu0 0
        %4154 = vmatmul.mubr.bf16.gmra.mrb[0].mxu0 %v4095
        %v4155 = vpop.f32.mrb[0].mxu0
        %v4156 = vadd.f32 %v4067, %v4155
        %v4157 = vpop.f32.mrb[0].mxu0
        %v4158 = vpop.f32.mrb[0].mxu0
        %v4159 = vadd.f32 %v4070, %v4158
        %v4160 = vpop.f32.mrb[0].mxu0
        %4161 = vdwg.mxu0
        %v4162 = vld [vmem:[%s17] sm:$0x1]
        %v4164 = vlaneseq
        %v4165 = vshrl.u32 %v4164, 7
        %v4166 = vsub.s32 0, %v4165
        %v4167 = vrot.slane %v4162, %v4166
        %v4169 = vadd.f32 %v4132, %v4167
        %v4170 = vadd.f32 %v4135, %v4167
        %v4171 = vadd.f32 %v4140, %v4167
        %v4172 = vadd.f32 %v4143, %v4167
        %v4173 = vadd.f32 %v4148, %v4167
        %v4174 = vadd.f32 %v4151, %v4167
        %v4175 = vadd.f32 %v4156, %v4167
        %v4176 = vadd.f32 %v4159, %v4167
        %v4177 = vadd.f32 %v4169, %v3093
        %v4178 = vadd.f32 %v4170, %v3094
        %v4179 = vadd.f32 %v4171, %v3095
        %v4180 = vadd.f32 %v4172, %v3096
        %v4181 = vadd.f32 %v4173, %v3097
        %v4182 = vadd.f32 %v4174, %v3098
        %v4183 = vadd.f32 %v4175, %v3099
        %v4184 = vadd.f32 %v4176, %v3100
        %v4185 = vld [vmem:[%s18] sm:$0x1]
        %v4186 = vld [vmem:[%s19] sm:$0x1]
        %v4187 = vsel %vm884, %v4177, 0.0
        %4188 = vadd.xlane.f32.xlu0 %v4187
        %v4189 = vpop.xlane.xlu0 %4188
        %v4190 = vsel %vm884, %v4178, 0.0
        %4191 = vadd.xlane.f32.xlu0 %v4190
        %v4192 = vpop.xlane.xlu0 %4191
        %v4193 = vsel %vm884, %v4179, 0.0
        %4194 = vadd.xlane.f32.xlu0 %v4193
        %v4195 = vpop.xlane.xlu0 %4194
        %v4196 = vsel %vm884, %v4180, 0.0
        %4197 = vadd.xlane.f32.xlu0 %v4196
        %v4198 = vpop.xlane.xlu0 %4197
        %v4199 = vsel %vm884, %v4181, 0.0
        %4200 = vadd.xlane.f32.xlu0 %v4199
        %v4201 = vpop.xlane.xlu0 %4200
        %v4202 = vsel %vm884, %v4182, 0.0
        %4203 = vadd.xlane.f32.xlu0 %v4202
        %v4204 = vpop.xlane.xlu0 %4203
        %v4205 = vsel %vm884, %v4183, 0.0
        %4206 = vadd.xlane.f32.xlu0 %v4205
        %v4207 = vpop.xlane.xlu0 %4206
        %v4208 = vsel %vm884, %v4184, 0.0
        %4209 = vadd.xlane.f32.xlu0 %v4208
        %v4210 = vpop.xlane.xlu0 %4209
        %v4211 = vmul.f32 %v4189, %v2053
        %v4212 = vmul.f32 %v4192, %v2053
        %v4213 = vmul.f32 %v4195, %v2053
        %v4214 = vmul.f32 %v4198, %v2053
        %v4215 = vmul.f32 %v4201, %v2053
        %v4216 = vmul.f32 %v4204, %v2053
        %v4217 = vmul.f32 %v4207, %v2053
        %v4218 = vmul.f32 %v4210, %v2053
        %v4219 = vsub.f32 %v4177, %v4211
        %v4220 = vsub.f32 %v4178, %v4212
        %v4221 = vsub.f32 %v4179, %v4213
        %v4222 = vsub.f32 %v4180, %v4214
        %v4223 = vsub.f32 %v4181, %v4215
        %v4224 = vsub.f32 %v4182, %v4216
        %v4225 = vsub.f32 %v4183, %v4217
        %v4226 = vsub.f32 %v4184, %v4218
        %v4227 = vmul.f32 %v4219, %v4219
        %v4228 = vmul.f32 %v4220, %v4220
        %v4229 = vmul.f32 %v4221, %v4221
        %v4230 = vmul.f32 %v4222, %v4222
        %v4231 = vmul.f32 %v4223, %v4223
        %v4232 = vmul.f32 %v4224, %v4224
        %v4233 = vmul.f32 %v4225, %v4225
        %v4234 = vmul.f32 %v4226, %v4226
        %v4235 = vsel %vm884, %v4227, 0.0
        %4236 = vadd.xlane.f32.xlu0 %v4235
        %v4237 = vpop.xlane.xlu0 %4236
        %v4238 = vsel %vm884, %v4228, 0.0
        %4239 = vadd.xlane.f32.xlu0 %v4238
        %v4240 = vpop.xlane.xlu0 %4239
        %v4241 = vsel %vm884, %v4229, 0.0
        %4242 = vadd.xlane.f32.xlu0 %v4241
        %v4243 = vpop.xlane.xlu0 %4242
        %v4244 = vsel %vm884, %v4230, 0.0
        %4245 = vadd.xlane.f32.xlu0 %v4244
        %v4246 = vpop.xlane.xlu0 %4245
        %v4247 = vsel %vm884, %v4231, 0.0
        %4248 = vadd.xlane.f32.xlu0 %v4247
        %v4249 = vpop.xlane.xlu0 %4248
        %v4250 = vsel %vm884, %v4232, 0.0
        %4251 = vadd.xlane.f32.xlu0 %v4250
        %v4252 = vpop.xlane.xlu0 %4251
        %v4253 = vsel %vm884, %v4233, 0.0
        %4254 = vadd.xlane.f32.xlu0 %v4253
        %v4255 = vpop.xlane.xlu0 %4254
        %v4256 = vsel %vm884, %v4234, 0.0
        %4257 = vadd.xlane.f32.xlu0 %v4256
        %v4258 = vpop.xlane.xlu0 %4257
        %v4259 = vmul.f32 %v4237, %v2053
        %v4260 = vmul.f32 %v4240, %v2053
        %v4261 = vmul.f32 %v4243, %v2053
        %v4262 = vmul.f32 %v4246, %v2053
        %v4263 = vmul.f32 %v4249, %v2053
        %v4264 = vmul.f32 %v4252, %v2053
        %v4265 = vmul.f32 %v4255, %v2053
        %v4266 = vmul.f32 %v4258, %v2053
        %v4267 = vadd.f32 %v4259, 1e-05
        %v4268 = vadd.f32 %v4260, 1e-05
        %v4269 = vadd.f32 %v4261, 1e-05
        %v4270 = vadd.f32 %v4262, 1e-05
        %v4271 = vadd.f32 %v4263, 1e-05
        %v4272 = vadd.f32 %v4264, 1e-05
        %v4273 = vadd.f32 %v4265, 1e-05
        %v4274 = vadd.f32 %v4266, 1e-05
        %v4275 = vrsqrt.pop %v4267
        %v4276 = vrsqrt.pop %v4268
        %v4277 = vrsqrt.pop %v4269
        %v4278 = vrsqrt.pop %v4270
        %v4279 = vrsqrt.pop %v4271
        %v4280 = vrsqrt.pop %v4272
        %v4281 = vrsqrt.pop %v4273
        %v4282 = vrsqrt.pop %v4274
        %v4283 = vmul.f32 %v4219, %v4275
        %v4284 = vmul.f32 %v4220, %v4276
        %v4285 = vmul.f32 %v4221, %v4277
        %v4286 = vmul.f32 %v4222, %v4278
        %v4287 = vmul.f32 %v4223, %v4279
        %v4288 = vmul.f32 %v4224, %v4280
        %v4289 = vmul.f32 %v4225, %v4281
        %v4290 = vmul.f32 %v4226, %v4282
        %v4292 = vlaneseq
        %v4293 = vshrl.u32 %v4292, 7
        %v4294 = vsub.s32 0, %v4293
        %v4295 = vrot.slane %v4185, %v4294
        %v4297 = vmul.f32 %v4283, %v4295
        %v4298 = vmul.f32 %v4284, %v4295
        %v4299 = vmul.f32 %v4285, %v4295
        %v4300 = vmul.f32 %v4286, %v4295
        %v4301 = vmul.f32 %v4287, %v4295
        %v4302 = vmul.f32 %v4288, %v4295
        %v4303 = vmul.f32 %v4289, %v4295
        %v4304 = vmul.f32 %v4290, %v4295
        %v4306 = vlaneseq
        %v4307 = vshrl.u32 %v4306, 7
        %v4308 = vsub.s32 0, %v4307
        %v4309 = vrot.slane %v4186, %v4308
        %v4311 = vadd.f32 %v4297, %v4309
        %v4312 = vadd.f32 %v4298, %v4309
        %v4313 = vadd.f32 %v4299, %v4309
        %v4314 = vadd.f32 %v4300, %v4309
        %v4315 = vadd.f32 %v4301, %v4309
        %v4316 = vadd.f32 %v4302, %v4309
        %v4317 = vadd.f32 %v4303, %v4309
        %v4318 = vadd.f32 %v4304, %v4309
        %v4319 = vpack.c.bf16 %v4312, %v4311
        %v4320 = vpack.c.bf16 %v4314, %v4313
        %v4321 = vpack.c.bf16 %v4316, %v4315
        %v4322 = vpack.c.bf16 %v4318, %v4317
        %v4323 = vld [vmem:[%s22] sm:$0xff]
        %v4324 = vld [vmem:[%s22 + $0x8] sm:$0xff]
        %v4325 = vld [vmem:[%s22 + $0x10] sm:$0xff]
        %v4326 = vld [vmem:[%s22 + $0x18] sm:$0xff]
        %v4327 = vld [vmem:[%s22 + $0x20] sm:$0xff]
        %v4328 = vld [vmem:[%s22 + $0x28] sm:$0xff]
        %v4329 = vld [vmem:[%s22 + $0x30] sm:$0xff]
        %v4330 = vld [vmem:[%s22 + $0x38] sm:$0xff]
        %v4331 = vld [vmem:[%s23] sm:$0x3]
        %v4333 = vlaneseq
        %v4334 = vshrl.u32 %v4333, 7
        %v4335 = vsub.s32 0, %v4334
        %v4336 = vrot.slane %v4331, %v4335
        %v4337 = vlaneseq
        %v4338 = vshrl.u32 %v4337, 7
        %v4339 = vsub.s32 1, %v4338
        %v4340 = vrot.slane %v4331, %v4339
        %v4351 = vunpack.c.l.b16 %v4323
        %v4352 = vunpack.c.h.b16 %v4323
        %v4353 = vunpack.c.l.b16 %v4324
        %v4354 = vunpack.c.h.b16 %v4324
        %v4355 = vunpack.c.l.b16 %v4325
        %v4356 = vunpack.c.h.b16 %v4325
        %v4357 = vunpack.c.l.b16 %v4326
        %v4358 = vunpack.c.h.b16 %v4326
        %v4359 = vunpack.c.l.b16 %v4327
        %v4360 = vunpack.c.h.b16 %v4327
        %v4361 = vunpack.c.l.b16 %v4328
        %v4362 = vunpack.c.h.b16 %v4328
        %v4363 = vunpack.c.l.b16 %v4329
        %v4364 = vunpack.c.h.b16 %v4329
        %v4365 = vunpack.c.l.b16 %v4330
        %v4366 = vunpack.c.h.b16 %v4330
        %v4367 = vpack.c.b16 %v4353, %v4351
        %v4368 = vpack.c.b16 %v4354, %v4352
        %v4369 = vpack.c.b16 %v4357, %v4355
        %v4370 = vpack.c.b16 %v4358, %v4356
        %v4371 = vpack.c.b16 %v4361, %v4359
        %v4372 = vpack.c.b16 %v4362, %v4360
        %v4373 = vpack.c.b16 %v4365, %v4363
        %v4374 = vpack.c.b16 %v4366, %v4364
        %v4384 = vsel %vm884, %v4319, 0
        %v4387 = vsel %vm884, %v4320, 0
        %v4390 = vsel %vm884, %v4321, 0
        %v4393 = vsel %vm884, %v4322, 0
        %4395 = vmatprep.subr.bf16.mxu0 %v4368
        %4396 = vmatpush1.bf16.msra.mxu0 %v4367
        %4397 = vmatprep.subr.bf16.mxu0 %v4370
        %4398 = vmatpush1.bf16.msra.mxu0 %v4369
        %4399 = vmatprep.subr.bf16.mxu0 %v4372
        %4400 = vmatpush1.bf16.msra.mxu0 %v4371
        %4401 = vmatprep.subr.bf16.mxu0 %v4374
        %4402 = vmatpush1.bf16.msra.mxu0 %v4373
        %4403 = vmatprep.subr.bf16.mxu0 0
        %4404 = vmatpush1.bf16.msra.mxu0 0
        %4405 = vmatprep.subr.bf16.mxu0 0
        %4406 = vmatpush1.bf16.msra.mxu0 0
        %4407 = vmatprep.subr.bf16.mxu0 0
        %4408 = vmatpush1.bf16.msra.mxu0 0
        %4409 = vmatprep.subr.bf16.mxu0 0
        %4410 = vmatpush1.bf16.msra.mxu0 0
        %4411 = vmatprep.subr.bf16.mxu0 0
        %4412 = vmatpush1.bf16.msra.mxu0 0
        %4413 = vmatprep.subr.bf16.mxu0 0
        %4414 = vmatpush1.bf16.msra.mxu0 0
        %4415 = vmatprep.subr.bf16.mxu0 0
        %4416 = vmatpush1.bf16.msra.mxu0 0
        %4417 = vmatprep.subr.bf16.mxu0 0
        %4418 = vmatpush1.bf16.msra.mxu0 0
        %4419 = vmatprep.subr.bf16.mxu0 0
        %4420 = vmatpush1.bf16.msra.mxu0 0
        %4421 = vmatprep.subr.bf16.mxu0 0
        %4422 = vmatpush1.bf16.msra.mxu0 0
        %4423 = vmatprep.subr.bf16.mxu0 0
        %4424 = vmatpush1.bf16.msra.mxu0 0
        %4425 = vmatprep.subr.bf16.mxu0 0
        %4426 = vmatpush1.bf16.msra.mxu0 0
        %4427 = vmatprep.mubr.bf16.mxu0 0
        %4428 = vmatmul.mubr.bf16.gmra.mrb[0].mxu0 %v4384
        %v4429 = vpop.f32.mrb[0].mxu0
        %v4430 = vadd.f32 %v4336, %v4429
        %v4431 = vpop.f32.mrb[0].mxu0
        %v4432 = vadd.f32 %v4340, %v4431
        %v4433 = vpop.f32.mrb[0].mxu0
        %v4434 = vadd.f32 %v4336, %v4433
        %v4435 = vpop.f32.mrb[0].mxu0
        %v4436 = vadd.f32 %v4340, %v4435
        %4437 = vmatprep.mubr.bf16.mxu0 0
        %4438 = vmatmul.mubr.bf16.gmra.mrb[0].mxu0 %v4387
        %v4439 = vpop.f32.mrb[0].mxu0
        %v4440 = vadd.f32 %v4336, %v4439
        %v4441 = vpop.f32.mrb[0].mxu0
        %v4442 = vadd.f32 %v4340, %v4441
        %v4443 = vpop.f32.mrb[0].mxu0
        %v4444 = vadd.f32 %v4336, %v4443
        %v4445 = vpop.f32.mrb[0].mxu0
        %v4446 = vadd.f32 %v4340, %v4445
        %4447 = vmatprep.mubr.bf16.mxu0 0
        %4448 = vmatmul.mubr.bf16.gmra.mrb[0].mxu0 %v4390
        %v4449 = vpop.f32.mrb[0].mxu0
        %v4450 = vadd.f32 %v4336, %v4449
        %v4451 = vpop.f32.mrb[0].mxu0
        %v4452 = vadd.f32 %v4340, %v4451
        %v4453 = vpop.f32.mrb[0].mxu0
        %v4454 = vadd.f32 %v4336, %v4453
        %v4455 = vpop.f32.mrb[0].mxu0
        %v4456 = vadd.f32 %v4340, %v4455
        %4457 = vmatprep.mubr.bf16.mxu0 0
        %4458 = vmatmul.mubr.bf16.gmra.mrb[0].mxu0 %v4393
        %v4459 = vpop.f32.mrb[0].mxu0
        %v4460 = vadd.f32 %v4336, %v4459
        %v4461 = vpop.f32.mrb[0].mxu0
        %v4462 = vadd.f32 %v4340, %v4461
        %v4463 = vpop.f32.mrb[0].mxu0
        %v4464 = vadd.f32 %v4336, %v4463
        %v4465 = vpop.f32.mrb[0].mxu0
        %v4466 = vadd.f32 %v4340, %v4465
        %4467 = vdwg.mxu0
        %v4468 = vld [vmem:[%s20] sm:$0xff]
        %v4469 = vld [vmem:[%s20 + $0x8] sm:$0xff]
        %v4470 = vld [vmem:[%s20 + $0x10] sm:$0xff]
        %v4471 = vld [vmem:[%s20 + $0x18] sm:$0xff]
        %v4472 = vld [vmem:[%s20 + $0x20] sm:$0xff]
        %v4473 = vld [vmem:[%s20 + $0x28] sm:$0xff]
        %v4474 = vld [vmem:[%s20 + $0x30] sm:$0xff]
        %v4475 = vld [vmem:[%s20 + $0x38] sm:$0xff]
        %v4476 = vld [vmem:[%s21] sm:$0x3]
        %v4478 = vlaneseq
        %v4479 = vshrl.u32 %v4478, 7
        %v4480 = vsub.s32 0, %v4479
        %v4481 = vrot.slane %v4476, %v4480
        %v4482 = vlaneseq
        %v4483 = vshrl.u32 %v4482, 7
        %v4484 = vsub.s32 1, %v4483
        %v4485 = vrot.slane %v4476, %v4484
        %v4496 = vunpack.c.l.b16 %v4468
        %v4497 = vunpack.c.h.b16 %v4468
        %v4498 = vunpack.c.l.b16 %v4469
        %v4499 = vunpack.c.h.b16 %v4469
        %v4500 = vunpack.c.l.b16 %v4470
        %v4501 = vunpack.c.h.b16 %v4470
        %v4502 = vunpack.c.l.b16 %v4471
        %v4503 = vunpack.c.h.b16 %v4471
        %v4504 = vunpack.c.l.b16 %v4472
        %v4505 = vunpack.c.h.b16 %v4472
        %v4506 = vunpack.c.l.b16 %v4473
        %v4507 = vunpack.c.h.b16 %v4473
        %v4508 = vunpack.c.l.b16 %v4474
        %v4509 = vunpack.c.h.b16 %v4474
        %v4510 = vunpack.c.l.b16 %v4475
        %v4511 = vunpack.c.h.b16 %v4475
        %v4512 = vpack.c.b16 %v4498, %v4496
        %v4513 = vpack.c.b16 %v4499, %v4497
        %v4514 = vpack.c.b16 %v4502, %v4500
        %v4515 = vpack.c.b16 %v4503, %v4501
        %v4516 = vpack.c.b16 %v4506, %v4504
        %v4517 = vpack.c.b16 %v4507, %v4505
        %v4518 = vpack.c.b16 %v4510, %v4508
        %v4519 = vpack.c.b16 %v4511, %v4509
        %4528 = vmatprep.subr.bf16.mxu0 %v4513
        %4529 = vmatpush1.bf16.msra.mxu0 %v4512
        %4530 = vmatprep.subr.bf16.mxu0 %v4515
        %4531 = vmatpush1.bf16.msra.mxu0 %v4514
        %4532 = vmatprep.subr.bf16.mxu0 %v4517
        %4533 = vmatpush1.bf16.msra.mxu0 %v4516
        %4534 = vmatprep.subr.bf16.mxu0 %v4519
        %4535 = vmatpush1.bf16.msra.mxu0 %v4518
        %4536 = vmatprep.subr.bf16.mxu0 0
        %4537 = vmatpush1.bf16.msra.mxu0 0
        %4538 = vmatprep.subr.bf16.mxu0 0
        %4539 = vmatpush1.bf16.msra.mxu0 0
        %4540 = vmatprep.subr.bf16.mxu0 0
        %4541 = vmatpush1.bf16.msra.mxu0 0
        %4542 = vmatprep.subr.bf16.mxu0 0
        %4543 = vmatpush1.bf16.msra.mxu0 0
        %4544 = vmatprep.subr.bf16.mxu0 0
        %4545 = vmatpush1.bf16.msra.mxu0 0
        %4546 = vmatprep.subr.bf16.mxu0 0
        %4547 = vmatpush1.bf16.msra.mxu0 0
        %4548 = vmatprep.subr.bf16.mxu0 0
        %4549 = vmatpush1.bf16.msra.mxu0 0
        %4550 = vmatprep.subr.bf16.mxu0 0
        %4551 = vmatpush1.bf16.msra.mxu0 0
        %4552 = vmatprep.subr.bf16.mxu0 0
        %4553 = vmatpush1.bf16.msra.mxu0 0
        %4554 = vmatprep.subr.bf16.mxu0 0
        %4555 = vmatpush1.bf16.msra.mxu0 0
        %4556 = vmatprep.subr.bf16.mxu0 0
        %4557 = vmatpush1.bf16.msra.mxu0 0
        %4558 = vmatprep.subr.bf16.mxu0 0
        %4559 = vmatpush1.bf16.msra.mxu0 0
        %4560 = vmatprep.mubr.bf16.mxu0 0
        %4561 = vmatmul.mubr.bf16.gmra.mrb[0].mxu0 %v4384
        %v4562 = vpop.f32.mrb[0].mxu0
        %v4563 = vadd.f32 %v4481, %v4562
        %v4564 = vpop.f32.mrb[0].mxu0
        %v4565 = vadd.f32 %v4485, %v4564
        %v4566 = vpop.f32.mrb[0].mxu0
        %v4567 = vadd.f32 %v4481, %v4566
        %v4568 = vpop.f32.mrb[0].mxu0
        %v4569 = vadd.f32 %v4485, %v4568
        %4570 = vmatprep.mubr.bf16.mxu0 0
        %4571 = vmatmul.mubr.bf16.gmra.mrb[0].mxu0 %v4387
        %v4572 = vpop.f32.mrb[0].mxu0
        %v4573 = vadd.f32 %v4481, %v4572
        %v4574 = vpop.f32.mrb[0].mxu0
        %v4575 = vadd.f32 %v4485, %v4574
        %v4576 = vpop.f32.mrb[0].mxu0
        %v4577 = vadd.f32 %v4481, %v4576
        %v4578 = vpop.f32.mrb[0].mxu0
        %v4579 = vadd.f32 %v4485, %v4578
        %4580 = vmatprep.mubr.bf16.mxu0 0
        %4581 = vmatmul.mubr.bf16.gmra.mrb[0].mxu0 %v4390
        %v4582 = vpop.f32.mrb[0].mxu0
        %v4583 = vadd.f32 %v4481, %v4582
        %v4584 = vpop.f32.mrb[0].mxu0
        %v4585 = vadd.f32 %v4485, %v4584
        %v4586 = vpop.f32.mrb[0].mxu0
        %v4587 = vadd.f32 %v4481, %v4586
        %v4588 = vpop.f32.mrb[0].mxu0
        %v4589 = vadd.f32 %v4485, %v4588
        %4590 = vmatprep.mubr.bf16.mxu0 0
        %4591 = vmatmul.mubr.bf16.gmra.mrb[0].mxu0 %v4393
        %v4592 = vpop.f32.mrb[0].mxu0
        %v4593 = vadd.f32 %v4481, %v4592
        %v4594 = vpop.f32.mrb[0].mxu0
        %v4595 = vadd.f32 %v4485, %v4594
        %v4596 = vpop.f32.mrb[0].mxu0
        %v4597 = vadd.f32 %v4481, %v4596
        %v4598 = vpop.f32.mrb[0].mxu0
        %v4599 = vadd.f32 %v4485, %v4598
        %4600 = vdwg.mxu0
        %v4601 = vmul.f32 %v4430, 0.5
        %v4602 = vmul.f32 %v4432, 0.5
        %v4603 = vmul.f32 %v4434, 0.5
        %v4604 = vmul.f32 %v4436, 0.5
        %v4605 = vmul.f32 %v4440, 0.5
        %v4606 = vmul.f32 %v4442, 0.5
        %v4607 = vmul.f32 %v4444, 0.5
        %v4608 = vmul.f32 %v4446, 0.5
        %v4609 = vmul.f32 %v4450, 0.5
        %v4610 = vmul.f32 %v4452, 0.5
        %v4611 = vmul.f32 %v4454, 0.5
        %v4612 = vmul.f32 %v4456, 0.5
        %v4613 = vmul.f32 %v4460, 0.5
        %v4614 = vmul.f32 %v4462, 0.5
        %v4615 = vmul.f32 %v4464, 0.5
        %v4616 = vmul.f32 %v4466, 0.5
        %v4617 = vmul.f32 %v4430, 0.044715
        %v4618 = vmul.f32 %v4432, 0.044715
        %v4619 = vmul.f32 %v4434, 0.044715
        %v4620 = vmul.f32 %v4436, 0.044715
        %v4621 = vmul.f32 %v4440, 0.044715
        %v4622 = vmul.f32 %v4442, 0.044715
        %v4623 = vmul.f32 %v4444, 0.044715
        %v4624 = vmul.f32 %v4446, 0.044715
        %v4625 = vmul.f32 %v4450, 0.044715
        %v4626 = vmul.f32 %v4452, 0.044715
        %v4627 = vmul.f32 %v4454, 0.044715
        %v4628 = vmul.f32 %v4456, 0.044715
        %v4629 = vmul.f32 %v4460, 0.044715
        %v4630 = vmul.f32 %v4462, 0.044715
        %v4631 = vmul.f32 %v4464, 0.044715
        %v4632 = vmul.f32 %v4466, 0.044715
        %v4633 = vmul.f32 %v4617, %v4430
        %v4634 = vmul.f32 %v4618, %v4432
        %v4635 = vmul.f32 %v4619, %v4434
        %v4636 = vmul.f32 %v4620, %v4436
        %v4637 = vmul.f32 %v4621, %v4440
        %v4638 = vmul.f32 %v4622, %v4442
        %v4639 = vmul.f32 %v4623, %v4444
        %v4640 = vmul.f32 %v4624, %v4446
        %v4641 = vmul.f32 %v4625, %v4450
        %v4642 = vmul.f32 %v4626, %v4452
        %v4643 = vmul.f32 %v4627, %v4454
        %v4644 = vmul.f32 %v4628, %v4456
        %v4645 = vmul.f32 %v4629, %v4460
        %v4646 = vmul.f32 %v4630, %v4462
        %v4647 = vmul.f32 %v4631, %v4464
        %v4648 = vmul.f32 %v4632, %v4466
        %v4649 = vmul.f32 %v4633, %v4430
        %v4650 = vmul.f32 %v4634, %v4432
        %v4651 = vmul.f32 %v4635, %v4434
        %v4652 = vmul.f32 %v4636, %v4436
        %v4653 = vmul.f32 %v4637, %v4440
        %v4654 = vmul.f32 %v4638, %v4442
        %v4655 = vmul.f32 %v4639, %v4444
        %v4656 = vmul.f32 %v4640, %v4446
        %v4657 = vmul.f32 %v4641, %v4450
        %v4658 = vmul.f32 %v4642, %v4452
        %v4659 = vmul.f32 %v4643, %v4454
        %v4660 = vmul.f32 %v4644, %v4456
        %v4661 = vmul.f32 %v4645, %v4460
        %v4662 = vmul.f32 %v4646, %v4462
        %v4663 = vmul.f32 %v4647, %v4464
        %v4664 = vmul.f32 %v4648, %v4466
        %v4665 = vadd.f32 %v4430, %v4649
        %v4666 = vadd.f32 %v4432, %v4650
        %v4667 = vadd.f32 %v4434, %v4651
        %v4668 = vadd.f32 %v4436, %v4652
        %v4669 = vadd.f32 %v4440, %v4653
        %v4670 = vadd.f32 %v4442, %v4654
        %v4671 = vadd.f32 %v4444, %v4655
        %v4672 = vadd.f32 %v4446, %v4656
        %v4673 = vadd.f32 %v4450, %v4657
        %v4674 = vadd.f32 %v4452, %v4658
        %v4675 = vadd.f32 %v4454, %v4659
        %v4676 = vadd.f32 %v4456, %v4660
        %v4677 = vadd.f32 %v4460, %v4661
        %v4678 = vadd.f32 %v4462, %v4662
        %v4679 = vadd.f32 %v4464, %v4663
        %v4680 = vadd.f32 %v4466, %v4664
        %v4681 = vmul.f32 %v4665, 0.7978846
        %v4682 = vmul.f32 %v4666, 0.7978846
        %v4683 = vmul.f32 %v4667, 0.7978846
        %v4684 = vmul.f32 %v4668, 0.7978846
        %v4685 = vmul.f32 %v4669, 0.7978846
        %v4686 = vmul.f32 %v4670, 0.7978846
        %v4687 = vmul.f32 %v4671, 0.7978846
        %v4688 = vmul.f32 %v4672, 0.7978846
        %v4689 = vmul.f32 %v4673, 0.7978846
        %v4690 = vmul.f32 %v4674, 0.7978846
        %v4691 = vmul.f32 %v4675, 0.7978846
        %v4692 = vmul.f32 %v4676, 0.7978846
        %v4693 = vmul.f32 %v4677, 0.7978846
        %v4694 = vmul.f32 %v4678, 0.7978846
        %v4695 = vmul.f32 %v4679, 0.7978846
        %v4696 = vmul.f32 %v4680, 0.7978846
        %v4697 = vtanh.pop %v4681
        %v4698 = vtanh.pop %v4682
        %v4699 = vtanh.pop %v4683
        %v4700 = vtanh.pop %v4684
        %v4701 = vtanh.pop %v4685
        %v4702 = vtanh.pop %v4686
        %v4703 = vtanh.pop %v4687
        %v4704 = vtanh.pop %v4688
        %v4705 = vtanh.pop %v4689
        %v4706 = vtanh.pop %v4690
        %v4707 = vtanh.pop %v4691
        %v4708 = vtanh.pop %v4692
        %v4709 = vtanh.pop %v4693
        %v4710 = vtanh.pop %v4694
        %v4711 = vtanh.pop %v4695
        %v4712 = vtanh.pop %v4696
        %v4713 = vadd.f32 %v4697, 1.0
        %v4714 = vadd.f32 %v4698, 1.0
        %v4715 = vadd.f32 %v4699, 1.0
        %v4716 = vadd.f32 %v4700, 1.0
        %v4717 = vadd.f32 %v4701, 1.0
        %v4718 = vadd.f32 %v4702, 1.0
        %v4719 = vadd.f32 %v4703, 1.0
        %v4720 = vadd.f32 %v4704, 1.0
        %v4721 = vadd.f32 %v4705, 1.0
        %v4722 = vadd.f32 %v4706, 1.0
        %v4723 = vadd.f32 %v4707, 1.0
        %v4724 = vadd.f32 %v4708, 1.0
        %v4725 = vadd.f32 %v4709, 1.0
        %v4726 = vadd.f32 %v4710, 1.0
        %v4727 = vadd.f32 %v4711, 1.0
        %v4728 = vadd.f32 %v4712, 1.0
        %v4729 = vmul.f32 %v4601, %v4713
        %v4730 = vmul.f32 %v4602, %v4714
        %v4731 = vmul.f32 %v4603, %v4715
        %v4732 = vmul.f32 %v4604, %v4716
        %v4733 = vmul.f32 %v4605, %v4717
        %v4734 = vmul.f32 %v4606, %v4718
        %v4735 = vmul.f32 %v4607, %v4719
        %v4736 = vmul.f32 %v4608, %v4720
        %v4737 = vmul.f32 %v4609, %v4721
        %v4738 = vmul.f32 %v4610, %v4722
        %v4739 = vmul.f32 %v4611, %v4723
        %v4740 = vmul.f32 %v4612, %v4724
        %v4741 = vmul.f32 %v4613, %v4725
        %v4742 = vmul.f32 %v4614, %v4726
        %v4743 = vmul.f32 %v4615, %v4727
        %v4744 = vmul.f32 %v4616, %v4728
        %v4745 = vmul.f32 %v4563, %v4729
        %v4746 = vmul.f32 %v4565, %v4730
        %v4747 = vmul.f32 %v4567, %v4731
        %v4748 = vmul.f32 %v4569, %v4732
        %v4749 = vmul.f32 %v4573, %v4733
        %v4750 = vmul.f32 %v4575, %v4734
        %v4751 = vmul.f32 %v4577, %v4735
        %v4752 = vmul.f32 %v4579, %v4736
        %v4753 = vmul.f32 %v4583, %v4737
        %v4754 = vmul.f32 %v4585, %v4738
        %v4755 = vmul.f32 %v4587, %v4739
        %v4756 = vmul.f32 %v4589, %v4740
        %v4757 = vmul.f32 %v4593, %v4741
        %v4758 = vmul.f32 %v4595, %v4742
        %v4759 = vmul.f32 %v4597, %v4743
        %v4760 = vmul.f32 %v4599, %v4744
        %v4761 = vpack.c.bf16 %v4747, %v4745
        %v4762 = vpack.c.bf16 %v4748, %v4746
        %v4763 = vpack.c.bf16 %v4751, %v4749
        %v4764 = vpack.c.bf16 %v4752, %v4750
        %v4765 = vpack.c.bf16 %v4755, %v4753
        %v4766 = vpack.c.bf16 %v4756, %v4754
        %v4767 = vpack.c.bf16 %v4759, %v4757
        %v4768 = vpack.c.bf16 %v4760, %v4758
        %v4769 = vld [vmem:[%s24] sm:$0xf]
        %v4770 = vld [vmem:[%s24 + $0x4] sm:$0xf]
        %v4771 = vld [vmem:[%s24 + $0x8] sm:$0xf]
        %v4772 = vld [vmem:[%s24 + $0xc] sm:$0xf]
        %v4773 = vld [vmem:[%s24 + $0x10] sm:$0xf]
        %v4774 = vld [vmem:[%s24 + $0x14] sm:$0xf]
        %v4775 = vld [vmem:[%s24 + $0x18] sm:$0xf]
        %v4776 = vld [vmem:[%s24 + $0x1c] sm:$0xf]
        %v4777 = vld [vmem:[%s24 + $0x20] sm:$0xf]
        %v4778 = vld [vmem:[%s24 + $0x24] sm:$0xf]
        %v4779 = vld [vmem:[%s24 + $0x28] sm:$0xf]
        %v4780 = vld [vmem:[%s24 + $0x2c] sm:$0xf]
        %v4781 = vld [vmem:[%s24 + $0x30] sm:$0xf]
        %v4782 = vld [vmem:[%s24 + $0x34] sm:$0xf]
        %v4783 = vld [vmem:[%s24 + $0x38] sm:$0xf]
        %v4784 = vld [vmem:[%s24 + $0x3c] sm:$0xf]
        %v4785 = vld [vmem:[%s24 + $0x40] sm:$0xf]
        %v4786 = vld [vmem:[%s24 + $0x44] sm:$0xf]
        %v4787 = vld [vmem:[%s24 + $0x48] sm:$0xf]
        %v4788 = vld [vmem:[%s24 + $0x4c] sm:$0xf]
        %v4789 = vld [vmem:[%s24 + $0x50] sm:$0xf]
        %v4790 = vld [vmem:[%s24 + $0x54] sm:$0xf]
        %v4791 = vld [vmem:[%s24 + $0x58] sm:$0xf]
        %v4792 = vld [vmem:[%s24 + $0x5c] sm:$0xf]
        %v4793 = vld [vmem:[%s24 + $0x60] sm:$0xf]
        %v4794 = vld [vmem:[%s24 + $0x64] sm:$0xf]
        %v4795 = vld [vmem:[%s24 + $0x68] sm:$0xf]
        %v4796 = vld [vmem:[%s24 + $0x6c] sm:$0xf]
        %v4797 = vld [vmem:[%s24 + $0x70] sm:$0xf]
        %v4798 = vld [vmem:[%s24 + $0x74] sm:$0xf]
        %v4799 = vld [vmem:[%s24 + $0x78] sm:$0xf]
        %v4800 = vld [vmem:[%s24 + $0x7c] sm:$0xf]
        %v4801 = vld [vmem:[%s25] sm:$0x1]
        %v4803 = vlaneseq
        %v4804 = vshrl.u32 %v4803, 7
        %v4805 = vsub.s32 0, %v4804
        %v4806 = vrot.slane %v4801, %v4805
        %v4840 = vunpack.c.l.b16 %v4769
        %v4841 = vunpack.c.l.b16 %v4770
        %v4842 = vunpack.c.l.b16 %v4771
        %v4843 = vunpack.c.l.b16 %v4772
        %v4844 = vunpack.c.l.b16 %v4773
        %v4845 = vunpack.c.l.b16 %v4774
        %v4846 = vunpack.c.l.b16 %v4775
        %v4847 = vunpack.c.l.b16 %v4776
        %v4848 = vunpack.c.l.b16 %v4777
        %v4849 = vunpack.c.l.b16 %v4778
        %v4850 = vunpack.c.l.b16 %v4779
        %v4851 = vunpack.c.l.b16 %v4780
        %v4852 = vunpack.c.l.b16 %v4781
        %v4853 = vunpack.c.l.b16 %v4782
        %v4854 = vunpack.c.l.b16 %v4783
        %v4855 = vunpack.c.l.b16 %v4784
        %v4856 = vunpack.c.l.b16 %v4785
        %v4857 = vunpack.c.l.b16 %v4786
        %v4858 = vunpack.c.l.b16 %v4787
        %v4859 = vunpack.c.l.b16 %v4788
        %v4860 = vunpack.c.l.b16 %v4789
        %v4861 = vunpack.c.l.b16 %v4790
        %v4862 = vunpack.c.l.b16 %v4791
        %v4863 = vunpack.c.l.b16 %v4792
        %v4864 = vunpack.c.l.b16 %v4793
        %v4865 = vunpack.c.l.b16 %v4794
        %v4866 = vunpack.c.l.b16 %v4795
        %v4867 = vunpack.c.l.b16 %v4796
        %v4868 = vunpack.c.l.b16 %v4797
        %v4869 = vunpack.c.l.b16 %v4798
        %v4870 = vunpack.c.l.b16 %v4799
        %v4871 = vunpack.c.l.b16 %v4800
        %v4872 = vpack.c.b16 %v4841, %v4840
        %v4873 = vpack.c.b16 %v4843, %v4842
        %v4874 = vpack.c.b16 %v4845, %v4844
        %v4875 = vpack.c.b16 %v4847, %v4846
        %v4876 = vpack.c.b16 %v4849, %v4848
        %v4877 = vpack.c.b16 %v4851, %v4850
        %v4878 = vpack.c.b16 %v4853, %v4852
        %v4879 = vpack.c.b16 %v4855, %v4854
        %v4880 = vpack.c.b16 %v4857, %v4856
        %v4881 = vpack.c.b16 %v4859, %v4858
        %v4882 = vpack.c.b16 %v4861, %v4860
        %v4883 = vpack.c.b16 %v4863, %v4862
        %v4884 = vpack.c.b16 %v4865, %v4864
        %v4885 = vpack.c.b16 %v4867, %v4866
        %v4886 = vpack.c.b16 %v4869, %v4868
        %v4887 = vpack.c.b16 %v4871, %v4870
        %4904 = vmatprep.subr.bf16.mxu0 0
        %4905 = vmatpush1.bf16.msra.mxu0 %v4872
        %4906 = vmatprep.subr.bf16.mxu0 0
        %4907 = vmatpush1.bf16.msra.mxu0 %v4873
        %4908 = vmatprep.subr.bf16.mxu0 0
        %4909 = vmatpush1.bf16.msra.mxu0 %v4874
        %4910 = vmatprep.subr.bf16.mxu0 0
        %4911 = vmatpush1.bf16.msra.mxu0 %v4875
        %4912 = vmatprep.subr.bf16.mxu0 0
        %4913 = vmatpush1.bf16.msra.mxu0 %v4876
        %4914 = vmatprep.subr.bf16.mxu0 0
        %4915 = vmatpush1.bf16.msra.mxu0 %v4877
        %4916 = vmatprep.subr.bf16.mxu0 0
        %4917 = vmatpush1.bf16.msra.mxu0 %v4878
        %4918 = vmatprep.subr.bf16.mxu0 0
        %4919 = vmatpush1.bf16.msra.mxu0 %v4879
        %4920 = vmatprep.subr.bf16.mxu0 0
        %4921 = vmatpush1.bf16.msra.mxu0 %v4880
        %4922 = vmatprep.subr.bf16.mxu0 0
        %4923 = vmatpush1.bf16.msra.mxu0 %v4881
        %4924 = vmatprep.subr.bf16.mxu0 0
        %4925 = vmatpush1.bf16.msra.mxu0 %v4882
        %4926 = vmatprep.subr.bf16.mxu0 0
        %4927 = vmatpush1.bf16.msra.mxu0 %v4883
        %4928 = vmatprep.subr.bf16.mxu0 0
        %4929 = vmatpush1.bf16.msra.mxu0 %v4884
        %4930 = vmatprep.subr.bf16.mxu0 0
        %4931 = vmatpush1.bf16.msra.mxu0 %v4885
        %4932 = vmatprep.subr.bf16.mxu0 0
        %4933 = vmatpush1.bf16.msra.mxu0 %v4886
        %4934 = vmatprep.subr.bf16.mxu0 0
        %4935 = vmatpush1.bf16.msra.mxu0 %v4887
        %4936 = vmatprep.mubr.bf16.mxu0 %v4762
        %4937 = vmatmul.mubr.bf16.gmra.mrb[0].mxu0 %v4761
        %v4938 = vpop.f32.mrb[0].mxu0
        %v4939 = vadd.f32 %v4806, %v4938
        %v4940 = vpop.f32.mrb[0].mxu0
        %v4941 = vpop.f32.mrb[0].mxu0
        %v4942 = vadd.f32 %v4806, %v4941
        %v4943 = vpop.f32.mrb[0].mxu0
        %4944 = vmatprep.mubr.bf16.mxu0 %v4764
        %4945 = vmatmul.mubr.bf16.gmra.mrb[0].mxu0 %v4763
        %v4946 = vpop.f32.mrb[0].mxu0
        %v4947 = vadd.f32 %v4806, %v4946
        %v4948 = vpop.f32.mrb[0].mxu0
        %v4949 = vpop.f32.mrb[0].mxu0
        %v4950 = vadd.f32 %v4806, %v4949
        %v4951 = vpop.f32.mrb[0].mxu0
        %4952 = vmatprep.mubr.bf16.mxu0 %v4766
        %4953 = vmatmul.mubr.bf16.gmra.mrb[0].mxu0 %v4765
        %v4954 = vpop.f32.mrb[0].mxu0
        %v4955 = vadd.f32 %v4806, %v4954
        %v4956 = vpop.f32.mrb[0].mxu0
        %v4957 = vpop.f32.mrb[0].mxu0
        %v4958 = vadd.f32 %v4806, %v4957
        %v4959 = vpop.f32.mrb[0].mxu0
        %4960 = vmatprep.mubr.bf16.mxu0 %v4768
        %4961 = vmatmul.mubr.bf16.gmra.mrb[0].mxu0 %v4767
        %v4962 = vpop.f32.mrb[0].mxu0
        %v4963 = vadd.f32 %v4806, %v4962
        %v4964 = vpop.f32.mrb[0].mxu0
        %v4965 = vpop.f32.mrb[0].mxu0
        %v4966 = vadd.f32 %v4806, %v4965
        %v4967 = vpop.f32.mrb[0].mxu0
        %4968 = vdwg.mxu0
        %v4969 = vadd.f32 %v4939, %v4177
        %v4970 = vadd.f32 %v4942, %v4178
        %v4971 = vadd.f32 %v4947, %v4179
        %v4972 = vadd.f32 %v4950, %v4180
        %v4973 = vadd.f32 %v4955, %v4181
        %v4974 = vadd.f32 %v4958, %v4182
        %v4975 = vadd.f32 %v4963, %v4183
        %v4976 = vadd.f32 %v4966, %v4184
        %v4977 = vpack.c.bf16 %v4970, %v4969
        %v4978 = vpack.c.bf16 %v4972, %v4971
        %v4979 = vpack.c.bf16 %v4974, %v4973
        %v4980 = vpack.c.bf16 %v4976, %v4975
        %v4981 = vld [vmem:[%s26] sm:$0xf]
        %v4982 = vld [vmem:[%s26 + $0x4] sm:$0xf]
        %v4983 = vld [vmem:[%s26 + $0x8] sm:$0xf]
        %v4984 = vld [vmem:[%s26 + $0xc] sm:$0xf]
        %v4985 = vld [vmem:[%s26 + $0x10] sm:$0xf]
        %v4986 = vld [vmem:[%s26 + $0x14] sm:$0xf]
        %v4987 = vld [vmem:[%s26 + $0x18] sm:$0xf]
        %v4988 = vld [vmem:[%s26 + $0x1c] sm:$0xf]
        %v4989 = vld [vmem:[%s27] sm:$0x1]
        %v4991 = vlaneseq
        %v4992 = vshrl.u32 %v4991, 7
        %v4993 = vsub.s32 0, %v4992
        %v4994 = vrot.slane %v4989, %v4993
        %v5004 = vunpack.c.l.b16 %v4981
        %v5005 = vunpack.c.l.b16 %v4982
        %v5006 = vunpack.c.l.b16 %v4983
        %v5007 = vunpack.c.l.b16 %v4984
        %v5008 = vunpack.c.l.b16 %v4985
        %v5009 = vunpack.c.l.b16 %v4986
        %v5010 = vunpack.c.l.b16 %v4987
        %v5011 = vunpack.c.l.b16 %v4988
        %v5012 = vpack.c.b16 %v5005, %v5004
        %v5013 = vpack.c.b16 %v5007, %v5006
        %v5014 = vpack.c.b16 %v5009, %v5008
        %v5015 = vpack.c.b16 %v5011, %v5010
        %v5021 = vsel %vm884, %v4977, 0
        %v5024 = vsel %vm884, %v4978, 0
        %v5027 = vsel %vm884, %v4979, 0
        %v5030 = vsel %vm884, %v4980, 0
        %5032 = vmatprep.subr.bf16.mxu0 0
        %5033 = vmatpush1.bf16.msra.mxu0 %v5012
        %5034 = vmatprep.subr.bf16.mxu0 0
        %5035 = vmatpush1.bf16.msra.mxu0 %v5013
        %5036 = vmatprep.subr.bf16.mxu0 0
        %5037 = vmatpush1.bf16.msra.mxu0 %v5014
        %5038 = vmatprep.subr.bf16.mxu0 0
        %5039 = vmatpush1.bf16.msra.mxu0 %v5015
        %5040 = vmatprep.subr.bf16.mxu0 0
        %5041 = vmatpush1.bf16.msra.mxu0 0
        %5042 = vmatprep.subr.bf16.mxu0 0
        %5043 = vmatpush1.bf16.msra.mxu0 0
        %5044 = vmatprep.subr.bf16.mxu0 0
        %5045 = vmatpush1.bf16.msra.mxu0 0
        %5046 = vmatprep.subr.bf16.mxu0 0
        %5047 = vmatpush1.bf16.msra.mxu0 0
        %5048 = vmatprep.subr.bf16.mxu0 0
        %5049 = vmatpush1.bf16.msra.mxu0 0
        %5050 = vmatprep.subr.bf16.mxu0 0
        %5051 = vmatpush1.bf16.msra.mxu0 0
        %5052 = vmatprep.subr.bf16.mxu0 0
        %5053 = vmatpush1.bf16.msra.mxu0 0
        %5054 = vmatprep.subr.bf16.mxu0 0
        %5055 = vmatpush1.bf16.msra.mxu0 0
        %5056 = vmatprep.subr.bf16.mxu0 0
        %5057 = vmatpush1.bf16.msra.mxu0 0
        %5058 = vmatprep.subr.bf16.mxu0 0
        %5059 = vmatpush1.bf16.msra.mxu0 0
        %5060 = vmatprep.subr.bf16.mxu0 0
        %5061 = vmatpush1.bf16.msra.mxu0 0
        %5062 = vmatprep.subr.bf16.mxu0 0
        %5063 = vmatpush1.bf16.msra.mxu0 0
        %5064 = vmatprep.mubr.bf16.mxu0 0
        %5065 = vmatmul.mubr.bf16.gmra.mrb[0].mxu0 %v5021
        %v5066 = vpop.f32.mrb[0].mxu0
        %v5067 = vadd.f32 %v4994, %v5066
        %v5068 = vpop.f32.mrb[0].mxu0
        %v5069 = vpop.f32.mrb[0].mxu0
        %v5070 = vadd.f32 %v4994, %v5069
        %v5071 = vpop.f32.mrb[0].mxu0
        %5072 = vmatprep.mubr.bf16.mxu0 0
        %5073 = vmatmul.mubr.bf16.gmra.mrb[0].mxu0 %v5024
        %v5074 = vpop.f32.mrb[0].mxu0
        %v5075 = vadd.f32 %v4994, %v5074
        %v5076 = vpop.f32.mrb[0].mxu0
        %v5077 = vpop.f32.mrb[0].mxu0
        %v5078 = vadd.f32 %v4994, %v5077
        %v5079 = vpop.f32.mrb[0].mxu0
        %5080 = vmatprep.mubr.bf16.mxu0 0
        %5081 = vmatmul.mubr.bf16.gmra.mrb[0].mxu0 %v5027
        %v5082 = vpop.f32.mrb[0].mxu0
        %v5083 = vadd.f32 %v4994, %v5082
        %v5084 = vpop.f32.mrb[0].mxu0
        %v5085 = vpop.f32.mrb[0].mxu0
        %v5086 = vadd.f32 %v4994, %v5085
        %v5087 = vpop.f32.mrb[0].mxu0
        %5088 = vmatprep.mubr.bf16.mxu0 0
        %5089 = vmatmul.mubr.bf16.gmra.mrb[0].mxu0 %v5030
        %v5090 = vpop.f32.mrb[0].mxu0
        %v5091 = vadd.f32 %v4994, %v5090
        %v5092 = vpop.f32.mrb[0].mxu0
        %v5093 = vpop.f32.mrb[0].mxu0
        %v5094 = vadd.f32 %v4994, %v5093
        %v5095 = vpop.f32.mrb[0].mxu0
        %5096 = vdwg.mxu0
        %v5097 = vadd.f32 %v5067, %v868
        %v5098 = vadd.f32 %v5070, %v869
        %v5099 = vadd.f32 %v5075, %v870
        %v5100 = vadd.f32 %v5078, %v871
        %v5101 = vadd.f32 %v5083, %v872
        %v5102 = vadd.f32 %v5086, %v873
        %v5103 = vadd.f32 %v5091, %v874
        %v5104 = vadd.f32 %v5094, %v875
        %5105 = vst.msk [vmem:[%s854] sm:$0xff] %vm884, %v5097
        %5106 = vst.msk [vmem:[%s854 + $0x8] sm:$0xff] %vm884, %v5098
        %5107 = vst.msk [vmem:[%s854 + $0x10] sm:$0xff] %vm884, %v5099
        %5108 = vst.msk [vmem:[%s854 + $0x18] sm:$0xff] %vm884, %v5100
        %5109 = vst.msk [vmem:[%s854 + $0x20] sm:$0xff] %vm884, %v5101
        %5110 = vst.msk [vmem:[%s854 + $0x28] sm:$0xff] %vm884, %v5102
        %5111 = vst.msk [vmem:[%s854 + $0x30] sm:$0xff] %vm884, %v5103
        %5112 = vst.msk [vmem:[%s854 + $0x38] sm:$0xff] %vm884, %v5104
        %s5113 = sand.u32 %s648, 1
        %s5114 = scalar_lea.sflag [#allocation3], %s5113
        %s5115 = sand.u32 %s648, 1
        %s5116 = smul.addr %s5115, 64
        %s5117 = scalar_lea.vmem [#allocation2], %s5116
        // Predicated region
        $region133: #{unet_attention_block.1} parent=131 // pred_check
          %p5118 = pneg %p658
        $region134: #{unet_attention_block.1} parent=131 // pred_check_branch
          %5120 = sbr.rel (%p5118) target = $region136
        $region135: #{unet_attention_block.1} parent=131 // pred_region
          %s5121 = smul.u32 8, %s42
          %s5123 = ssub.s32 1024, 1024
          %5124 = vsyncadd %s5114, %s5123
          %s5125 = smul.addr %s5121, 128
          %s5126 = scalar_lea.hbm %s28, %s5125
          %s5127 = sshll.u32 %s5117, 4
          %s5128 = int_to_ptr.vmem [resolvable:$true] %s5127
          %5133 = dma.vmem_to_hbm [thread:$0]  %s5128, 1024, %s5126, %s5114, 128, 128, 8
        $region136: #{unet_attention_block.1} parent=131 // pred_fallthru
          _
      $region132: #{unet_attention_block.1} parent=5 // pred_fallthru
        _
      %p5134 = scmp.le.s32.totalorder 2, %s37
      // Predicated region
      $region137: #{unet_attention_block.1} parent=5 // pred_check
        %p5135 = pneg %p5134
      $region138: #{unet_attention_block.1} parent=5 // pred_check_branch
        %5137 = sbr.rel (%p5135) target = $region140
      $region139: #{unet_attention_block.1} parent=5 // pred_region
        %s5138 = ssub.s32 %s37, 2
        // Predicated region
        $region141: #{unet_attention_block.1} parent=139 // pred_check
          %p5139 = pneg %p664
        $region142: #{unet_attention_block.1} parent=139 // pred_check_branch
          %5141 = sbr.rel (%p5139) target = $region144
        $region143: #{unet_attention_block.1} parent=139 // pred_region
          %s5142 = sand.u32 %s649, 1
          %s5143 = scalar_lea.sflag [#allocation3], %s5142
          %s5144 = sand.u32 %s649, 1
          %s5145 = smul.addr %s5144, 64
          %s5146 = scalar_lea.vmem [#allocation2], %s5145
          %5147 = dma.done %s5143, 1024
        $region144: #{unet_attention_block.1} parent=139 // pred_fallthru
          _
      $region140: #{unet_attention_block.1} parent=5 // pred_fallthru
        _
    $region6: #{unet_attention_block.1} parent=1 // loop_footer
      %s41 = sadd.s32 1, %s37
    $region7: #{unet_attention_block.1} parent=1 // loop_footer_branch
      %36 = sbr.rel target = $region3
    $region8: #{unet_attention_block.1} parent=1 // loop_exit
      _
    %5148 = vsyncpa [#allocation3], 1
    %s5149 = scalar_lea.sflag [#allocation3], 1
    %5150 = vsyncpa %s5149, 1

</llo_original>
